<compile_context>
chip_gen: v7x
topology: tpu7x:2x2x1
jax: 0.10.0
libtpu: 0.0.40
codegen_flags: <defaults>
</compile_context>

<pallas_src>
import functools

import jax
import jax.numpy as jnp
from jax.experimental import pallas as pl
from jax.experimental.pallas import tpu as pltpu


def _round_up(x, m):
    return (x + m - 1) // m * m


def _const_spec(shape, single_buffer):
    """BlockSpec for a grid-invariant operand (same block at every grid step)."""
    index_map = lambda b, c: (0, 0)
    if single_buffer:
        try:
            # Single-buffer resident weights (saves VMEM vs. default double-buffering).
            return pl.BlockSpec(shape, index_map, pipeline_mode=pl.Buffered(1))
        except Exception:  # older JAX without pipeline_mode: fall back silently
            pass
    return pl.BlockSpec(shape, index_map)


# ---------------------------------------------------------------------------
# Fused kernel: input projection + GRU recurrence + (at the last chunk) Linear.
# Grid = (batch_tiles, time_chunks); time axis is serial ("arbitrary").
# ---------------------------------------------------------------------------
def _gru_fused_kernel(x_ref, w_ih_ref, b_i_ref, w_hh_ref, b_hn_ref,
                      w_fc_ref, b_fc_ref, out_ref, h_scr, *,
                      hp, tt, t_total, need_mask):
    """One grid step == `tt` timesteps of one batch tile.

    x_ref:    (TB, tt, I)   input chunk (native batch-major layout, mm dtype)
    w_ih_ref: (I, 3*Hp)     input->gates weight, pre-transposed, gate-slot padded
    b_i_ref:  (1, 3*Hp)     b_ih (all gates) + b_hh (r, z) folded
    w_hh_ref: (Hp, 3*Hp)    hidden->gates weight, pre-transposed
    b_hn_ref: (1, Hp)       b_hh n-component (stays inside r * (.))
    w_fc_ref: (Hp, Op)      final linear weight, pre-transposed, zero-padded
    b_fc_ref: (1, Op)
    out_ref:  (TB, Op)      written only at the last time chunk
    h_scr:    (TB, Hp)      hidden-state carry (VMEM scratch), f32
    """
    tc = pl.program_id(1)

    @pl.when(tc == 0)
    def _init():
        h_scr[...] = jnp.zeros_like(h_scr)

    f32 = jnp.float32
    mm = w_hh_ref.dtype
    tb = h_scr.shape[0]

    # --- hoisted once per chunk (JAX does not CSE broadcast_in_dim) ---------
    x_chunk = x_ref[...].astype(mm)                       # (TB, tt, I)
    w_ih = w_ih_ref[...]
    w_r = w_hh_ref[:, 0 * hp:1 * hp]                      # lane-aligned slices
    w_z = w_hh_ref[:, 1 * hp:2 * hp]
    w_n = w_hh_ref[:, 2 * hp:3 * hp]
    b_i = jnp.broadcast_to(b_i_ref[...], (tb, 3 * hp)).astype(f32)
    b_hn = jnp.broadcast_to(b_hn_ref[...], (tb, hp)).astype(f32)

    h = h_scr[...]
    t0 = tc * tt
    # Static unroll (tt is small).  The x @ W_ih projection has no h-dependence,
    # so the scheduler overlaps it with the serial h @ W_hh chain.
    for i in range(tt):
        x_t = x_chunk[:, i, :]                                            # (TB, I)
        gi = jnp.dot(x_t, w_ih, preferred_element_type=f32) + b_i         # (TB, 3Hp)
        hb = h.astype(mm)
        # r/z matmuls first: their sigmoids run on the EUP while the n-slice
        # matmul is still being pushed through the MXU (different VLIW slots).
        g_r = jnp.dot(hb, w_r, preferred_element_type=f32)
        g_z = jnp.dot(hb, w_z, preferred_element_type=f32)
        r = jax.nn.sigmoid(gi[:, 0 * hp:1 * hp] + g_r)
        z = jax.nn.sigmoid(gi[:, 1 * hp:2 * hp] + g_z)
        g_n = jnp.dot(hb, w_n, preferred_element_type=f32) + b_hn
        n = jnp.tanh(gi[:, 2 * hp:3 * hp] + r * g_n)
        h_new = (1.0 - z) * n + z * h
        if need_mask:
            # Remainder chunk: timesteps >= T must not update h.
            h = jnp.where(t0 + i < t_total, h_new, h)
        else:
            h = h_new

    h_scr[...] = h

    # Output is only valid while the time axis stays "arbitrary" with an unchanged
    # output block index (accumulator pattern) -- keep it that way.
    @pl.when(tc == pl.num_programs(1) - 1)
    def _finalize():
        out_ref[...] = (
            jnp.dot(h.astype(w_fc_ref.dtype), w_fc_ref[...],
                    preferred_element_type=f32) + b_fc_ref[...]
        ).astype(out_ref.dtype)


# ---------------------------------------------------------------------------
# One-time parameter packing (do this once, outside the inference loop).
# ---------------------------------------------------------------------------
def prepare_gru_params(params, *, use_bf16_matmul=True):
    """Pack/pad PyTorch-layout GRU+Linear params for the fused kernel."""
    w_ih, w_hh, b_ih, b_hh, w_fc, b_fc = params
    I = w_ih.shape[1]
    H = w_hh.shape[1]
    O = w_fc.shape[0]
    f32 = jnp.float32
    mm = jnp.bfloat16 if use_bf16_matmul else f32

    Hp = _round_up(H, 128)      # lane-aligned gate slots
    Op = _round_up(O, 128)      # lane-dense output block

    w_ih_p = jnp.zeros((I, 3 * Hp), f32)
    w_hh_p = jnp.zeros((Hp, 3 * Hp), f32)
    b_i_p = jnp.zeros((1, 3 * Hp), f32)     # b_ih (all) + b_hh (r, z)
    b_hn_p = jnp.zeros((1, Hp), f32)        # b_hh n-component only
    for g in range(3):                       # PyTorch gate order [r | z | n]
        w_ih_p = w_ih_p.at[:, g * Hp:g * Hp + H].set(w_ih[g * H:(g + 1) * H, :].T)
        w_hh_p = w_hh_p.at[:H, g * Hp:g * Hp + H].set(w_hh[g * H:(g + 1) * H, :].T)
        bi = b_ih[g * H:(g + 1) * H]
        bh = b_hh[g * H:(g + 1) * H]
        if g < 2:
            b_i_p = b_i_p.at[0, g * Hp:g * Hp + H].set(bi + bh)
        else:
            b_i_p = b_i_p.at[0, g * Hp:g * Hp + H].set(bi)
            b_hn_p = b_hn_p.at[0, :H].set(bh)

    w_fc_p = jnp.zeros((Hp, Op), f32).at[:H, :O].set(w_fc.T)
    b_fc_p = jnp.zeros((1, Op), f32).at[0, :O].set(b_fc)

    return (w_ih_p.astype(mm), b_i_p, w_hh_p.astype(mm), b_hn_p,
            w_fc_p.astype(mm), b_fc_p)


# ---------------------------------------------------------------------------
# Jitted forward on packed params.
# ---------------------------------------------------------------------------
@functools.partial(jax.jit,
                   static_argnames=("time_chunk", "batch_tile",
                                    "single_buffer_weights"))
def gru_forward_packed(x, packed, *, time_chunk=8, batch_tile=None,
                       single_buffer_weights=None):
    """x: (B, T, I). Returns padded output (Bp, Op) f32; caller slices [:B, :O]."""
    w_ih_p, b_i_p, w_hh_p, b_hn_p, w_fc_p, b_fc_p = packed
    B, T, I = x.shape
    Hp = w_hh_p.shape[0]
    Op = w_fc_p.shape[1]
    mm = w_ih_p.dtype
    f32 = jnp.float32
    itm = jnp.dtype(mm).itemsize

    # ---- batch tiling: Bp is ALWAYS a multiple of TB (fixes >128 batch bug) ----
    Bp8 = _round_up(max(B, 8), 8)
    if batch_tile is None:
        TB = min(Bp8, 128)     # v7x: pass batch_tile≈ceil(B/2) to use both TCs
    else:
        TB = min(_round_up(max(int(batch_tile), 8), 8), Bp8)
    n_btiles = -(-Bp8 // TB)
    Bp = n_btiles * TB

    # ---- time chunking: tt is a multiple of 8 (or == T); remainder is masked ----
    tc_req = max(1, int(time_chunk))
    if T <= tc_req:
        tt, Tpad = T, T
    else:
        tt = _round_up(tc_req, 8)
        Tpad = _round_up(T, tt)
    n_tchunks = Tpad // tt
    need_mask = (Tpad != T)

    # ---- pad x once (batch -> Bp, time -> Tpad); store at matmul dtype ---------
    x_c = x.astype(mm)
    if (Bp, Tpad) != (B, T):
        x_c = jnp.zeros((Bp, Tpad, I), mm).at[:B, :T].set(x_c)

    # ---- weight buffering / VMEM budget (cap at v7x's 64 MiB physical VMEM) ----
    weight_bytes = (w_ih_p.size + w_hh_p.size + w_fc_p.size) * itm
    if single_buffer_weights is None:
        single_buffer = weight_bytes > (4 << 20)   # only bother when it matters
    else:
        single_buffer = bool(single_buffer_weights)
    wbuf = 1 if single_buffer else 2
    need = (2 * TB * tt * I * itm                    # x chunk (double-buffered)
            + wbuf * weight_bytes                    # resident weights
            + wbuf * (3 * Hp + Hp + Op) * 4          # biases
            + 2 * TB * Op * 4                        # output block
            + TB * Hp * 4)                           # h carry scratch
    vmem_limit = int(min(64 << 20, max(32 << 20, int(need * 1.5) + (2 << 20))))

    grid_spec = pltpu.PrefetchScalarGridSpec(
        num_scalar_prefetch=0,
        grid=(n_btiles, n_tchunks),                  # time axis innermost (serial)
        in_specs=[
            pl.BlockSpec((TB, tt, I), lambda b, c: (b, c, 0)),   # x chunk
            _const_spec((I, 3 * Hp), single_buffer),             # W_ih^T
            _const_spec((1, 3 * Hp), single_buffer),             # folded bias
            _const_spec((Hp, 3 * Hp), single_buffer),            # W_hh^T
            _const_spec((1, Hp), single_buffer),                 # b_hn
            _const_spec((Hp, Op), single_buffer),                # W_fc^T
            _const_spec((1, Op), single_buffer),                 # b_fc
        ],
        out_specs=pl.BlockSpec((TB, Op), lambda b, c: (b, 0)),
        scratch_shapes=[pltpu.VMEM((TB, Hp), f32)],
    )

    out_p = pl.pallas_call(
        functools.partial(_gru_fused_kernel, hp=Hp, tt=tt,
                          t_total=T, need_mask=need_mask),
        out_shape=jax.ShapeDtypeStruct((Bp, Op), f32),
        grid_spec=grid_spec,
        compiler_params=pltpu.CompilerParams(
            dimension_semantics=("parallel", "arbitrary"),
            vmem_limit_bytes=vmem_limit),
    )(x_c, w_ih_p, b_i_p, w_hh_p, b_hn_p, w_fc_p, b_fc_p)
    return out_p


def gru_net_forward(x, params, *, time_chunk=8, use_bf16_matmul=True,
                    batch_tile=None, single_buffer_weights=None):
    """Convenience wrapper: pack params (one-time cost) + fused forward.

    For repeated inference, call prepare_gru_params() once and reuse
    gru_forward_packed() directly.
    """
    packed = prepare_gru_params(params, use_bf16_matmul=use_bf16_matmul)
    B = x.shape[0]
    O = params[4].shape[0]
    out_p = gru_forward_packed(x, packed, time_chunk=time_chunk,
                               batch_tile=batch_tile,
                               single_buffer_weights=single_buffer_weights)
    return out_p[:B, :O]


# ---------------------------------------------------------------------------
# Pure-JAX reference (PyTorch nn.GRU + nn.Linear semantics) and init.
# ---------------------------------------------------------------------------
def gru_net_reference(x, params):
    w_ih, w_hh, b_ih, b_hh, w_fc, b_fc = params
    B, T, I = x.shape
    H = w_hh.shape[1]

    def step(h, x_t):
        gi = x_t @ w_ih.T + b_ih
        gh = h @ w_hh.T + b_hh
        i_r, i_z, i_n = gi[:, :H], gi[:, H:2 * H], gi[:, 2 * H:]
        h_r, h_z, h_n = gh[:, :H], gh[:, H:2 * H], gh[:, 2 * H:]
        r = jax.nn.sigmoid(i_r + h_r)
        z = jax.nn.sigmoid(i_z + h_z)
        n = jnp.tanh(i_n + r * h_n)
        return (1.0 - z) * n + z * h, None

    h0 = jnp.zeros((B, H), jnp.float32)
    h_last, _ = jax.lax.scan(step, h0, jnp.transpose(x, (1, 0, 2)))
    return h_last @ w_fc.T + b_fc


def init_params(key, input_size, hidden_size, output_size):
    """Deterministic uniform init (PyTorch-style bound 1/sqrt(H))."""
    ks = jax.random.split(key, 6)
    bound = 1.0 / jnp.sqrt(hidden_size)
    w_ih = jax.random.uniform(ks[0], (3 * hidden_size, input_size),
                              jnp.float32, -bound, bound)
    w_hh = jax.random.uniform(ks[1], (3 * hidden_size, hidden_size),
                              jnp.float32, -bound, bound)
    b_ih = jax.random.uniform(ks[2], (3 * hidden_size,), jnp.float32, -bound, bound)
    b_hh = jax.random.uniform(ks[3], (3 * hidden_size,), jnp.float32, -bound, bound)
    w_fc = jax.random.uniform(ks[4], (output_size, hidden_size),
                              jnp.float32, -bound, bound)
    b_fc = jax.random.uniform(ks[5], (output_size,), jnp.float32, -bound, bound)
    return (w_ih, w_hh, b_ih, b_hh, w_fc, b_fc)


if __name__ == "__main__":
    B, T, I, H, O = 2, 8, 16, 32, 8

    key = jax.random.PRNGKey(0)
    k_x, k_p, k_x2 = jax.random.split(key, 3)
    x = jax.random.normal(k_x, (B, T, I), jnp.float32)
    params = init_params(k_p, I, H, O)

    ref = gru_net_reference(x, params)

    # f32 MXU path (tight tolerance).
    out_f32 = jax.block_until_ready(
        gru_net_forward(x, params, use_bf16_matmul=False))
    assert out_f32.shape == (B, O)
    err = float(jnp.max(jnp.abs(out_f32 - ref)))
    assert err < 1e-4, f"f32 mismatch: max abs err {err}"

    # Default path: bf16 weights/activations at the MXU, f32 gate math.
    out_bf16 = jax.block_until_ready(gru_net_forward(x, params))
    err = float(jnp.max(jnp.abs(out_bf16 - ref)))
    assert err < 5e-2, f"bf16 mismatch: max abs err {err}"

    # Ragged time (masked remainder chunk) + multiple batch tiles, f32.
    B2, T2 = 13, 20
    x2 = jax.random.normal(k_x2, (B2, T2, I), jnp.float32)
    ref2 = gru_net_reference(x2, params)
    out2 = jax.block_until_ready(
        gru_net_forward(x2, params, time_chunk=8, batch_tile=8,
                        use_bf16_matmul=False))
    err2 = float(jnp.max(jnp.abs(out2 - ref2)))
    assert err2 < 1e-4, f"ragged/tiled f32 mismatch: max abs err {err2}"

    print("KERNEL_OK")
</pallas_src>

<mosaic_0001>
module attributes {stable_mosaic.version = 11 : i64} {
  func.func @_gru_fused_kernel(%arg0: i32, %arg1: i32, %arg2: memref<8x8x16xf32, #tpu.memory_space<vmem>>, %arg3: memref<16x384xf32, #tpu.memory_space<vmem>>, %arg4: memref<1x384xf32, #tpu.memory_space<vmem>>, %arg5: memref<128x384xf32, #tpu.memory_space<vmem>>, %arg6: memref<1x128xf32, #tpu.memory_space<vmem>>, %arg7: memref<128x128xf32, #tpu.memory_space<vmem>>, %arg8: memref<1x128xf32, #tpu.memory_space<vmem>>, %arg9: memref<8x128xf32, #tpu.memory_space<vmem>>, %arg10: memref<8x128xf32, #tpu.memory_space<vmem>>) attributes {dimension_semantics = [#tpu.dimension_semantics<parallel>, #tpu.dimension_semantics<arbitrary>], iteration_bounds = array<i64: 1, 1>, scalar_prefetch = 0 : i64, scratch_operands = 1 : i64, tpu.core_type = #tpu.core_type<tc>, window_params = [{transform_indices = @transform_0, window_bounds = array<i64: 8, 8, 16>}, {pipeline_mode = #tpu.pipeline_mode<synchronous>, transform_indices = @transform_1, window_bounds = array<i64: 16, 384>}, {pipeline_mode = #tpu.pipeline_mode<synchronous>, transform_indices = @transform_2, window_bounds = array<i64: 1, 384>}, {pipeline_mode = #tpu.pipeline_mode<synchronous>, transform_indices = @transform_3, window_bounds = array<i64: 128, 384>}, {pipeline_mode = #tpu.pipeline_mode<synchronous>, transform_indices = @transform_4, window_bounds = array<i64: 1, 128>}, {pipeline_mode = #tpu.pipeline_mode<synchronous>, transform_indices = @transform_5, window_bounds = array<i64: 128, 128>}, {pipeline_mode = #tpu.pipeline_mode<synchronous>, transform_indices = @transform_6, window_bounds = array<i64: 1, 128>}, {transform_indices = @transform_7, window_bounds = array<i64: 8, 128>}]} {
    %c0_i32 = arith.constant 0 : i32
    %0 = arith.cmpi eq, %arg1, %c0_i32 : i32
    %1 = arith.extui %0 : i1 to i32
    %c0_i32_0 = arith.constant 0 : i32
    %2 = arith.cmpi ne, %1, %c0_i32_0 : i32
    scf.if %2 {
      %cst_74 = arith.constant 0.000000e+00 : f32
      %267 = vector.broadcast %cst_74 : f32 to vector<8x128xf32>
      %c0_75 = arith.constant 0 : index
      %c0_76 = arith.constant 0 : index
      %268 = vector.load %arg10[%c0_75, %c0_76] : memref<8x128xf32, #tpu.memory_space<vmem>>, vector<8x128xf32>
      tpu.vector_store %arg10[%c0_75, %c0_76], %267 {strides = array<i32>} : memref<8x128xf32, #tpu.memory_space<vmem>>, vector<8x128xf32>,
    } else {
    }
    %c0 = arith.constant 0 : index
    %c0_1 = arith.constant 0 : index
    %c0_2 = arith.constant 0 : index
    %3 = vector.load %arg2[%c0, %c0_1, %c0_2] : memref<8x8x16xf32, #tpu.memory_space<vmem>>, vector<8x8x16xf32>
    %c0_3 = arith.constant 0 : index
    %c0_4 = arith.constant 0 : index
    %4 = vector.load %arg3[%c0_3, %c0_4] : memref<16x384xf32, #tpu.memory_space<vmem>>, vector<16x384xf32>
    %c0_5 = arith.constant 0 : index
    %c0_6 = arith.constant 0 : index
    %5 = vector.load %arg5[%c0_5, %c0_6] : memref<128x384xf32, #tpu.memory_space<vmem>>, vector<128x128xf32>
    %c0_7 = arith.constant 0 : index
    %c128 = arith.constant 128 : index
    %6 = vector.load %arg5[%c0_7, %c128] : memref<128x384xf32, #tpu.memory_space<vmem>>, vector<128x128xf32>
    %c0_8 = arith.constant 0 : index
    %c256 = arith.constant 256 : index
    %7 = vector.load %arg5[%c0_8, %c256] : memref<128x384xf32, #tpu.memory_space<vmem>>, vector<128x128xf32>
    %c0_9 = arith.constant 0 : index
    %c0_10 = arith.constant 0 : index
    %8 = vector.load %arg4[%c0_9, %c0_10] : memref<1x384xf32, #tpu.memory_space<vmem>>, vector<1x384xf32>
    %9 = vector.shape_cast %8 : vector<1x384xf32> to vector<1x384xf32>
    %10 = vector.broadcast %9 : vector<1x384xf32> to vector<8x384xf32>
    %c0_11 = arith.constant 0 : index
    %c0_12 = arith.constant 0 : index
    %11 = vector.load %arg6[%c0_11, %c0_12] : memref<1x128xf32, #tpu.memory_space<vmem>>, vector<1x128xf32>
    %12 = vector.shape_cast %11 : vector<1x128xf32> to vector<1x128xf32>
    %13 = vector.broadcast %12 : vector<1x128xf32> to vector<8x128xf32>
    %c0_13 = arith.constant 0 : index
    %c0_14 = arith.constant 0 : index
    %14 = vector.load %arg10[%c0_13, %c0_14] : memref<8x128xf32, #tpu.memory_space<vmem>>, vector<8x128xf32>
    %15 = vector.extract_strided_slice %3 {offsets = [0, 0, 0], sizes = [8, 1, 16], strides = [1, 1, 1]} : vector<8x8x16xf32> to vector<8x1x16xf32>
    %16 = vector.shape_cast %15 : vector<8x1x16xf32> to vector<8x16xf32>
    %cst = arith.constant dense<0.000000e+00> : vector<8x384xf32>
    %17 = tpu.matmul %16, %4, %cst {dimension_numbers = #tpu.dot_dimension_numbers<[1], [0], [0], [1], [0, 0, 1, 1], [], []>} : vector<8x16xf32>, vector<16x384xf32>, vector<8x384xf32> -> vector<8x384xf32>
    %18 = arith.addf %17, %10 : vector<8x384xf32>
    %cst_15 = arith.constant dense<0.000000e+00> : vector<8x128xf32>
    %19 = tpu.matmul %14, %5, %cst_15 {dimension_numbers = #tpu.dot_dimension_numbers<[1], [0], [0], [1], [0, 0, 1, 1], [], []>} : vector<8x128xf32>, vector<128x128xf32>, vector<8x128xf32> -> vector<8x128xf32>
    %cst_16 = arith.constant dense<0.000000e+00> : vector<8x128xf32>
    %20 = tpu.matmul %14, %6, %cst_16 {dimension_numbers = #tpu.dot_dimension_numbers<[1], [0], [0], [1], [0, 0, 1, 1], [], []>} : vector<8x128xf32>, vector<128x128xf32>, vector<8x128xf32> -> vector<8x128xf32>
    %21 = vector.extract_strided_slice %18 {offsets = [0, 0], sizes = [8, 128], strides = [1, 1]} : vector<8x384xf32> to vector<8x128xf32>
    %22 = arith.addf %21, %19 : vector<8x128xf32>
    %23 = arith.negf %22 : vector<8x128xf32>
    %24 = math.exp %23 : vector<8x128xf32>
    %cst_17 = arith.constant 1.000000e+00 : f32
    %25 = vector.broadcast %cst_17 : f32 to vector<8x128xf32>
    %26 = arith.addf %25, %24 : vector<8x128xf32>
    %27 = arith.divf %25, %26 : vector<8x128xf32>
    %28 = vector.extract_strided_slice %18 {offsets = [0, 128], sizes = [8, 128], strides = [1, 1]} : vector<8x384xf32> to vector<8x128xf32>
    %29 = arith.addf %28, %20 : vector<8x128xf32>
    %30 = arith.negf %29 : vector<8x128xf32>
    %31 = math.exp %30 : vector<8x128xf32>
    %cst_18 = arith.constant 1.000000e+00 : f32
    %32 = vector.broadcast %cst_18 : f32 to vector<8x128xf32>
    %33 = arith.addf %32, %31 : vector<8x128xf32>
    %34 = arith.divf %32, %33 : vector<8x128xf32>
    %cst_19 = arith.constant dense<0.000000e+00> : vector<8x128xf32>
    %35 = tpu.matmul %14, %7, %cst_19 {dimension_numbers = #tpu.dot_dimension_numbers<[1], [0], [0], [1], [0, 0, 1, 1], [], []>} : vector<8x128xf32>, vector<128x128xf32>, vector<8x128xf32> -> vector<8x128xf32>
    %36 = arith.addf %35, %13 : vector<8x128xf32>
    %37 = vector.extract_strided_slice %18 {offsets = [0, 256], sizes = [8, 128], strides = [1, 1]} : vector<8x384xf32> to vector<8x128xf32>
    %38 = arith.mulf %27, %36 : vector<8x128xf32>
    %39 = arith.addf %37, %38 : vector<8x128xf32>
    %40 = math.tanh %39 : vector<8x128xf32>
    %cst_20 = arith.constant 1.000000e+00 : f32
    %41 = vector.broadcast %cst_20 : f32 to vector<8x128xf32>
    %42 = arith.subf %41, %34 : vector<8x128xf32>
    %43 = arith.mulf %42, %40 : vector<8x128xf32>
    %44 = arith.mulf %34, %14 : vector<8x128xf32>
    %45 = arith.addf %43, %44 : vector<8x128xf32>
    %46 = vector.extract_strided_slice %3 {offsets = [0, 1, 0], sizes = [8, 1, 16], strides = [1, 1, 1]} : vector<8x8x16xf32> to vector<8x1x16xf32>
    %47 = vector.shape_cast %46 : vector<8x1x16xf32> to vector<8x16xf32>
    %cst_21 = arith.constant dense<0.000000e+00> : vector<8x384xf32>
    %48 = tpu.matmul %47, %4, %cst_21 {dimension_numbers = #tpu.dot_dimension_numbers<[1], [0], [0], [1], [0, 0, 1, 1], [], []>} : vector<8x16xf32>, vector<16x384xf32>, vector<8x384xf32> -> vector<8x384xf32>
    %49 = arith.addf %48, %10 : vector<8x384xf32>
    %cst_22 = arith.constant dense<0.000000e+00> : vector<8x128xf32>
    %50 = tpu.matmul %45, %5, %cst_22 {dimension_numbers = #tpu.dot_dimension_numbers<[1], [0], [0], [1], [0, 0, 1, 1], [], []>} : vector<8x128xf32>, vector<128x128xf32>, vector<8x128xf32> -> vector<8x128xf32>
    %cst_23 = arith.constant dense<0.000000e+00> : vector<8x128xf32>
    %51 = tpu.matmul %45, %6, %cst_23 {dimension_numbers = #tpu.dot_dimension_numbers<[1], [0], [0], [1], [0, 0, 1, 1], [], []>} : vector<8x128xf32>, vector<128x128xf32>, vector<8x128xf32> -> vector<8x128xf32>
    %52 = vector.extract_strided_slice %49 {offsets = [0, 0], sizes = [8, 128], strides = [1, 1]} : vector<8x384xf32> to vector<8x128xf32>
    %53 = arith.addf %52, %50 : vector<8x128xf32>
    %54 = arith.negf %53 : vector<8x128xf32>
    %55 = math.exp %54 : vector<8x128xf32>
    %cst_24 = arith.constant 1.000000e+00 : f32
    %56 = vector.broadcast %cst_24 : f32 to vector<8x128xf32>
    %57 = arith.addf %56, %55 : vector<8x128xf32>
    %58 = arith.divf %56, %57 : vector<8x128xf32>
    %59 = vector.extract_strided_slice %49 {offsets = [0, 128], sizes = [8, 128], strides = [1, 1]} : vector<8x384xf32> to vector<8x128xf32>
    %60 = arith.addf %59, %51 : vector<8x128xf32>
    %61 = arith.negf %60 : vector<8x128xf32>
    %62 = math.exp %61 : vector<8x128xf32>
    %cst_25 = arith.constant 1.000000e+00 : f32
    %63 = vector.broadcast %cst_25 : f32 to vector<8x128xf32>
    %64 = arith.addf %63, %62 : vector<8x128xf32>
    %65 = arith.divf %63, %64 : vector<8x128xf32>
    %cst_26 = arith.constant dense<0.000000e+00> : vector<8x128xf32>
    %66 = tpu.matmul %45, %7, %cst_26 {dimension_numbers = #tpu.dot_dimension_numbers<[1], [0], [0], [1], [0, 0, 1, 1], [], []>} : vector<8x128xf32>, vector<128x128xf32>, vector<8x128xf32> -> vector<8x128xf32>
    %67 = arith.addf %66, %13 : vector<8x128xf32>
    %68 = vector.extract_strided_slice %49 {offsets = [0, 256], sizes = [8, 128], strides = [1, 1]} : vector<8x384xf32> to vector<8x128xf32>
    %69 = arith.mulf %58, %67 : vector<8x128xf32>
    %70 = arith.addf %68, %69 : vector<8x128xf32>
    %71 = math.tanh %70 : vector<8x128xf32>
    %cst_27 = arith.constant 1.000000e+00 : f32
    %72 = vector.broadcast %cst_27 : f32 to vector<8x128xf32>
    %73 = arith.subf %72, %65 : vector<8x128xf32>
    %74 = arith.mulf %73, %71 : vector<8x128xf32>
    %75 = arith.mulf %65, %45 : vector<8x128xf32>
    %76 = arith.addf %74, %75 : vector<8x128xf32>
    %77 = vector.extract_strided_slice %3 {offsets = [0, 2, 0], sizes = [8, 1, 16], strides = [1, 1, 1]} : vector<8x8x16xf32> to vector<8x1x16xf32>
    %78 = vector.shape_cast %77 : vector<8x1x16xf32> to vector<8x16xf32>
    %cst_28 = arith.constant dense<0.000000e+00> : vector<8x384xf32>
    %79 = tpu.matmul %78, %4, %cst_28 {dimension_numbers = #tpu.dot_dimension_numbers<[1], [0], [0], [1], [0, 0, 1, 1], [], []>} : vector<8x16xf32>, vector<16x384xf32>, vector<8x384xf32> -> vector<8x384xf32>
    %80 = arith.addf %79, %10 : vector<8x384xf32>
    %cst_29 = arith.constant dense<0.000000e+00> : vector<8x128xf32>
    %81 = tpu.matmul %76, %5, %cst_29 {dimension_numbers = #tpu.dot_dimension_numbers<[1], [0], [0], [1], [0, 0, 1, 1], [], []>} : vector<8x128xf32>, vector<128x128xf32>, vector<8x128xf32> -> vector<8x128xf32>
    %cst_30 = arith.constant dense<0.000000e+00> : vector<8x128xf32>
    %82 = tpu.matmul %76, %6, %cst_30 {dimension_numbers = #tpu.dot_dimension_numbers<[1], [0], [0], [1], [0, 0, 1, 1], [], []>} : vector<8x128xf32>, vector<128x128xf32>, vector<8x128xf32> -> vector<8x128xf32>
    %83 = vector.extract_strided_slice %80 {offsets = [0, 0], sizes = [8, 128], strides = [1, 1]} : vector<8x384xf32> to vector<8x128xf32>
    %84 = arith.addf %83, %81 : vector<8x128xf32>
    %85 = arith.negf %84 : vector<8x128xf32>
    %86 = math.exp %85 : vector<8x128xf32>
    %cst_31 = arith.constant 1.000000e+00 : f32
    %87 = vector.broadcast %cst_31 : f32 to vector<8x128xf32>
    %88 = arith.addf %87, %86 : vector<8x128xf32>
    %89 = arith.divf %87, %88 : vector<8x128xf32>
    %90 = vector.extract_strided_slice %80 {offsets = [0, 128], sizes = [8, 128], strides = [1, 1]} : vector<8x384xf32> to vector<8x128xf32>
    %91 = arith.addf %90, %82 : vector<8x128xf32>
    %92 = arith.negf %91 : vector<8x128xf32>
    %93 = math.exp %92 : vector<8x128xf32>
    %cst_32 = arith.constant 1.000000e+00 : f32
    %94 = vector.broadcast %cst_32 : f32 to vector<8x128xf32>
    %95 = arith.addf %94, %93 : vector<8x128xf32>
    %96 = arith.divf %94, %95 : vector<8x128xf32>
    %cst_33 = arith.constant dense<0.000000e+00> : vector<8x128xf32>
    %97 = tpu.matmul %76, %7, %cst_33 {dimension_numbers = #tpu.dot_dimension_numbers<[1], [0], [0], [1], [0, 0, 1, 1], [], []>} : vector<8x128xf32>, vector<128x128xf32>, vector<8x128xf32> -> vector<8x128xf32>
    %98 = arith.addf %97, %13 : vector<8x128xf32>
    %99 = vector.extract_strided_slice %80 {offsets = [0, 256], sizes = [8, 128], strides = [1, 1]} : vector<8x384xf32> to vector<8x128xf32>
    %100 = arith.mulf %89, %98 : vector<8x128xf32>
    %101 = arith.addf %99, %100 : vector<8x128xf32>
    %102 = math.tanh %101 : vector<8x128xf32>
    %cst_34 = arith.constant 1.000000e+00 : f32
    %103 = vector.broadcast %cst_34 : f32 to vector<8x128xf32>
    %104 = arith.subf %103, %96 : vector<8x128xf32>
    %105 = arith.mulf %104, %102 : vector<8x128xf32>
    %106 = arith.mulf %96, %76 : vector<8x128xf32>
    %107 = arith.addf %105, %106 : vector<8x128xf32>
    %108 = vector.extract_strided_slice %3 {offsets = [0, 3, 0], sizes = [8, 1, 16], strides = [1, 1, 1]} : vector<8x8x16xf32> to vector<8x1x16xf32>
    %109 = vector.shape_cast %108 : vector<8x1x16xf32> to vector<8x16xf32>
    %cst_35 = arith.constant dense<0.000000e+00> : vector<8x384xf32>
    %110 = tpu.matmul %109, %4, %cst_35 {dimension_numbers = #tpu.dot_dimension_numbers<[1], [0], [0], [1], [0, 0, 1, 1], [], []>} : vector<8x16xf32>, vector<16x384xf32>, vector<8x384xf32> -> vector<8x384xf32>
    %111 = arith.addf %110, %10 : vector<8x384xf32>
    %cst_36 = arith.constant dense<0.000000e+00> : vector<8x128xf32>
    %112 = tpu.matmul %107, %5, %cst_36 {dimension_numbers = #tpu.dot_dimension_numbers<[1], [0], [0], [1], [0, 0, 1, 1], [], []>} : vector<8x128xf32>, vector<128x128xf32>, vector<8x128xf32> -> vector<8x128xf32>
    %cst_37 = arith.constant dense<0.000000e+00> : vector<8x128xf32>
    %113 = tpu.matmul %107, %6, %cst_37 {dimension_numbers = #tpu.dot_dimension_numbers<[1], [0], [0], [1], [0, 0, 1, 1], [], []>} : vector<8x128xf32>, vector<128x128xf32>, vector<8x128xf32> -> vector<8x128xf32>
    %114 = vector.extract_strided_slice %111 {offsets = [0, 0], sizes = [8, 128], strides = [1, 1]} : vector<8x384xf32> to vector<8x128xf32>
    %115 = arith.addf %114, %112 : vector<8x128xf32>
    %116 = arith.negf %115 : vector<8x128xf32>
    %117 = math.exp %116 : vector<8x128xf32>
    %cst_38 = arith.constant 1.000000e+00 : f32
    %118 = vector.broadcast %cst_38 : f32 to vector<8x128xf32>
    %119 = arith.addf %118, %117 : vector<8x128xf32>
    %120 = arith.divf %118, %119 : vector<8x128xf32>
    %121 = vector.extract_strided_slice %111 {offsets = [0, 128], sizes = [8, 128], strides = [1, 1]} : vector<8x384xf32> to vector<8x128xf32>
    %122 = arith.addf %121, %113 : vector<8x128xf32>
    %123 = arith.negf %122 : vector<8x128xf32>
    %124 = math.exp %123 : vector<8x128xf32>
    %cst_39 = arith.constant 1.000000e+00 : f32
    %125 = vector.broadcast %cst_39 : f32 to vector<8x128xf32>
    %126 = arith.addf %125, %124 : vector<8x128xf32>
    %127 = arith.divf %125, %126 : vector<8x128xf32>
    %cst_40 = arith.constant dense<0.000000e+00> : vector<8x128xf32>
    %128 = tpu.matmul %107, %7, %cst_40 {dimension_numbers = #tpu.dot_dimension_numbers<[1], [0], [0], [1], [0, 0, 1, 1], [], []>} : vector<8x128xf32>, vector<128x128xf32>, vector<8x128xf32> -> vector<8x128xf32>
    %129 = arith.addf %128, %13 : vector<8x128xf32>
    %130 = vector.extract_strided_slice %111 {offsets = [0, 256], sizes = [8, 128], strides = [1, 1]} : vector<8x384xf32> to vector<8x128xf32>
    %131 = arith.mulf %120, %129 : vector<8x128xf32>
    %132 = arith.addf %130, %131 : vector<8x128xf32>
    %133 = math.tanh %132 : vector<8x128xf32>
    %cst_41 = arith.constant 1.000000e+00 : f32
    %134 = vector.broadcast %cst_41 : f32 to vector<8x128xf32>
    %135 = arith.subf %134, %127 : vector<8x128xf32>
    %136 = arith.mulf %135, %133 : vector<8x128xf32>
    %137 = arith.mulf %127, %107 : vector<8x128xf32>
    %138 = arith.addf %136, %137 : vector<8x128xf32>
    %139 = vector.extract_strided_slice %3 {offsets = [0, 4, 0], sizes = [8, 1, 16], strides = [1, 1, 1]} : vector<8x8x16xf32> to vector<8x1x16xf32>
    %140 = vector.shape_cast %139 : vector<8x1x16xf32> to vector<8x16xf32>
    %cst_42 = arith.constant dense<0.000000e+00> : vector<8x384xf32>
    %141 = tpu.matmul %140, %4, %cst_42 {dimension_numbers = #tpu.dot_dimension_numbers<[1], [0], [0], [1], [0, 0, 1, 1], [], []>} : vector<8x16xf32>, vector<16x384xf32>, vector<8x384xf32> -> vector<8x384xf32>
    %142 = arith.addf %141, %10 : vector<8x384xf32>
    %cst_43 = arith.constant dense<0.000000e+00> : vector<8x128xf32>
    %143 = tpu.matmul %138, %5, %cst_43 {dimension_numbers = #tpu.dot_dimension_numbers<[1], [0], [0], [1], [0, 0, 1, 1], [], []>} : vector<8x128xf32>, vector<128x128xf32>, vector<8x128xf32> -> vector<8x128xf32>
    %cst_44 = arith.constant dense<0.000000e+00> : vector<8x128xf32>
    %144 = tpu.matmul %138, %6, %cst_44 {dimension_numbers = #tpu.dot_dimension_numbers<[1], [0], [0], [1], [0, 0, 1, 1], [], []>} : vector<8x128xf32>, vector<128x128xf32>, vector<8x128xf32> -> vector<8x128xf32>
    %145 = vector.extract_strided_slice %142 {offsets = [0, 0], sizes = [8, 128], strides = [1, 1]} : vector<8x384xf32> to vector<8x128xf32>
    %146 = arith.addf %145, %143 : vector<8x128xf32>
    %147 = arith.negf %146 : vector<8x128xf32>
    %148 = math.exp %147 : vector<8x128xf32>
    %cst_45 = arith.constant 1.000000e+00 : f32
    %149 = vector.broadcast %cst_45 : f32 to vector<8x128xf32>
    %150 = arith.addf %149, %148 : vector<8x128xf32>
    %151 = arith.divf %149, %150 : vector<8x128xf32>
    %152 = vector.extract_strided_slice %142 {offsets = [0, 128], sizes = [8, 128], strides = [1, 1]} : vector<8x384xf32> to vector<8x128xf32>
    %153 = arith.addf %152, %144 : vector<8x128xf32>
    %154 = arith.negf %153 : vector<8x128xf32>
    %155 = math.exp %154 : vector<8x128xf32>
    %cst_46 = arith.constant 1.000000e+00 : f32
    %156 = vector.broadcast %cst_46 : f32 to vector<8x128xf32>
    %157 = arith.addf %156, %155 : vector<8x128xf32>
    %158 = arith.divf %156, %157 : vector<8x128xf32>
    %cst_47 = arith.constant dense<0.000000e+00> : vector<8x128xf32>
    %159 = tpu.matmul %138, %7, %cst_47 {dimension_numbers = #tpu.dot_dimension_numbers<[1], [0], [0], [1], [0, 0, 1, 1], [], []>} : vector<8x128xf32>, vector<128x128xf32>, vector<8x128xf32> -> vector<8x128xf32>
    %160 = arith.addf %159, %13 : vector<8x128xf32>
    %161 = vector.extract_strided_slice %142 {offsets = [0, 256], sizes = [8, 128], strides = [1, 1]} : vector<8x384xf32> to vector<8x128xf32>
    %162 = arith.mulf %151, %160 : vector<8x128xf32>
    %163 = arith.addf %161, %162 : vector<8x128xf32>
    %164 = math.tanh %163 : vector<8x128xf32>
    %cst_48 = arith.constant 1.000000e+00 : f32
    %165 = vector.broadcast %cst_48 : f32 to vector<8x128xf32>
    %166 = arith.subf %165, %158 : vector<8x128xf32>
    %167 = arith.mulf %166, %164 : vector<8x128xf32>
    %168 = arith.mulf %158, %138 : vector<8x128xf32>
    %169 = arith.addf %167, %168 : vector<8x128xf32>
    %170 = vector.extract_strided_slice %3 {offsets = [0, 5, 0], sizes = [8, 1, 16], strides = [1, 1, 1]} : vector<8x8x16xf32> to vector<8x1x16xf32>
    %171 = vector.shape_cast %170 : vector<8x1x16xf32> to vector<8x16xf32>
    %cst_49 = arith.constant dense<0.000000e+00> : vector<8x384xf32>
    %172 = tpu.matmul %171, %4, %cst_49 {dimension_numbers = #tpu.dot_dimension_numbers<[1], [0], [0], [1], [0, 0, 1, 1], [], []>} : vector<8x16xf32>, vector<16x384xf32>, vector<8x384xf32> -> vector<8x384xf32>
    %173 = arith.addf %172, %10 : vector<8x384xf32>
    %cst_50 = arith.constant dense<0.000000e+00> : vector<8x128xf32>
    %174 = tpu.matmul %169, %5, %cst_50 {dimension_numbers = #tpu.dot_dimension_numbers<[1], [0], [0], [1], [0, 0, 1, 1], [], []>} : vector<8x128xf32>, vector<128x128xf32>, vector<8x128xf32> -> vector<8x128xf32>
    %cst_51 = arith.constant dense<0.000000e+00> : vector<8x128xf32>
    %175 = tpu.matmul %169, %6, %cst_51 {dimension_numbers = #tpu.dot_dimension_numbers<[1], [0], [0], [1], [0, 0, 1, 1], [], []>} : vector<8x128xf32>, vector<128x128xf32>, vector<8x128xf32> -> vector<8x128xf32>
    %176 = vector.extract_strided_slice %173 {offsets = [0, 0], sizes = [8, 128], strides = [1, 1]} : vector<8x384xf32> to vector<8x128xf32>
    %177 = arith.addf %176, %174 : vector<8x128xf32>
    %178 = arith.negf %177 : vector<8x128xf32>
    %179 = math.exp %178 : vector<8x128xf32>
    %cst_52 = arith.constant 1.000000e+00 : f32
    %180 = vector.broadcast %cst_52 : f32 to vector<8x128xf32>
    %181 = arith.addf %180, %179 : vector<8x128xf32>
    %182 = arith.divf %180, %181 : vector<8x128xf32>
    %183 = vector.extract_strided_slice %173 {offsets = [0, 128], sizes = [8, 128], strides = [1, 1]} : vector<8x384xf32> to vector<8x128xf32>
    %184 = arith.addf %183, %175 : vector<8x128xf32>
    %185 = arith.negf %184 : vector<8x128xf32>
    %186 = math.exp %185 : vector<8x128xf32>
    %cst_53 = arith.constant 1.000000e+00 : f32
    %187 = vector.broadcast %cst_53 : f32 to vector<8x128xf32>
    %188 = arith.addf %187, %186 : vector<8x128xf32>
    %189 = arith.divf %187, %188 : vector<8x128xf32>
    %cst_54 = arith.constant dense<0.000000e+00> : vector<8x128xf32>
    %190 = tpu.matmul %169, %7, %cst_54 {dimension_numbers = #tpu.dot_dimension_numbers<[1], [0], [0], [1], [0, 0, 1, 1], [], []>} : vector<8x128xf32>, vector<128x128xf32>, vector<8x128xf32> -> vector<8x128xf32>
    %191 = arith.addf %190, %13 : vector<8x128xf32>
    %192 = vector.extract_strided_slice %173 {offsets = [0, 256], sizes = [8, 128], strides = [1, 1]} : vector<8x384xf32> to vector<8x128xf32>
    %193 = arith.mulf %182, %191 : vector<8x128xf32>
    %194 = arith.addf %192, %193 : vector<8x128xf32>
    %195 = math.tanh %194 : vector<8x128xf32>
    %cst_55 = arith.constant 1.000000e+00 : f32
    %196 = vector.broadcast %cst_55 : f32 to vector<8x128xf32>
    %197 = arith.subf %196, %189 : vector<8x128xf32>
    %198 = arith.mulf %197, %195 : vector<8x128xf32>
    %199 = arith.mulf %189, %169 : vector<8x128xf32>
    %200 = arith.addf %198, %199 : vector<8x128xf32>
    %201 = vector.extract_strided_slice %3 {offsets = [0, 6, 0], sizes = [8, 1, 16], strides = [1, 1, 1]} : vector<8x8x16xf32> to vector<8x1x16xf32>
    %202 = vector.shape_cast %201 : vector<8x1x16xf32> to vector<8x16xf32>
    %cst_56 = arith.constant dense<0.000000e+00> : vector<8x384xf32>
    %203 = tpu.matmul %202, %4, %cst_56 {dimension_numbers = #tpu.dot_dimension_numbers<[1], [0], [0], [1], [0, 0, 1, 1], [], []>} : vector<8x16xf32>, vector<16x384xf32>, vector<8x384xf32> -> vector<8x384xf32>
    %204 = arith.addf %203, %10 : vector<8x384xf32>
    %cst_57 = arith.constant dense<0.000000e+00> : vector<8x128xf32>
    %205 = tpu.matmul %200, %5, %cst_57 {dimension_numbers = #tpu.dot_dimension_numbers<[1], [0], [0], [1], [0, 0, 1, 1], [], []>} : vector<8x128xf32>, vector<128x128xf32>, vector<8x128xf32> -> vector<8x128xf32>
    %cst_58 = arith.constant dense<0.000000e+00> : vector<8x128xf32>
    %206 = tpu.matmul %200, %6, %cst_58 {dimension_numbers = #tpu.dot_dimension_numbers<[1], [0], [0], [1], [0, 0, 1, 1], [], []>} : vector<8x128xf32>, vector<128x128xf32>, vector<8x128xf32> -> vector<8x128xf32>
    %207 = vector.extract_strided_slice %204 {offsets = [0, 0], sizes = [8, 128], strides = [1, 1]} : vector<8x384xf32> to vector<8x128xf32>
    %208 = arith.addf %207, %205 : vector<8x128xf32>
    %209 = arith.negf %208 : vector<8x128xf32>
    %210 = math.exp %209 : vector<8x128xf32>
    %cst_59 = arith.constant 1.000000e+00 : f32
    %211 = vector.broadcast %cst_59 : f32 to vector<8x128xf32>
    %212 = arith.addf %211, %210 : vector<8x128xf32>
    %213 = arith.divf %211, %212 : vector<8x128xf32>
    %214 = vector.extract_strided_slice %204 {offsets = [0, 128], sizes = [8, 128], strides = [1, 1]} : vector<8x384xf32> to vector<8x128xf32>
    %215 = arith.addf %214, %206 : vector<8x128xf32>
    %216 = arith.negf %215 : vector<8x128xf32>
    %217 = math.exp %216 : vector<8x128xf32>
    %cst_60 = arith.constant 1.000000e+00 : f32
    %218 = vector.broadcast %cst_60 : f32 to vector<8x128xf32>
    %219 = arith.addf %218, %217 : vector<8x128xf32>
    %220 = arith.divf %218, %219 : vector<8x128xf32>
    %cst_61 = arith.constant dense<0.000000e+00> : vector<8x128xf32>
    %221 = tpu.matmul %200, %7, %cst_61 {dimension_numbers = #tpu.dot_dimension_numbers<[1], [0], [0], [1], [0, 0, 1, 1], [], []>} : vector<8x128xf32>, vector<128x128xf32>, vector<8x128xf32> -> vector<8x128xf32>
    %222 = arith.addf %221, %13 : vector<8x128xf32>
    %223 = vector.extract_strided_slice %204 {offsets = [0, 256], sizes = [8, 128], strides = [1, 1]} : vector<8x384xf32> to vector<8x128xf32>
    %224 = arith.mulf %213, %222 : vector<8x128xf32>
    %225 = arith.addf %223, %224 : vector<8x128xf32>
    %226 = math.tanh %225 : vector<8x128xf32>
    %cst_62 = arith.constant 1.000000e+00 : f32
    %227 = vector.broadcast %cst_62 : f32 to vector<8x128xf32>
    %228 = arith.subf %227, %220 : vector<8x128xf32>
    %229 = arith.mulf %228, %226 : vector<8x128xf32>
    %230 = arith.mulf %220, %200 : vector<8x128xf32>
    %231 = arith.addf %229, %230 : vector<8x128xf32>
    %232 = vector.extract_strided_slice %3 {offsets = [0, 7, 0], sizes = [8, 1, 16], strides = [1, 1, 1]} : vector<8x8x16xf32> to vector<8x1x16xf32>
    %233 = vector.shape_cast %232 : vector<8x1x16xf32> to vector<8x16xf32>
    %cst_63 = arith.constant dense<0.000000e+00> : vector<8x384xf32>
    %234 = tpu.matmul %233, %4, %cst_63 {dimension_numbers = #tpu.dot_dimension_numbers<[1], [0], [0], [1], [0, 0, 1, 1], [], []>} : vector<8x16xf32>, vector<16x384xf32>, vector<8x384xf32> -> vector<8x384xf32>
    %235 = arith.addf %234, %10 : vector<8x384xf32>
    %cst_64 = arith.constant dense<0.000000e+00> : vector<8x128xf32>
    %236 = tpu.matmul %231, %5, %cst_64 {dimension_numbers = #tpu.dot_dimension_numbers<[1], [0], [0], [1], [0, 0, 1, 1], [], []>} : vector<8x128xf32>, vector<128x128xf32>, vector<8x128xf32> -> vector<8x128xf32>
    %cst_65 = arith.constant dense<0.000000e+00> : vector<8x128xf32>
    %237 = tpu.matmul %231, %6, %cst_65 {dimension_numbers = #tpu.dot_dimension_numbers<[1], [0], [0], [1], [0, 0, 1, 1], [], []>} : vector<8x128xf32>, vector<128x128xf32>, vector<8x128xf32> -> vector<8x128xf32>
    %238 = vector.extract_strided_slice %235 {offsets = [0, 0], sizes = [8, 128], strides = [1, 1]} : vector<8x384xf32> to vector<8x128xf32>
    %239 = arith.addf %238, %236 : vector<8x128xf32>
    %240 = arith.negf %239 : vector<8x128xf32>
    %241 = math.exp %240 : vector<8x128xf32>
    %cst_66 = arith.constant 1.000000e+00 : f32
    %242 = vector.broadcast %cst_66 : f32 to vector<8x128xf32>
    %243 = arith.addf %242, %241 : vector<8x128xf32>
    %244 = arith.divf %242, %243 : vector<8x128xf32>
    %245 = vector.extract_strided_slice %235 {offsets = [0, 128], sizes = [8, 128], strides = [1, 1]} : vector<8x384xf32> to vector<8x128xf32>
    %246 = arith.addf %245, %237 : vector<8x128xf32>
    %247 = arith.negf %246 : vector<8x128xf32>
    %248 = math.exp %247 : vector<8x128xf32>
    %cst_67 = arith.constant 1.000000e+00 : f32
    %249 = vector.broadcast %cst_67 : f32 to vector<8x128xf32>
    %250 = arith.addf %249, %248 : vector<8x128xf32>
    %251 = arith.divf %249, %250 : vector<8x128xf32>
    %cst_68 = arith.constant dense<0.000000e+00> : vector<8x128xf32>
    %252 = tpu.matmul %231, %7, %cst_68 {dimension_numbers = #tpu.dot_dimension_numbers<[1], [0], [0], [1], [0, 0, 1, 1], [], []>} : vector<8x128xf32>, vector<128x128xf32>, vector<8x128xf32> -> vector<8x128xf32>
    %253 = arith.addf %252, %13 : vector<8x128xf32>
    %254 = vector.extract_strided_slice %235 {offsets = [0, 256], sizes = [8, 128], strides = [1, 1]} : vector<8x384xf32> to vector<8x128xf32>
    %255 = arith.mulf %244, %253 : vector<8x128xf32>
    %256 = arith.addf %254, %255 : vector<8x128xf32>
    %257 = math.tanh %256 : vector<8x128xf32>
    %cst_69 = arith.constant 1.000000e+00 : f32
    %258 = vector.broadcast %cst_69 : f32 to vector<8x128xf32>
    %259 = arith.subf %258, %251 : vector<8x128xf32>
    %260 = arith.mulf %259, %257 : vector<8x128xf32>
    %261 = arith.mulf %251, %231 : vector<8x128xf32>
    %262 = arith.addf %260, %261 : vector<8x128xf32>
    %c0_70 = arith.constant 0 : index
    %c0_71 = arith.constant 0 : index
    %263 = vector.load %arg10[%c0_70, %c0_71] : memref<8x128xf32, #tpu.memory_space<vmem>>, vector<8x128xf32>
    tpu.vector_store %arg10[%c0_70, %c0_71], %262 {strides = array<i32>} : memref<8x128xf32, #tpu.memory_space<vmem>>, vector<8x128xf32>,
    %c0_i32_72 = arith.constant 0 : i32
    %264 = arith.cmpi eq, %arg1, %c0_i32_72 : i32
    %265 = arith.extui %264 : i1 to i32
    %c0_i32_73 = arith.constant 0 : i32
    %266 = arith.cmpi ne, %265, %c0_i32_73 : i32
    scf.if %266 {
      %c0_74 = arith.constant 0 : index
      %c0_75 = arith.constant 0 : index
      %267 = vector.load %arg7[%c0_74, %c0_75] : memref<128x128xf32, #tpu.memory_space<vmem>>, vector<128x128xf32>
      %cst_76 = arith.constant dense<0.000000e+00> : vector<8x128xf32>
      %268 = tpu.matmul %262, %267, %cst_76 {dimension_numbers = #tpu.dot_dimension_numbers<[1], [0], [0], [1], [0, 0, 1, 1], [], []>} : vector<8x128xf32>, vector<128x128xf32>, vector<8x128xf32> -> vector<8x128xf32>
      %c0_77 = arith.constant 0 : index
      %c0_78 = arith.constant 0 : index
      %269 = vector.load %arg8[%c0_77, %c0_78] : memref<1x128xf32, #tpu.memory_space<vmem>>, vector<1x128xf32>
      %270 = vector.broadcast %269 : vector<1x128xf32> to vector<8x128xf32>
      %271 = arith.addf %268, %270 : vector<8x128xf32>
      %c0_79 = arith.constant 0 : index
      %c0_80 = arith.constant 0 : index
      %272 = vector.load %arg9[%c0_79, %c0_80] : memref<8x128xf32, #tpu.memory_space<vmem>>, vector<8x128xf32>
      tpu.vector_store %arg9[%c0_79, %c0_80], %271 {strides = array<i32>} : memref<8x128xf32, #tpu.memory_space<vmem>>, vector<8x128xf32>,
    } else {
    }
    return
  }
  func.func @transform_0(%arg0: i32, %arg1: i32) -> (i32, i32, i32) {
    %c0_i32 = arith.constant 0 : i32
    %c0_i32_0 = arith.constant 0 : i32
    return %arg0, %arg1, %c0_i32 : i32, i32, i32
  }
  func.func @transform_1(%arg0: i32, %arg1: i32) -> (i32, i32) {
    %c0_i32 = arith.constant 0 : i32
    %c0_i32_0 = arith.constant 0 : i32
    %c0_i32_1 = arith.constant 0 : i32
    return %c0_i32, %c0_i32_0 : i32, i32
  }
  func.func @transform_2(%arg0: i32, %arg1: i32) -> (i32, i32) {
    %c0_i32 = arith.constant 0 : i32
    %c0_i32_0 = arith.constant 0 : i32
    %c0_i32_1 = arith.constant 0 : i32
    return %c0_i32, %c0_i32_0 : i32, i32
  }
  func.func @transform_3(%arg0: i32, %arg1: i32) -> (i32, i32) {
    %c0_i32 = arith.constant 0 : i32
    %c0_i32_0 = arith.constant 0 : i32
    %c0_i32_1 = arith.constant 0 : i32
    return %c0_i32, %c0_i32_0 : i32, i32
  }
  func.func @transform_4(%arg0: i32, %arg1: i32) -> (i32, i32) {
    %c0_i32 = arith.constant 0 : i32
    %c0_i32_0 = arith.constant 0 : i32
    %c0_i32_1 = arith.constant 0 : i32
    return %c0_i32, %c0_i32_0 : i32, i32
  }
  func.func @transform_5(%arg0: i32, %arg1: i32) -> (i32, i32) {
    %c0_i32 = arith.constant 0 : i32
    %c0_i32_0 = arith.constant 0 : i32
    %c0_i32_1 = arith.constant 0 : i32
    return %c0_i32, %c0_i32_0 : i32, i32
  }
  func.func @transform_6(%arg0: i32, %arg1: i32) -> (i32, i32) {
    %c0_i32 = arith.constant 0 : i32
    %c0_i32_0 = arith.constant 0 : i32
    %c0_i32_1 = arith.constant 0 : i32
    return %c0_i32, %c0_i32_0 : i32, i32
  }
  func.func @transform_7(%arg0: i32, %arg1: i32) -> (i32, i32) {
    %c0_i32 = arith.constant 0 : i32
    %c0_i32_0 = arith.constant 0 : i32
    return %arg0, %c0_i32 : i32, i32
  }
}

</mosaic_0001>

<llo_original>
// kernel: gru_forward_packed.1
$region0: #{gru_forward_packed.1}
  #allocation0 [shape = 'u32[]', space=smem, size = 0x4, offset = 0x4, fixed_abs, tag = 'smem constant byte address 0x4 - core index']
  #allocation1 [shape = 'u32[144,128]{1,0:T(1,128)}', space=vmem, size = 0x12000, scoped, tag = 'internal scratch']
  #allocation2 [shape = 'f32[8,128]{1,0:T(8,128)}', space=vmem, size = 0x1000, scoped, tag = 'scratch operand']
  %s0 = inlined_call_operand.vmem [shape: f32[8,8,16], index: 0, kind: input, shape index: {}]
  %s1 = inlined_call_operand.vmem [shape: f32[16,384], index: 1, kind: input, shape index: {}]
  %s2 = inlined_call_operand.vmem [shape: f32[1,384], index: 2, kind: input, shape index: {}]
  %s3 = inlined_call_operand.hbm [shape: f32[128,384], index: 3, kind: input, shape index: {}]
  %s4 = inlined_call_operand.vmem [shape: f32[1,128], index: 4, kind: input, shape index: {}]
  %s5 = inlined_call_operand.hbm [shape: f32[128,128], index: 5, kind: input, shape index: {}]
  %s6 = inlined_call_operand.vmem [shape: f32[1,128], index: 6, kind: input, shape index: {}]
  %s7 = inlined_call_operand.hbm [shape: f32[8,128], index: 7, kind: output, shape index: {}]
  %s8 = sld [smem:[#allocation0]]
  $region54: #{gru_forward_packed.1} parent=0
    _
  %s10 = ssub.s32 1, %s8
  %s11 = scalar_select 0, %s10, %s8
  $region1: #{gru_forward_packed.1} parent=0
    #allocation3 [shape = 'u8[196608]{0}', space=vmem, size = 0x30000, scoped, tag = 'input window, operand 3, single buffered']
    #allocation4 [shape = 's32[1]{0}', space=sflag, size = 0x4, scoped, tag = 'scoped memory for gru_forward_packed.1']
    #allocation5 [shape = 's32[1]{0}', space=sflag, size = 0x4, scoped, tag = 'scoped memory for gru_forward_packed.1']
    #allocation6 [shape = 'u8[65536]{0}', space=vmem, size = 0x10000, scoped, tag = 'input window, operand 5, single buffered']
    #allocation7 [shape = 's32[1]{0}', space=sflag, size = 0x4, scoped, tag = 'scoped memory for gru_forward_packed.1']
    #allocation8 [shape = 'u8[4096]{0}', space=vmem, size = 0x1000, scoped, tag = 'output window, operand 0, single buffered']
    %12 = vsyncpa [#allocation4], 0
    %13 = vsyncpa [#allocation7], 0
    %14 = vsyncpa [#allocation5], 0
    // Predicated region
    $region2: #{gru_forward_packed.1} parent=1 // pred_check
      _
    $region3: #{gru_forward_packed.1} parent=1 // pred_check_branch
      %16 = sbr.rel (0) target = $region5
    $region4: #{gru_forward_packed.1} parent=1 // pred_region
      _
    $region5: #{gru_forward_packed.1} parent=1 // pred_fallthru
      _
    // Predicated region
    $region6: #{gru_forward_packed.1} parent=1 // pred_check
      _
    $region7: #{gru_forward_packed.1} parent=1 // pred_check_branch
      %18 = sbr.rel (0) target = $region9
    $region8: #{gru_forward_packed.1} parent=1 // pred_region
      _
    $region9: #{gru_forward_packed.1} parent=1 // pred_fallthru
      _
    // Predicated region
    $region10: #{gru_forward_packed.1} parent=1 // pred_check
      _
    $region11: #{gru_forward_packed.1} parent=1 // pred_check_branch
      %20 = sbr.rel (0) target = $region13
    $region12: #{gru_forward_packed.1} parent=1 // pred_region
      _
    $region13: #{gru_forward_packed.1} parent=1 // pred_fallthru
      _
    // Predicated region
    $region14: #{gru_forward_packed.1} parent=1 // pred_check
      _
    $region15: #{gru_forward_packed.1} parent=1 // pred_check_branch
      %22 = sbr.rel (0) target = $region17
    $region16: #{gru_forward_packed.1} parent=1 // pred_region
      %s24 = ssub.s32 6144, 6144
      %25 = vsyncadd [#allocation4], %s24
      %s26 = sshll.u32 [#allocation3], 4
      %s27 = int_to_ptr.vmem [resolvable:$true] %s26
      %32 = dma.hbm_to_vmem [thread:$0]  %s3, 6144, %s27, [#allocation4], 384, 384, 24
    $region17: #{gru_forward_packed.1} parent=1 // pred_fallthru
      _
    // Predicated region
    $region18: #{gru_forward_packed.1} parent=1 // pred_check
      _
    $region19: #{gru_forward_packed.1} parent=1 // pred_check_branch
      %34 = sbr.rel (0) target = $region21
    $region20: #{gru_forward_packed.1} parent=1 // pred_region
      _
    $region21: #{gru_forward_packed.1} parent=1 // pred_fallthru
      _
    // Predicated region
    $region22: #{gru_forward_packed.1} parent=1 // pred_check
      _
    $region23: #{gru_forward_packed.1} parent=1 // pred_check_branch
      %36 = sbr.rel (0) target = $region25
    $region24: #{gru_forward_packed.1} parent=1 // pred_region
      %s38 = ssub.s32 2048, 2048
      %39 = vsyncadd [#allocation7], %s38
      %s40 = sshll.u32 [#allocation6], 4
      %s41 = int_to_ptr.vmem [resolvable:$true] %s40
      %46 = dma.hbm_to_vmem [thread:$0]  %s5, 2048, %s41, [#allocation7], 128, 128, 8
    $region25: #{gru_forward_packed.1} parent=1 // pred_fallthru
      _
    // Predicated region
    $region26: #{gru_forward_packed.1} parent=1 // pred_check
      _
    $region27: #{gru_forward_packed.1} parent=1 // pred_check_branch
      %48 = sbr.rel (0) target = $region29
    $region28: #{gru_forward_packed.1} parent=1 // pred_region
      _
    $region29: #{gru_forward_packed.1} parent=1 // pred_fallthru
      _
    // Predicated region
    $region30: #{gru_forward_packed.1} parent=1 // pred_check
      _
    $region31: #{gru_forward_packed.1} parent=1 // pred_check_branch
      %50 = sbr.rel (0) target = $region33
    $region32: #{gru_forward_packed.1} parent=1 // pred_region
      %51 = dma.done [#allocation4], 6144
    $region33: #{gru_forward_packed.1} parent=1 // pred_fallthru
      _
    // Predicated region
    $region34: #{gru_forward_packed.1} parent=1 // pred_check
      _
    $region35: #{gru_forward_packed.1} parent=1 // pred_check_branch
      %53 = sbr.rel (0) target = $region37
    $region36: #{gru_forward_packed.1} parent=1 // pred_region
      %54 = dma.done [#allocation7], 2048
    $region37: #{gru_forward_packed.1} parent=1 // pred_fallthru
      _
    %p55 = scmp.eq.s32.totalorder 0, 0
    // Predicated region
    $region38: #{gru_forward_packed.1} parent=1 // pred_check
      %p56 = pneg %p55
    $region39: #{gru_forward_packed.1} parent=1 // pred_check_branch
      %58 = sbr.rel (%p56) target = $region41
    $region40: #{gru_forward_packed.1} parent=1 // pred_region
      %59 = vst [vmem:[#allocation2] sm:$0xff] 0.0
    $region41: #{gru_forward_packed.1} parent=1 // pred_fallthru
      _
    %v60 = vld [vmem:[%s0] sm:$0xff]
    %v61 = vld [vmem:[%s0 + $0x8] sm:$0xff]
    %v62 = vld [vmem:[%s0 + $0x10] sm:$0xff]
    %v63 = vld [vmem:[%s0 + $0x18] sm:$0xff]
    %v64 = vld [vmem:[%s0 + $0x20] sm:$0xff]
    %v65 = vld [vmem:[%s0 + $0x28] sm:$0xff]
    %v66 = vld [vmem:[%s0 + $0x30] sm:$0xff]
    %v67 = vld [vmem:[%s0 + $0x38] sm:$0xff]
    %v68 = vld [vmem:[%s1] sm:$0xff]
    %v69 = vld [vmem:[%s1 + $0x8] sm:$0xff]
    %v70 = vld [vmem:[%s1 + $0x10] sm:$0xff]
    %v71 = vld [vmem:[%s1 + $0x18] sm:$0xff]
    %v72 = vld [vmem:[%s1 + $0x20] sm:$0xff]
    %v73 = vld [vmem:[%s1 + $0x28] sm:$0xff]
    %v74 = vld [vmem:[#allocation3] sm:$0xff]
    %v75 = vld [vmem:[#allocation3 + $0x18] sm:$0xff]
    %v76 = vld [vmem:[#allocation3 + $0x30] sm:$0xff]
    %v77 = vld [vmem:[#allocation3 + $0x48] sm:$0xff]
    %v78 = vld [vmem:[#allocation3 + $0x60] sm:$0xff]
    %v79 = vld [vmem:[#allocation3 + $0x78] sm:$0xff]
    %v80 = vld [vmem:[#allocation3 + $0x90] sm:$0xff]
    %v81 = vld [vmem:[#allocation3 + $0xa8] sm:$0xff]
    %v82 = vld [vmem:[#allocation3 + $0xc0] sm:$0xff]
    %v83 = vld [vmem:[#allocation3 + $0xd8] sm:$0xff]
    %v84 = vld [vmem:[#allocation3 + $0xf0] sm:$0xff]
    %v85 = vld [vmem:[#allocation3 + $0x108] sm:$0xff]
    %v86 = vld [vmem:[#allocation3 + $0x120] sm:$0xff]
    %v87 = vld [vmem:[#allocation3 + $0x138] sm:$0xff]
    %v88 = vld [vmem:[#allocation3 + $0x150] sm:$0xff]
    %v89 = vld [vmem:[#allocation3 + $0x168] sm:$0xff]
    %v90 = vld [vmem:[#allocation3 + $0x8] sm:$0xff]
    %v91 = vld [vmem:[#allocation3 + $0x20] sm:$0xff]
    %v92 = vld [vmem:[#allocation3 + $0x38] sm:$0xff]
    %v93 = vld [vmem:[#allocation3 + $0x50] sm:$0xff]
    %v94 = vld [vmem:[#allocation3 + $0x68] sm:$0xff]
    %v95 = vld [vmem:[#allocation3 + $0x80] sm:$0xff]
    %v96 = vld [vmem:[#allocation3 + $0x98] sm:$0xff]
    %v97 = vld [vmem:[#allocation3 + $0xb0] sm:$0xff]
    %v98 = vld [vmem:[#allocation3 + $0xc8] sm:$0xff]
    %v99 = vld [vmem:[#allocation3 + $0xe0] sm:$0xff]
    %v100 = vld [vmem:[#allocation3 + $0xf8] sm:$0xff]
    %v101 = vld [vmem:[#allocation3 + $0x110] sm:$0xff]
    %v102 = vld [vmem:[#allocation3 + $0x128] sm:$0xff]
    %v103 = vld [vmem:[#allocation3 + $0x140] sm:$0xff]
    %v104 = vld [vmem:[#allocation3 + $0x158] sm:$0xff]
    %v105 = vld [vmem:[#allocation3 + $0x170] sm:$0xff]
    %v106 = vld [vmem:[#allocation3 + $0x10] sm:$0xff]
    %v107 = vld [vmem:[#allocation3 + $0x28] sm:$0xff]
    %v108 = vld [vmem:[#allocation3 + $0x40] sm:$0xff]
    %v109 = vld [vmem:[#allocation3 + $0x58] sm:$0xff]
    %v110 = vld [vmem:[#allocation3 + $0x70] sm:$0xff]
    %v111 = vld [vmem:[#allocation3 + $0x88] sm:$0xff]
    %v112 = vld [vmem:[#allocation3 + $0xa0] sm:$0xff]
    %v113 = vld [vmem:[#allocation3 + $0xb8] sm:$0xff]
    %v114 = vld [vmem:[#allocation3 + $0xd0] sm:$0xff]
    %v115 = vld [vmem:[#allocation3 + $0xe8] sm:$0xff]
    %v116 = vld [vmem:[#allocation3 + $0x100] sm:$0xff]
    %v117 = vld [vmem:[#allocation3 + $0x118] sm:$0xff]
    %v118 = vld [vmem:[#allocation3 + $0x130] sm:$0xff]
    %v119 = vld [vmem:[#allocation3 + $0x148] sm:$0xff]
    %v120 = vld [vmem:[#allocation3 + $0x160] sm:$0xff]
    %v121 = vld [vmem:[#allocation3 + $0x178] sm:$0xff]
    %v122 = vld [vmem:[%s2] sm:$0x7]
    %v124 = vlaneseq
    %v125 = vshrl.u32 %v124, 7
    %v126 = vsub.s32 0, %v125
    %v127 = vrot.slane %v122, %v126
    %v128 = vlaneseq
    %v129 = vshrl.u32 %v128, 7
    %v130 = vsub.s32 1, %v129
    %v131 = vrot.slane %v122, %v130
    %v132 = vlaneseq
    %v133 = vshrl.u32 %v132, 7
    %v134 = vsub.s32 2, %v133
    %v135 = vrot.slane %v122, %v134
    %v139 = vld [vmem:[%s4] sm:$0x1]
    %v141 = vlaneseq
    %v142 = vshrl.u32 %v141, 7
    %v143 = vsub.s32 0, %v142
    %v144 = vrot.slane %v139, %v143
    %v146 = vld [vmem:[#allocation2] sm:$0xff]
    %v155 = vrot.slane %v61, 7
    %vm156 = vcmask 1041409
    %v157 = vsel %vm156, %v155, %v60
    %v158 = vrot.slane %v62, 6
    %vm159 = vcmask 1042434
    %v160 = vsel %vm159, %v158, %v157
    %v161 = vrot.slane %v63, 5
    %vm162 = vcmask 1043459
    %v163 = vsel %vm162, %v161, %v160
    %v164 = vrot.slane %v64, 4
    %vm165 = vcmask 1044484
    %v166 = vsel %vm165, %v164, %v163
    %v167 = vrot.slane %v65, 3
    %vm168 = vcmask 1045509
    %v169 = vsel %vm168, %v167, %v166
    %v170 = vrot.slane %v66, 2
    %vm171 = vcmask 1046534
    %v172 = vsel %vm171, %v170, %v169
    %v173 = vrot.slane %v67, 1
    %vm174 = vcmask 1047559
    %v175 = vsel %vm174, %v173, %v172
    %vm176 = vcmask 130048
    %v177 = vsel %vm176, %v175, 0
    %179 = vmatprep.subr.mxu0 %v69
    %180 = vmatpush1.msra.mxu0 %v68
    %181 = vmatprep.subr.mxu0 %v72
    %182 = vmatpush1.msra.mxu0 %v71
    %183 = vmatprep.subr.mxu0 0.0
    %184 = vmatpush1.msra.mxu0 0.0
    %185 = vmatprep.subr.mxu0 0.0
    %186 = vmatpush1.msra.mxu0 0.0
    %187 = vmatprep.subr.mxu0 0.0
    %188 = vmatpush1.msra.mxu0 0.0
    %189 = vmatprep.subr.mxu0 0.0
    %190 = vmatpush1.msra.mxu0 0.0
    %191 = vmatprep.subr.mxu0 0.0
    %192 = vmatpush1.msra.mxu0 0.0
    %193 = vmatprep.subr.mxu0 0.0
    %194 = vmatpush1.msra.mxu0 0.0
    %195 = vmatprep.subr.mxu0 0.0
    %196 = vmatpush1.msra.mxu0 0.0
    %197 = vmatprep.subr.mxu0 0.0
    %198 = vmatpush1.msra.mxu0 0.0
    %199 = vmatprep.subr.mxu0 0.0
    %200 = vmatpush1.msra.mxu0 0.0
    %201 = vmatprep.subr.mxu0 0.0
    %202 = vmatpush1.msra.mxu0 0.0
    %203 = vmatprep.subr.mxu0 0.0
    %204 = vmatpush1.msra.mxu0 0.0
    %205 = vmatprep.subr.mxu0 0.0
    %206 = vmatpush1.msra.mxu0 0.0
    %207 = vmatprep.subr.mxu0 0.0
    %208 = vmatpush1.msra.mxu0 0.0
    %209 = vmatprep.subr.mxu0 0.0
    %210 = vmatpush1.msra.mxu0 0.0
    %211 = vmatprep.subr.mxu0 0.0
    %212 = vmatpush1.msra.mxu0 0.0
    %213 = vmatprep.subr.mxu0 0.0
    %214 = vmatpush1.msra.mxu0 0.0
    %215 = vmatprep.subr.mxu0 0.0
    %216 = vmatpush1.msra.mxu0 0.0
    %217 = vmatprep.subr.mxu0 0.0
    %218 = vmatpush1.msra.mxu0 0.0
    %219 = vmatprep.subr.mxu0 0.0
    %220 = vmatpush1.msra.mxu0 0.0
    %221 = vmatprep.subr.mxu0 0.0
    %222 = vmatpush1.msra.mxu0 0.0
    %223 = vmatprep.subr.mxu0 0.0
    %224 = vmatpush1.msra.mxu0 0.0
    %225 = vmatprep.subr.mxu0 0.0
    %226 = vmatpush1.msra.mxu0 0.0
    %227 = vmatprep.subr.mxu0 0.0
    %228 = vmatpush1.msra.mxu0 0.0
    %229 = vmatprep.subr.mxu0 0.0
    %230 = vmatpush1.msra.mxu0 0.0
    %231 = vmatprep.subr.mxu0 0.0
    %232 = vmatpush1.msra.mxu0 0.0
    %233 = vmatprep.subr.mxu0 0.0
    %234 = vmatpush1.msra.mxu0 0.0
    %235 = vmatprep.subr.mxu0 0.0
    %236 = vmatpush1.msra.mxu0 0.0
    %237 = vmatprep.subr.mxu0 0.0
    %238 = vmatpush1.msra.mxu0 0.0
    %239 = vmatprep.subr.mxu0 0.0
    %240 = vmatpush1.msra.mxu0 0.0
    %241 = vmatprep.subr.mxu0 0.0
    %242 = vmatpush1.msra.mxu0 0.0
    %243 = vmatprep.mubr.f32.mxu0 0.0
    %244 = vmatmul.mubr.f32.gmra.mrb[0].mxu0 %v177
    %v245 = vpop.f32.mrb[0].mxu0
    %v246 = vadd.f32 %v127, %v245
    %v247 = vpop.f32.mrb[0].mxu0
    %v248 = vadd.f32 %v131, %v247
    %249 = vdwg.mxu0
    %250 = vmatprep.subr.mxu0 0.0
    %251 = vmatpush1.msra.mxu0 %v70
    %252 = vmatprep.subr.mxu0 0.0
    %253 = vmatpush1.msra.mxu0 %v73
    %254 = vmatprep.subr.mxu0 0.0
    %255 = vmatpush1.msra.mxu0 0.0
    %256 = vmatprep.subr.mxu0 0.0
    %257 = vmatpush1.msra.mxu0 0.0
    %258 = vmatprep.subr.mxu0 0.0
    %259 = vmatpush1.msra.mxu0 0.0
    %260 = vmatprep.subr.mxu0 0.0
    %261 = vmatpush1.msra.mxu0 0.0
    %262 = vmatprep.subr.mxu0 0.0
    %263 = vmatpush1.msra.mxu0 0.0
    %264 = vmatprep.subr.mxu0 0.0
    %265 = vmatpush1.msra.mxu0 0.0
    %266 = vmatprep.subr.mxu0 0.0
    %267 = vmatpush1.msra.mxu0 0.0
    %268 = vmatprep.subr.mxu0 0.0
    %269 = vmatpush1.msra.mxu0 0.0
    %270 = vmatprep.subr.mxu0 0.0
    %271 = vmatpush1.msra.mxu0 0.0
    %272 = vmatprep.subr.mxu0 0.0
    %273 = vmatpush1.msra.mxu0 0.0
    %274 = vmatprep.subr.mxu0 0.0
    %275 = vmatpush1.msra.mxu0 0.0
    %276 = vmatprep.subr.mxu0 0.0
    %277 = vmatpush1.msra.mxu0 0.0
    %278 = vmatprep.subr.mxu0 0.0
    %279 = vmatpush1.msra.mxu0 0.0
    %280 = vmatprep.subr.mxu0 0.0
    %281 = vmatpush1.msra.mxu0 0.0
    %282 = vmatprep.subr.mxu0 0.0
    %283 = vmatpush1.msra.mxu0 0.0
    %284 = vmatprep.subr.mxu0 0.0
    %285 = vmatpush1.msra.mxu0 0.0
    %286 = vmatprep.subr.mxu0 0.0
    %287 = vmatpush1.msra.mxu0 0.0
    %288 = vmatprep.subr.mxu0 0.0
    %289 = vmatpush1.msra.mxu0 0.0
    %290 = vmatprep.subr.mxu0 0.0
    %291 = vmatpush1.msra.mxu0 0.0
    %292 = vmatprep.subr.mxu0 0.0
    %293 = vmatpush1.msra.mxu0 0.0
    %294 = vmatprep.subr.mxu0 0.0
    %295 = vmatpush1.msra.mxu0 0.0
    %296 = vmatprep.subr.mxu0 0.0
    %297 = vmatpush1.msra.mxu0 0.0
    %298 = vmatprep.subr.mxu0 0.0
    %299 = vmatpush1.msra.mxu0 0.0
    %300 = vmatprep.subr.mxu0 0.0
    %301 = vmatpush1.msra.mxu0 0.0
    %302 = vmatprep.subr.mxu0 0.0
    %303 = vmatpush1.msra.mxu0 0.0
    %304 = vmatprep.subr.mxu0 0.0
    %305 = vmatpush1.msra.mxu0 0.0
    %306 = vmatprep.subr.mxu0 0.0
    %307 = vmatpush1.msra.mxu0 0.0
    %308 = vmatprep.subr.mxu0 0.0
    %309 = vmatpush1.msra.mxu0 0.0
    %310 = vmatprep.subr.mxu0 0.0
    %311 = vmatpush1.msra.mxu0 0.0
    %312 = vmatprep.subr.mxu0 0.0
    %313 = vmatpush1.msra.mxu0 0.0
    %314 = vmatprep.mubr.f32.mxu0 0.0
    %315 = vmatmul.mubr.f32.gmra.mrb[0].mxu0 %v177
    %v316 = vpop.f32.mrb[0].mxu0
    %v317 = vadd.f32 %v135, %v316
    %v318 = vpop.f32.mrb[0].mxu0
    %319 = vdwg.mxu0
    %320 = vmatprep.subr.mxu0 0.0
    %321 = vmatpush1.msra.mxu0 %v74
    %322 = vmatprep.subr.mxu0 0.0
    %323 = vmatpush1.msra.mxu0 %v75
    %324 = vmatprep.subr.mxu0 0.0
    %325 = vmatpush1.msra.mxu0 %v76
    %326 = vmatprep.subr.mxu0 0.0
    %327 = vmatpush1.msra.mxu0 %v77
    %328 = vmatprep.subr.mxu0 0.0
    %329 = vmatpush1.msra.mxu0 %v78
    %330 = vmatprep.subr.mxu0 0.0
    %331 = vmatpush1.msra.mxu0 %v79
    %332 = vmatprep.subr.mxu0 0.0
    %333 = vmatpush1.msra.mxu0 %v80
    %334 = vmatprep.subr.mxu0 0.0
    %335 = vmatpush1.msra.mxu0 %v81
    %336 = vmatprep.subr.mxu0 0.0
    %337 = vmatpush1.msra.mxu0 %v82
    %338 = vmatprep.subr.mxu0 0.0
    %339 = vmatpush1.msra.mxu0 %v83
    %340 = vmatprep.subr.mxu0 0.0
    %341 = vmatpush1.msra.mxu0 %v84
    %342 = vmatprep.subr.mxu0 0.0
    %343 = vmatpush1.msra.mxu0 %v85
    %344 = vmatprep.subr.mxu0 0.0
    %345 = vmatpush1.msra.mxu0 %v86
    %346 = vmatprep.subr.mxu0 0.0
    %347 = vmatpush1.msra.mxu0 %v87
    %348 = vmatprep.subr.mxu0 0.0
    %349 = vmatpush1.msra.mxu0 %v88
    %350 = vmatprep.subr.mxu0 0.0
    %351 = vmatpush1.msra.mxu0 %v89
    %352 = vmatprep.subr.mxu0 0.0
    %353 = vmatpush1.msra.mxu0 0.0
    %354 = vmatprep.subr.mxu0 0.0
    %355 = vmatpush1.msra.mxu0 0.0
    %356 = vmatprep.subr.mxu0 0.0
    %357 = vmatpush1.msra.mxu0 0.0
    %358 = vmatprep.subr.mxu0 0.0
    %359 = vmatpush1.msra.mxu0 0.0
    %360 = vmatprep.subr.mxu0 0.0
    %361 = vmatpush1.msra.mxu0 0.0
    %362 = vmatprep.subr.mxu0 0.0
    %363 = vmatpush1.msra.mxu0 0.0
    %364 = vmatprep.subr.mxu0 0.0
    %365 = vmatpush1.msra.mxu0 0.0
    %366 = vmatprep.subr.mxu0 0.0
    %367 = vmatpush1.msra.mxu0 0.0
    %368 = vmatprep.subr.mxu0 0.0
    %369 = vmatpush1.msra.mxu0 0.0
    %370 = vmatprep.subr.mxu0 0.0
    %371 = vmatpush1.msra.mxu0 0.0
    %372 = vmatprep.subr.mxu0 0.0
    %373 = vmatpush1.msra.mxu0 0.0
    %374 = vmatprep.subr.mxu0 0.0
    %375 = vmatpush1.msra.mxu0 0.0
    %376 = vmatprep.subr.mxu0 0.0
    %377 = vmatpush1.msra.mxu0 0.0
    %378 = vmatprep.subr.mxu0 0.0
    %379 = vmatpush1.msra.mxu0 0.0
    %380 = vmatprep.subr.mxu0 0.0
    %381 = vmatpush1.msra.mxu0 0.0
    %382 = vmatprep.subr.mxu0 0.0
    %383 = vmatpush1.msra.mxu0 0.0
    %384 = vmatprep.mubr.f32.mxu0 0.0
    %385 = vmatmul.mubr.f32.gmra.mrb[0].mxu0 %v146
    %v386 = vpop.f32.mrb[0].mxu0
    %v387 = vadd.f32 0.0, %v386
    %v388 = vpop.f32.mrb[0].mxu0
    %389 = vdwg.mxu0
    %390 = vmatprep.subr.mxu0 0.0
    %391 = vmatpush1.msra.mxu0 %v90
    %392 = vmatprep.subr.mxu0 0.0
    %393 = vmatpush1.msra.mxu0 %v91
    %394 = vmatprep.subr.mxu0 0.0
    %395 = vmatpush1.msra.mxu0 %v92
    %396 = vmatprep.subr.mxu0 0.0
    %397 = vmatpush1.msra.mxu0 %v93
    %398 = vmatprep.subr.mxu0 0.0
    %399 = vmatpush1.msra.mxu0 %v94
    %400 = vmatprep.subr.mxu0 0.0
    %401 = vmatpush1.msra.mxu0 %v95
    %402 = vmatprep.subr.mxu0 0.0
    %403 = vmatpush1.msra.mxu0 %v96
    %404 = vmatprep.subr.mxu0 0.0
    %405 = vmatpush1.msra.mxu0 %v97
    %406 = vmatprep.subr.mxu0 0.0
    %407 = vmatpush1.msra.mxu0 %v98
    %408 = vmatprep.subr.mxu0 0.0
    %409 = vmatpush1.msra.mxu0 %v99
    %410 = vmatprep.subr.mxu0 0.0
    %411 = vmatpush1.msra.mxu0 %v100
    %412 = vmatprep.subr.mxu0 0.0
    %413 = vmatpush1.msra.mxu0 %v101
    %414 = vmatprep.subr.mxu0 0.0
    %415 = vmatpush1.msra.mxu0 %v102
    %416 = vmatprep.subr.mxu0 0.0
    %417 = vmatpush1.msra.mxu0 %v103
    %418 = vmatprep.subr.mxu0 0.0
    %419 = vmatpush1.msra.mxu0 %v104
    %420 = vmatprep.subr.mxu0 0.0
    %421 = vmatpush1.msra.mxu0 %v105
    %422 = vmatprep.subr.mxu0 0.0
    %423 = vmatpush1.msra.mxu0 0.0
    %424 = vmatprep.subr.mxu0 0.0
    %425 = vmatpush1.msra.mxu0 0.0
    %426 = vmatprep.subr.mxu0 0.0
    %427 = vmatpush1.msra.mxu0 0.0
    %428 = vmatprep.subr.mxu0 0.0
    %429 = vmatpush1.msra.mxu0 0.0
    %430 = vmatprep.subr.mxu0 0.0
    %431 = vmatpush1.msra.mxu0 0.0
    %432 = vmatprep.subr.mxu0 0.0
    %433 = vmatpush1.msra.mxu0 0.0
    %434 = vmatprep.subr.mxu0 0.0
    %435 = vmatpush1.msra.mxu0 0.0
    %436 = vmatprep.subr.mxu0 0.0
    %437 = vmatpush1.msra.mxu0 0.0
    %438 = vmatprep.subr.mxu0 0.0
    %439 = vmatpush1.msra.mxu0 0.0
    %440 = vmatprep.subr.mxu0 0.0
    %441 = vmatpush1.msra.mxu0 0.0
    %442 = vmatprep.subr.mxu0 0.0
    %443 = vmatpush1.msra.mxu0 0.0
    %444 = vmatprep.subr.mxu0 0.0
    %445 = vmatpush1.msra.mxu0 0.0
    %446 = vmatprep.subr.mxu0 0.0
    %447 = vmatpush1.msra.mxu0 0.0
    %448 = vmatprep.subr.mxu0 0.0
    %449 = vmatpush1.msra.mxu0 0.0
    %450 = vmatprep.subr.mxu0 0.0
    %451 = vmatpush1.msra.mxu0 0.0
    %452 = vmatprep.subr.mxu0 0.0
    %453 = vmatpush1.msra.mxu0 0.0
    %454 = vmatprep.mubr.f32.mxu0 0.0
    %455 = vmatmul.mubr.f32.gmra.mrb[0].mxu0 %v146
    %v456 = vpop.f32.mrb[0].mxu0
    %v457 = vadd.f32 0.0, %v456
    %v458 = vpop.f32.mrb[0].mxu0
    %459 = vdwg.mxu0
    %v460 = vadd.f32 %v246, %v387
    %v461 = vxor.u32 %v460, 2147483648
    %v462 = vmul.f32 %v461, 1.442695
    %v463 = vpow.pop %v462
    %v464 = vadd.f32 %v463, 1.0
    %v465 = vrcp.pop %v464
    %v466 = vmul.f32 1.0, %v465
    %v467 = vadd.f32 %v248, %v457
    %v468 = vxor.u32 %v467, 2147483648
    %v469 = vmul.f32 %v468, 1.442695
    %v470 = vpow.pop %v469
    %v471 = vadd.f32 %v470, 1.0
    %v472 = vrcp.pop %v471
    %v473 = vmul.f32 1.0, %v472
    %474 = vmatprep.subr.mxu0 0.0
    %475 = vmatpush1.msra.mxu0 %v106
    %476 = vmatprep.subr.mxu0 0.0
    %477 = vmatpush1.msra.mxu0 %v107
    %478 = vmatprep.subr.mxu0 0.0
    %479 = vmatpush1.msra.mxu0 %v108
    %480 = vmatprep.subr.mxu0 0.0
    %481 = vmatpush1.msra.mxu0 %v109
    %482 = vmatprep.subr.mxu0 0.0
    %483 = vmatpush1.msra.mxu0 %v110
    %484 = vmatprep.subr.mxu0 0.0
    %485 = vmatpush1.msra.mxu0 %v111
    %486 = vmatprep.subr.mxu0 0.0
    %487 = vmatpush1.msra.mxu0 %v112
    %488 = vmatprep.subr.mxu0 0.0
    %489 = vmatpush1.msra.mxu0 %v113
    %490 = vmatprep.subr.mxu0 0.0
    %491 = vmatpush1.msra.mxu0 %v114
    %492 = vmatprep.subr.mxu0 0.0
    %493 = vmatpush1.msra.mxu0 %v115
    %494 = vmatprep.subr.mxu0 0.0
    %495 = vmatpush1.msra.mxu0 %v116
    %496 = vmatprep.subr.mxu0 0.0
    %497 = vmatpush1.msra.mxu0 %v117
    %498 = vmatprep.subr.mxu0 0.0
    %499 = vmatpush1.msra.mxu0 %v118
    %500 = vmatprep.subr.mxu0 0.0
    %501 = vmatpush1.msra.mxu0 %v119
    %502 = vmatprep.subr.mxu0 0.0
    %503 = vmatpush1.msra.mxu0 %v120
    %504 = vmatprep.subr.mxu0 0.0
    %505 = vmatpush1.msra.mxu0 %v121
    %506 = vmatprep.subr.mxu0 0.0
    %507 = vmatpush1.msra.mxu0 0.0
    %508 = vmatprep.subr.mxu0 0.0
    %509 = vmatpush1.msra.mxu0 0.0
    %510 = vmatprep.subr.mxu0 0.0
    %511 = vmatpush1.msra.mxu0 0.0
    %512 = vmatprep.subr.mxu0 0.0
    %513 = vmatpush1.msra.mxu0 0.0
    %514 = vmatprep.subr.mxu0 0.0
    %515 = vmatpush1.msra.mxu0 0.0
    %516 = vmatprep.subr.mxu0 0.0
    %517 = vmatpush1.msra.mxu0 0.0
    %518 = vmatprep.subr.mxu0 0.0
    %519 = vmatpush1.msra.mxu0 0.0
    %520 = vmatprep.subr.mxu0 0.0
    %521 = vmatpush1.msra.mxu0 0.0
    %522 = vmatprep.subr.mxu0 0.0
    %523 = vmatpush1.msra.mxu0 0.0
    %524 = vmatprep.subr.mxu0 0.0
    %525 = vmatpush1.msra.mxu0 0.0
    %526 = vmatprep.subr.mxu0 0.0
    %527 = vmatpush1.msra.mxu0 0.0
    %528 = vmatprep.subr.mxu0 0.0
    %529 = vmatpush1.msra.mxu0 0.0
    %530 = vmatprep.subr.mxu0 0.0
    %531 = vmatpush1.msra.mxu0 0.0
    %532 = vmatprep.subr.mxu0 0.0
    %533 = vmatpush1.msra.mxu0 0.0
    %534 = vmatprep.subr.mxu0 0.0
    %535 = vmatpush1.msra.mxu0 0.0
    %536 = vmatprep.subr.mxu0 0.0
    %537 = vmatpush1.msra.mxu0 0.0
    %538 = vmatprep.mubr.f32.mxu0 0.0
    %539 = vmatmul.mubr.f32.gmra.mrb[0].mxu0 %v146
    %v540 = vpop.f32.mrb[0].mxu0
    %v541 = vadd.f32 %v144, %v540
    %v542 = vpop.f32.mrb[0].mxu0
    %543 = vdwg.mxu0
    %v544 = vmul.f32 %v466, %v541
    %v545 = vadd.f32 %v317, %v544
    %v546 = vtanh.pop %v545
    %v547 = vsub.f32 1.0, %v473
    %v548 = vmul.f32 %v547, %v546
    %v549 = vmul.f32 %v473, %v146
    %v550 = vadd.f32 %v548, %v549
    %v551 = vrot.slane %v60, 1
    %v552 = vsel %vm156, %v61, %v551
    %v553 = vrot.slane %v62, 7
    %v554 = vsel %vm159, %v553, %v552
    %v555 = vrot.slane %v63, 6
    %v556 = vsel %vm162, %v555, %v554
    %v557 = vrot.slane %v64, 5
    %v558 = vsel %vm165, %v557, %v556
    %v559 = vrot.slane %v65, 4
    %v560 = vsel %vm168, %v559, %v558
    %v561 = vrot.slane %v66, 3
    %v562 = vsel %vm171, %v561, %v560
    %v563 = vrot.slane %v67, 2
    %v564 = vsel %vm174, %v563, %v562
    %v565 = vsel %vm176, %v564, 0
    %567 = vmatprep.subr.mxu0 %v69
    %568 = vmatpush1.msra.mxu0 %v68
    %569 = vmatprep.subr.mxu0 %v72
    %570 = vmatpush1.msra.mxu0 %v71
    %571 = vmatprep.subr.mxu0 0.0
    %572 = vmatpush1.msra.mxu0 0.0
    %573 = vmatprep.subr.mxu0 0.0
    %574 = vmatpush1.msra.mxu0 0.0
    %575 = vmatprep.subr.mxu0 0.0
    %576 = vmatpush1.msra.mxu0 0.0
    %577 = vmatprep.subr.mxu0 0.0
    %578 = vmatpush1.msra.mxu0 0.0
    %579 = vmatprep.subr.mxu0 0.0
    %580 = vmatpush1.msra.mxu0 0.0
    %581 = vmatprep.subr.mxu0 0.0
    %582 = vmatpush1.msra.mxu0 0.0
    %583 = vmatprep.subr.mxu0 0.0
    %584 = vmatpush1.msra.mxu0 0.0
    %585 = vmatprep.subr.mxu0 0.0
    %586 = vmatpush1.msra.mxu0 0.0
    %587 = vmatprep.subr.mxu0 0.0
    %588 = vmatpush1.msra.mxu0 0.0
    %589 = vmatprep.subr.mxu0 0.0
    %590 = vmatpush1.msra.mxu0 0.0
    %591 = vmatprep.subr.mxu0 0.0
    %592 = vmatpush1.msra.mxu0 0.0
    %593 = vmatprep.subr.mxu0 0.0
    %594 = vmatpush1.msra.mxu0 0.0
    %595 = vmatprep.subr.mxu0 0.0
    %596 = vmatpush1.msra.mxu0 0.0
    %597 = vmatprep.subr.mxu0 0.0
    %598 = vmatpush1.msra.mxu0 0.0
    %599 = vmatprep.subr.mxu0 0.0
    %600 = vmatpush1.msra.mxu0 0.0
    %601 = vmatprep.subr.mxu0 0.0
    %602 = vmatpush1.msra.mxu0 0.0
    %603 = vmatprep.subr.mxu0 0.0
    %604 = vmatpush1.msra.mxu0 0.0
    %605 = vmatprep.subr.mxu0 0.0
    %606 = vmatpush1.msra.mxu0 0.0
    %607 = vmatprep.subr.mxu0 0.0
    %608 = vmatpush1.msra.mxu0 0.0
    %609 = vmatprep.subr.mxu0 0.0
    %610 = vmatpush1.msra.mxu0 0.0
    %611 = vmatprep.subr.mxu0 0.0
    %612 = vmatpush1.msra.mxu0 0.0
    %613 = vmatprep.subr.mxu0 0.0
    %614 = vmatpush1.msra.mxu0 0.0
    %615 = vmatprep.subr.mxu0 0.0
    %616 = vmatpush1.msra.mxu0 0.0
    %617 = vmatprep.subr.mxu0 0.0
    %618 = vmatpush1.msra.mxu0 0.0
    %619 = vmatprep.subr.mxu0 0.0
    %620 = vmatpush1.msra.mxu0 0.0
    %621 = vmatprep.subr.mxu0 0.0
    %622 = vmatpush1.msra.mxu0 0.0
    %623 = vmatprep.subr.mxu0 0.0
    %624 = vmatpush1.msra.mxu0 0.0
    %625 = vmatprep.subr.mxu0 0.0
    %626 = vmatpush1.msra.mxu0 0.0
    %627 = vmatprep.subr.mxu0 0.0
    %628 = vmatpush1.msra.mxu0 0.0
    %629 = vmatprep.subr.mxu0 0.0
    %630 = vmatpush1.msra.mxu0 0.0
    %631 = vmatprep.mubr.f32.mxu0 0.0
    %632 = vmatmul.mubr.f32.gmra.mrb[0].mxu0 %v565
    %v633 = vpop.f32.mrb[0].mxu0
    %v634 = vadd.f32 %v127, %v633
    %v635 = vpop.f32.mrb[0].mxu0
    %v636 = vadd.f32 %v131, %v635
    %637 = vdwg.mxu0
    %638 = vmatprep.subr.mxu0 0.0
    %639 = vmatpush1.msra.mxu0 %v70
    %640 = vmatprep.subr.mxu0 0.0
    %641 = vmatpush1.msra.mxu0 %v73
    %642 = vmatprep.subr.mxu0 0.0
    %643 = vmatpush1.msra.mxu0 0.0
    %644 = vmatprep.subr.mxu0 0.0
    %645 = vmatpush1.msra.mxu0 0.0
    %646 = vmatprep.subr.mxu0 0.0
    %647 = vmatpush1.msra.mxu0 0.0
    %648 = vmatprep.subr.mxu0 0.0
    %649 = vmatpush1.msra.mxu0 0.0
    %650 = vmatprep.subr.mxu0 0.0
    %651 = vmatpush1.msra.mxu0 0.0
    %652 = vmatprep.subr.mxu0 0.0
    %653 = vmatpush1.msra.mxu0 0.0
    %654 = vmatprep.subr.mxu0 0.0
    %655 = vmatpush1.msra.mxu0 0.0
    %656 = vmatprep.subr.mxu0 0.0
    %657 = vmatpush1.msra.mxu0 0.0
    %658 = vmatprep.subr.mxu0 0.0
    %659 = vmatpush1.msra.mxu0 0.0
    %660 = vmatprep.subr.mxu0 0.0
    %661 = vmatpush1.msra.mxu0 0.0
    %662 = vmatprep.subr.mxu0 0.0
    %663 = vmatpush1.msra.mxu0 0.0
    %664 = vmatprep.subr.mxu0 0.0
    %665 = vmatpush1.msra.mxu0 0.0
    %666 = vmatprep.subr.mxu0 0.0
    %667 = vmatpush1.msra.mxu0 0.0
    %668 = vmatprep.subr.mxu0 0.0
    %669 = vmatpush1.msra.mxu0 0.0
    %670 = vmatprep.subr.mxu0 0.0
    %671 = vmatpush1.msra.mxu0 0.0
    %672 = vmatprep.subr.mxu0 0.0
    %673 = vmatpush1.msra.mxu0 0.0
    %674 = vmatprep.subr.mxu0 0.0
    %675 = vmatpush1.msra.mxu0 0.0
    %676 = vmatprep.subr.mxu0 0.0
    %677 = vmatpush1.msra.mxu0 0.0
    %678 = vmatprep.subr.mxu0 0.0
    %679 = vmatpush1.msra.mxu0 0.0
    %680 = vmatprep.subr.mxu0 0.0
    %681 = vmatpush1.msra.mxu0 0.0
    %682 = vmatprep.subr.mxu0 0.0
    %683 = vmatpush1.msra.mxu0 0.0
    %684 = vmatprep.subr.mxu0 0.0
    %685 = vmatpush1.msra.mxu0 0.0
    %686 = vmatprep.subr.mxu0 0.0
    %687 = vmatpush1.msra.mxu0 0.0
    %688 = vmatprep.subr.mxu0 0.0
    %689 = vmatpush1.msra.mxu0 0.0
    %690 = vmatprep.subr.mxu0 0.0
    %691 = vmatpush1.msra.mxu0 0.0
    %692 = vmatprep.subr.mxu0 0.0
    %693 = vmatpush1.msra.mxu0 0.0
    %694 = vmatprep.subr.mxu0 0.0
    %695 = vmatpush1.msra.mxu0 0.0
    %696 = vmatprep.subr.mxu0 0.0
    %697 = vmatpush1.msra.mxu0 0.0
    %698 = vmatprep.subr.mxu0 0.0
    %699 = vmatpush1.msra.mxu0 0.0
    %700 = vmatprep.subr.mxu0 0.0
    %701 = vmatpush1.msra.mxu0 0.0
    %702 = vmatprep.mubr.f32.mxu0 0.0
    %703 = vmatmul.mubr.f32.gmra.mrb[0].mxu0 %v565
    %v704 = vpop.f32.mrb[0].mxu0
    %v705 = vadd.f32 %v135, %v704
    %v706 = vpop.f32.mrb[0].mxu0
    %707 = vdwg.mxu0
    %708 = vmatprep.subr.mxu0 0.0
    %709 = vmatpush1.msra.mxu0 %v74
    %710 = vmatprep.subr.mxu0 0.0
    %711 = vmatpush1.msra.mxu0 %v75
    %712 = vmatprep.subr.mxu0 0.0
    %713 = vmatpush1.msra.mxu0 %v76
    %714 = vmatprep.subr.mxu0 0.0
    %715 = vmatpush1.msra.mxu0 %v77
    %716 = vmatprep.subr.mxu0 0.0
    %717 = vmatpush1.msra.mxu0 %v78
    %718 = vmatprep.subr.mxu0 0.0
    %719 = vmatpush1.msra.mxu0 %v79
    %720 = vmatprep.subr.mxu0 0.0
    %721 = vmatpush1.msra.mxu0 %v80
    %722 = vmatprep.subr.mxu0 0.0
    %723 = vmatpush1.msra.mxu0 %v81
    %724 = vmatprep.subr.mxu0 0.0
    %725 = vmatpush1.msra.mxu0 %v82
    %726 = vmatprep.subr.mxu0 0.0
    %727 = vmatpush1.msra.mxu0 %v83
    %728 = vmatprep.subr.mxu0 0.0
    %729 = vmatpush1.msra.mxu0 %v84
    %730 = vmatprep.subr.mxu0 0.0
    %731 = vmatpush1.msra.mxu0 %v85
    %732 = vmatprep.subr.mxu0 0.0
    %733 = vmatpush1.msra.mxu0 %v86
    %734 = vmatprep.subr.mxu0 0.0
    %735 = vmatpush1.msra.mxu0 %v87
    %736 = vmatprep.subr.mxu0 0.0
    %737 = vmatpush1.msra.mxu0 %v88
    %738 = vmatprep.subr.mxu0 0.0
    %739 = vmatpush1.msra.mxu0 %v89
    %740 = vmatprep.subr.mxu0 0.0
    %741 = vmatpush1.msra.mxu0 0.0
    %742 = vmatprep.subr.mxu0 0.0
    %743 = vmatpush1.msra.mxu0 0.0
    %744 = vmatprep.subr.mxu0 0.0
    %745 = vmatpush1.msra.mxu0 0.0
    %746 = vmatprep.subr.mxu0 0.0
    %747 = vmatpush1.msra.mxu0 0.0
    %748 = vmatprep.subr.mxu0 0.0
    %749 = vmatpush1.msra.mxu0 0.0
    %750 = vmatprep.subr.mxu0 0.0
    %751 = vmatpush1.msra.mxu0 0.0
    %752 = vmatprep.subr.mxu0 0.0
    %753 = vmatpush1.msra.mxu0 0.0
    %754 = vmatprep.subr.mxu0 0.0
    %755 = vmatpush1.msra.mxu0 0.0
    %756 = vmatprep.subr.mxu0 0.0
    %757 = vmatpush1.msra.mxu0 0.0
    %758 = vmatprep.subr.mxu0 0.0
    %759 = vmatpush1.msra.mxu0 0.0
    %760 = vmatprep.subr.mxu0 0.0
    %761 = vmatpush1.msra.mxu0 0.0
    %762 = vmatprep.subr.mxu0 0.0
    %763 = vmatpush1.msra.mxu0 0.0
    %764 = vmatprep.subr.mxu0 0.0
    %765 = vmatpush1.msra.mxu0 0.0
    %766 = vmatprep.subr.mxu0 0.0
    %767 = vmatpush1.msra.mxu0 0.0
    %768 = vmatprep.subr.mxu0 0.0
    %769 = vmatpush1.msra.mxu0 0.0
    %770 = vmatprep.subr.mxu0 0.0
    %771 = vmatpush1.msra.mxu0 0.0
    %772 = vmatprep.mubr.f32.mxu0 0.0
    %773 = vmatmul.mubr.f32.gmra.mrb[0].mxu0 %v550
    %v774 = vpop.f32.mrb[0].mxu0
    %v775 = vadd.f32 0.0, %v774
    %v776 = vpop.f32.mrb[0].mxu0
    %777 = vdwg.mxu0
    %778 = vmatprep.subr.mxu0 0.0
    %779 = vmatpush1.msra.mxu0 %v90
    %780 = vmatprep.subr.mxu0 0.0
    %781 = vmatpush1.msra.mxu0 %v91
    %782 = vmatprep.subr.mxu0 0.0
    %783 = vmatpush1.msra.mxu0 %v92
    %784 = vmatprep.subr.mxu0 0.0
    %785 = vmatpush1.msra.mxu0 %v93
    %786 = vmatprep.subr.mxu0 0.0
    %787 = vmatpush1.msra.mxu0 %v94
    %788 = vmatprep.subr.mxu0 0.0
    %789 = vmatpush1.msra.mxu0 %v95
    %790 = vmatprep.subr.mxu0 0.0
    %791 = vmatpush1.msra.mxu0 %v96
    %792 = vmatprep.subr.mxu0 0.0
    %793 = vmatpush1.msra.mxu0 %v97
    %794 = vmatprep.subr.mxu0 0.0
    %795 = vmatpush1.msra.mxu0 %v98
    %796 = vmatprep.subr.mxu0 0.0
    %797 = vmatpush1.msra.mxu0 %v99
    %798 = vmatprep.subr.mxu0 0.0
    %799 = vmatpush1.msra.mxu0 %v100
    %800 = vmatprep.subr.mxu0 0.0
    %801 = vmatpush1.msra.mxu0 %v101
    %802 = vmatprep.subr.mxu0 0.0
    %803 = vmatpush1.msra.mxu0 %v102
    %804 = vmatprep.subr.mxu0 0.0
    %805 = vmatpush1.msra.mxu0 %v103
    %806 = vmatprep.subr.mxu0 0.0
    %807 = vmatpush1.msra.mxu0 %v104
    %808 = vmatprep.subr.mxu0 0.0
    %809 = vmatpush1.msra.mxu0 %v105
    %810 = vmatprep.subr.mxu0 0.0
    %811 = vmatpush1.msra.mxu0 0.0
    %812 = vmatprep.subr.mxu0 0.0
    %813 = vmatpush1.msra.mxu0 0.0
    %814 = vmatprep.subr.mxu0 0.0
    %815 = vmatpush1.msra.mxu0 0.0
    %816 = vmatprep.subr.mxu0 0.0
    %817 = vmatpush1.msra.mxu0 0.0
    %818 = vmatprep.subr.mxu0 0.0
    %819 = vmatpush1.msra.mxu0 0.0
    %820 = vmatprep.subr.mxu0 0.0
    %821 = vmatpush1.msra.mxu0 0.0
    %822 = vmatprep.subr.mxu0 0.0
    %823 = vmatpush1.msra.mxu0 0.0
    %824 = vmatprep.subr.mxu0 0.0
    %825 = vmatpush1.msra.mxu0 0.0
    %826 = vmatprep.subr.mxu0 0.0
    %827 = vmatpush1.msra.mxu0 0.0
    %828 = vmatprep.subr.mxu0 0.0
    %829 = vmatpush1.msra.mxu0 0.0
    %830 = vmatprep.subr.mxu0 0.0
    %831 = vmatpush1.msra.mxu0 0.0
    %832 = vmatprep.subr.mxu0 0.0
    %833 = vmatpush1.msra.mxu0 0.0
    %834 = vmatprep.subr.mxu0 0.0
    %835 = vmatpush1.msra.mxu0 0.0
    %836 = vmatprep.subr.mxu0 0.0
    %837 = vmatpush1.msra.mxu0 0.0
    %838 = vmatprep.subr.mxu0 0.0
    %839 = vmatpush1.msra.mxu0 0.0
    %840 = vmatprep.subr.mxu0 0.0
    %841 = vmatpush1.msra.mxu0 0.0
    %842 = vmatprep.mubr.f32.mxu0 0.0
    %843 = vmatmul.mubr.f32.gmra.mrb[0].mxu0 %v550
    %v844 = vpop.f32.mrb[0].mxu0
    %v845 = vadd.f32 0.0, %v844
    %v846 = vpop.f32.mrb[0].mxu0
    %847 = vdwg.mxu0
    %v848 = vadd.f32 %v634, %v775
    %v849 = vxor.u32 %v848, 2147483648
    %v850 = vmul.f32 %v849, 1.442695
    %v851 = vpow.pop %v850
    %v852 = vadd.f32 %v851, 1.0
    %v853 = vrcp.pop %v852
    %v854 = vmul.f32 1.0, %v853
    %v855 = vadd.f32 %v636, %v845
    %v856 = vxor.u32 %v855, 2147483648
    %v857 = vmul.f32 %v856, 1.442695
    %v858 = vpow.pop %v857
    %v859 = vadd.f32 %v858, 1.0
    %v860 = vrcp.pop %v859
    %v861 = vmul.f32 1.0, %v860
    %862 = vmatprep.subr.mxu0 0.0
    %863 = vmatpush1.msra.mxu0 %v106
    %864 = vmatprep.subr.mxu0 0.0
    %865 = vmatpush1.msra.mxu0 %v107
    %866 = vmatprep.subr.mxu0 0.0
    %867 = vmatpush1.msra.mxu0 %v108
    %868 = vmatprep.subr.mxu0 0.0
    %869 = vmatpush1.msra.mxu0 %v109
    %870 = vmatprep.subr.mxu0 0.0
    %871 = vmatpush1.msra.mxu0 %v110
    %872 = vmatprep.subr.mxu0 0.0
    %873 = vmatpush1.msra.mxu0 %v111
    %874 = vmatprep.subr.mxu0 0.0
    %875 = vmatpush1.msra.mxu0 %v112
    %876 = vmatprep.subr.mxu0 0.0
    %877 = vmatpush1.msra.mxu0 %v113
    %878 = vmatprep.subr.mxu0 0.0
    %879 = vmatpush1.msra.mxu0 %v114
    %880 = vmatprep.subr.mxu0 0.0
    %881 = vmatpush1.msra.mxu0 %v115
    %882 = vmatprep.subr.mxu0 0.0
    %883 = vmatpush1.msra.mxu0 %v116
    %884 = vmatprep.subr.mxu0 0.0
    %885 = vmatpush1.msra.mxu0 %v117
    %886 = vmatprep.subr.mxu0 0.0
    %887 = vmatpush1.msra.mxu0 %v118
    %888 = vmatprep.subr.mxu0 0.0
    %889 = vmatpush1.msra.mxu0 %v119
    %890 = vmatprep.subr.mxu0 0.0
    %891 = vmatpush1.msra.mxu0 %v120
    %892 = vmatprep.subr.mxu0 0.0
    %893 = vmatpush1.msra.mxu0 %v121
    %894 = vmatprep.subr.mxu0 0.0
    %895 = vmatpush1.msra.mxu0 0.0
    %896 = vmatprep.subr.mxu0 0.0
    %897 = vmatpush1.msra.mxu0 0.0
    %898 = vmatprep.subr.mxu0 0.0
    %899 = vmatpush1.msra.mxu0 0.0
    %900 = vmatprep.subr.mxu0 0.0
    %901 = vmatpush1.msra.mxu0 0.0
    %902 = vmatprep.subr.mxu0 0.0
    %903 = vmatpush1.msra.mxu0 0.0
    %904 = vmatprep.subr.mxu0 0.0
    %905 = vmatpush1.msra.mxu0 0.0
    %906 = vmatprep.subr.mxu0 0.0
    %907 = vmatpush1.msra.mxu0 0.0
    %908 = vmatprep.subr.mxu0 0.0
    %909 = vmatpush1.msra.mxu0 0.0
    %910 = vmatprep.subr.mxu0 0.0
    %911 = vmatpush1.msra.mxu0 0.0
    %912 = vmatprep.subr.mxu0 0.0
    %913 = vmatpush1.msra.mxu0 0.0
    %914 = vmatprep.subr.mxu0 0.0
    %915 = vmatpush1.msra.mxu0 0.0
    %916 = vmatprep.subr.mxu0 0.0
    %917 = vmatpush1.msra.mxu0 0.0
    %918 = vmatprep.subr.mxu0 0.0
    %919 = vmatpush1.msra.mxu0 0.0
    %920 = vmatprep.subr.mxu0 0.0
    %921 = vmatpush1.msra.mxu0 0.0
    %922 = vmatprep.subr.mxu0 0.0
    %923 = vmatpush1.msra.mxu0 0.0
    %924 = vmatprep.subr.mxu0 0.0
    %925 = vmatpush1.msra.mxu0 0.0
    %926 = vmatprep.mubr.f32.mxu0 0.0
    %927 = vmatmul.mubr.f32.gmra.mrb[0].mxu0 %v550
    %v928 = vpop.f32.mrb[0].mxu0
    %v929 = vadd.f32 %v144, %v928
    %v930 = vpop.f32.mrb[0].mxu0
    %931 = vdwg.mxu0
    %v932 = vmul.f32 %v854, %v929
    %v933 = vadd.f32 %v705, %v932
    %v934 = vtanh.pop %v933
    %v935 = vsub.f32 1.0, %v861
    %v936 = vmul.f32 %v935, %v934
    %v937 = vmul.f32 %v861, %v550
    %v938 = vadd.f32 %v936, %v937
    %v939 = vrot.slane %v60, 2
    %v940 = vrot.slane %v61, 1
    %v941 = vsel %vm156, %v940, %v939
    %v942 = vsel %vm159, %v62, %v941
    %v943 = vrot.slane %v63, 7
    %v944 = vsel %vm162, %v943, %v942
    %v945 = vrot.slane %v64, 6
    %v946 = vsel %vm165, %v945, %v944
    %v947 = vrot.slane %v65, 5
    %v948 = vsel %vm168, %v947, %v946
    %v949 = vrot.slane %v66, 4
    %v950 = vsel %vm171, %v949, %v948
    %v951 = vrot.slane %v67, 3
    %v952 = vsel %vm174, %v951, %v950
    %v953 = vsel %vm176, %v952, 0
    %955 = vmatprep.subr.mxu0 %v69
    %956 = vmatpush1.msra.mxu0 %v68
    %957 = vmatprep.subr.mxu0 %v72
    %958 = vmatpush1.msra.mxu0 %v71
    %959 = vmatprep.subr.mxu0 0.0
    %960 = vmatpush1.msra.mxu0 0.0
    %961 = vmatprep.subr.mxu0 0.0
    %962 = vmatpush1.msra.mxu0 0.0
    %963 = vmatprep.subr.mxu0 0.0
    %964 = vmatpush1.msra.mxu0 0.0
    %965 = vmatprep.subr.mxu0 0.0
    %966 = vmatpush1.msra.mxu0 0.0
    %967 = vmatprep.subr.mxu0 0.0
    %968 = vmatpush1.msra.mxu0 0.0
    %969 = vmatprep.subr.mxu0 0.0
    %970 = vmatpush1.msra.mxu0 0.0
    %971 = vmatprep.subr.mxu0 0.0
    %972 = vmatpush1.msra.mxu0 0.0
    %973 = vmatprep.subr.mxu0 0.0
    %974 = vmatpush1.msra.mxu0 0.0
    %975 = vmatprep.subr.mxu0 0.0
    %976 = vmatpush1.msra.mxu0 0.0
    %977 = vmatprep.subr.mxu0 0.0
    %978 = vmatpush1.msra.mxu0 0.0
    %979 = vmatprep.subr.mxu0 0.0
    %980 = vmatpush1.msra.mxu0 0.0
    %981 = vmatprep.subr.mxu0 0.0
    %982 = vmatpush1.msra.mxu0 0.0
    %983 = vmatprep.subr.mxu0 0.0
    %984 = vmatpush1.msra.mxu0 0.0
    %985 = vmatprep.subr.mxu0 0.0
    %986 = vmatpush1.msra.mxu0 0.0
    %987 = vmatprep.subr.mxu0 0.0
    %988 = vmatpush1.msra.mxu0 0.0
    %989 = vmatprep.subr.mxu0 0.0
    %990 = vmatpush1.msra.mxu0 0.0
    %991 = vmatprep.subr.mxu0 0.0
    %992 = vmatpush1.msra.mxu0 0.0
    %993 = vmatprep.subr.mxu0 0.0
    %994 = vmatpush1.msra.mxu0 0.0
    %995 = vmatprep.subr.mxu0 0.0
    %996 = vmatpush1.msra.mxu0 0.0
    %997 = vmatprep.subr.mxu0 0.0
    %998 = vmatpush1.msra.mxu0 0.0
    %999 = vmatprep.subr.mxu0 0.0
    %1000 = vmatpush1.msra.mxu0 0.0
    %1001 = vmatprep.subr.mxu0 0.0
    %1002 = vmatpush1.msra.mxu0 0.0
    %1003 = vmatprep.subr.mxu0 0.0
    %1004 = vmatpush1.msra.mxu0 0.0
    %1005 = vmatprep.subr.mxu0 0.0
    %1006 = vmatpush1.msra.mxu0 0.0
    %1007 = vmatprep.subr.mxu0 0.0
    %1008 = vmatpush1.msra.mxu0 0.0
    %1009 = vmatprep.subr.mxu0 0.0
    %1010 = vmatpush1.msra.mxu0 0.0
    %1011 = vmatprep.subr.mxu0 0.0
    %1012 = vmatpush1.msra.mxu0 0.0
    %1013 = vmatprep.subr.mxu0 0.0
    %1014 = vmatpush1.msra.mxu0 0.0
    %1015 = vmatprep.subr.mxu0 0.0
    %1016 = vmatpush1.msra.mxu0 0.0
    %1017 = vmatprep.subr.mxu0 0.0
    %1018 = vmatpush1.msra.mxu0 0.0
    %1019 = vmatprep.mubr.f32.mxu0 0.0
    %1020 = vmatmul.mubr.f32.gmra.mrb[0].mxu0 %v953
    %v1021 = vpop.f32.mrb[0].mxu0
    %v1022 = vadd.f32 %v127, %v1021
    %v1023 = vpop.f32.mrb[0].mxu0
    %v1024 = vadd.f32 %v131, %v1023
    %1025 = vdwg.mxu0
    %1026 = vmatprep.subr.mxu0 0.0
    %1027 = vmatpush1.msra.mxu0 %v70
    %1028 = vmatprep.subr.mxu0 0.0
    %1029 = vmatpush1.msra.mxu0 %v73
    %1030 = vmatprep.subr.mxu0 0.0
    %1031 = vmatpush1.msra.mxu0 0.0
    %1032 = vmatprep.subr.mxu0 0.0
    %1033 = vmatpush1.msra.mxu0 0.0
    %1034 = vmatprep.subr.mxu0 0.0
    %1035 = vmatpush1.msra.mxu0 0.0
    %1036 = vmatprep.subr.mxu0 0.0
    %1037 = vmatpush1.msra.mxu0 0.0
    %1038 = vmatprep.subr.mxu0 0.0
    %1039 = vmatpush1.msra.mxu0 0.0
    %1040 = vmatprep.subr.mxu0 0.0
    %1041 = vmatpush1.msra.mxu0 0.0
    %1042 = vmatprep.subr.mxu0 0.0
    %1043 = vmatpush1.msra.mxu0 0.0
    %1044 = vmatprep.subr.mxu0 0.0
    %1045 = vmatpush1.msra.mxu0 0.0
    %1046 = vmatprep.subr.mxu0 0.0
    %1047 = vmatpush1.msra.mxu0 0.0
    %1048 = vmatprep.subr.mxu0 0.0
    %1049 = vmatpush1.msra.mxu0 0.0
    %1050 = vmatprep.subr.mxu0 0.0
    %1051 = vmatpush1.msra.mxu0 0.0
    %1052 = vmatprep.subr.mxu0 0.0
    %1053 = vmatpush1.msra.mxu0 0.0
    %1054 = vmatprep.subr.mxu0 0.0
    %1055 = vmatpush1.msra.mxu0 0.0
    %1056 = vmatprep.subr.mxu0 0.0
    %1057 = vmatpush1.msra.mxu0 0.0
    %1058 = vmatprep.subr.mxu0 0.0
    %1059 = vmatpush1.msra.mxu0 0.0
    %1060 = vmatprep.subr.mxu0 0.0
    %1061 = vmatpush1.msra.mxu0 0.0
    %1062 = vmatprep.subr.mxu0 0.0
    %1063 = vmatpush1.msra.mxu0 0.0
    %1064 = vmatprep.subr.mxu0 0.0
    %1065 = vmatpush1.msra.mxu0 0.0
    %1066 = vmatprep.subr.mxu0 0.0
    %1067 = vmatpush1.msra.mxu0 0.0
    %1068 = vmatprep.subr.mxu0 0.0
    %1069 = vmatpush1.msra.mxu0 0.0
    %1070 = vmatprep.subr.mxu0 0.0
    %1071 = vmatpush1.msra.mxu0 0.0
    %1072 = vmatprep.subr.mxu0 0.0
    %1073 = vmatpush1.msra.mxu0 0.0
    %1074 = vmatprep.subr.mxu0 0.0
    %1075 = vmatpush1.msra.mxu0 0.0
    %1076 = vmatprep.subr.mxu0 0.0
    %1077 = vmatpush1.msra.mxu0 0.0
    %1078 = vmatprep.subr.mxu0 0.0
    %1079 = vmatpush1.msra.mxu0 0.0
    %1080 = vmatprep.subr.mxu0 0.0
    %1081 = vmatpush1.msra.mxu0 0.0
    %1082 = vmatprep.subr.mxu0 0.0
    %1083 = vmatpush1.msra.mxu0 0.0
    %1084 = vmatprep.subr.mxu0 0.0
    %1085 = vmatpush1.msra.mxu0 0.0
    %1086 = vmatprep.subr.mxu0 0.0
    %1087 = vmatpush1.msra.mxu0 0.0
    %1088 = vmatprep.subr.mxu0 0.0
    %1089 = vmatpush1.msra.mxu0 0.0
    %1090 = vmatprep.mubr.f32.mxu0 0.0
    %1091 = vmatmul.mubr.f32.gmra.mrb[0].mxu0 %v953
    %v1092 = vpop.f32.mrb[0].mxu0
    %v1093 = vadd.f32 %v135, %v1092
    %v1094 = vpop.f32.mrb[0].mxu0
    %1095 = vdwg.mxu0
    %1096 = vmatprep.subr.mxu0 0.0
    %1097 = vmatpush1.msra.mxu0 %v74
    %1098 = vmatprep.subr.mxu0 0.0
    %1099 = vmatpush1.msra.mxu0 %v75
    %1100 = vmatprep.subr.mxu0 0.0
    %1101 = vmatpush1.msra.mxu0 %v76
    %1102 = vmatprep.subr.mxu0 0.0
    %1103 = vmatpush1.msra.mxu0 %v77
    %1104 = vmatprep.subr.mxu0 0.0
    %1105 = vmatpush1.msra.mxu0 %v78
    %1106 = vmatprep.subr.mxu0 0.0
    %1107 = vmatpush1.msra.mxu0 %v79
    %1108 = vmatprep.subr.mxu0 0.0
    %1109 = vmatpush1.msra.mxu0 %v80
    %1110 = vmatprep.subr.mxu0 0.0
    %1111 = vmatpush1.msra.mxu0 %v81
    %1112 = vmatprep.subr.mxu0 0.0
    %1113 = vmatpush1.msra.mxu0 %v82
    %1114 = vmatprep.subr.mxu0 0.0
    %1115 = vmatpush1.msra.mxu0 %v83
    %1116 = vmatprep.subr.mxu0 0.0
    %1117 = vmatpush1.msra.mxu0 %v84
    %1118 = vmatprep.subr.mxu0 0.0
    %1119 = vmatpush1.msra.mxu0 %v85
    %1120 = vmatprep.subr.mxu0 0.0
    %1121 = vmatpush1.msra.mxu0 %v86
    %1122 = vmatprep.subr.mxu0 0.0
    %1123 = vmatpush1.msra.mxu0 %v87
    %1124 = vmatprep.subr.mxu0 0.0
    %1125 = vmatpush1.msra.mxu0 %v88
    %1126 = vmatprep.subr.mxu0 0.0
    %1127 = vmatpush1.msra.mxu0 %v89
    %1128 = vmatprep.subr.mxu0 0.0
    %1129 = vmatpush1.msra.mxu0 0.0
    %1130 = vmatprep.subr.mxu0 0.0
    %1131 = vmatpush1.msra.mxu0 0.0
    %1132 = vmatprep.subr.mxu0 0.0
    %1133 = vmatpush1.msra.mxu0 0.0
    %1134 = vmatprep.subr.mxu0 0.0
    %1135 = vmatpush1.msra.mxu0 0.0
    %1136 = vmatprep.subr.mxu0 0.0
    %1137 = vmatpush1.msra.mxu0 0.0
    %1138 = vmatprep.subr.mxu0 0.0
    %1139 = vmatpush1.msra.mxu0 0.0
    %1140 = vmatprep.subr.mxu0 0.0
    %1141 = vmatpush1.msra.mxu0 0.0
    %1142 = vmatprep.subr.mxu0 0.0
    %1143 = vmatpush1.msra.mxu0 0.0
    %1144 = vmatprep.subr.mxu0 0.0
    %1145 = vmatpush1.msra.mxu0 0.0
    %1146 = vmatprep.subr.mxu0 0.0
    %1147 = vmatpush1.msra.mxu0 0.0
    %1148 = vmatprep.subr.mxu0 0.0
    %1149 = vmatpush1.msra.mxu0 0.0
    %1150 = vmatprep.subr.mxu0 0.0
    %1151 = vmatpush1.msra.mxu0 0.0
    %1152 = vmatprep.subr.mxu0 0.0
    %1153 = vmatpush1.msra.mxu0 0.0
    %1154 = vmatprep.subr.mxu0 0.0
    %1155 = vmatpush1.msra.mxu0 0.0
    %1156 = vmatprep.subr.mxu0 0.0
    %1157 = vmatpush1.msra.mxu0 0.0
    %1158 = vmatprep.subr.mxu0 0.0
    %1159 = vmatpush1.msra.mxu0 0.0
    %1160 = vmatprep.mubr.f32.mxu0 0.0
    %1161 = vmatmul.mubr.f32.gmra.mrb[0].mxu0 %v938
    %v1162 = vpop.f32.mrb[0].mxu0
    %v1163 = vadd.f32 0.0, %v1162
    %v1164 = vpop.f32.mrb[0].mxu0
    %1165 = vdwg.mxu0
    %1166 = vmatprep.subr.mxu0 0.0
    %1167 = vmatpush1.msra.mxu0 %v90
    %1168 = vmatprep.subr.mxu0 0.0
    %1169 = vmatpush1.msra.mxu0 %v91
    %1170 = vmatprep.subr.mxu0 0.0
    %1171 = vmatpush1.msra.mxu0 %v92
    %1172 = vmatprep.subr.mxu0 0.0
    %1173 = vmatpush1.msra.mxu0 %v93
    %1174 = vmatprep.subr.mxu0 0.0
    %1175 = vmatpush1.msra.mxu0 %v94
    %1176 = vmatprep.subr.mxu0 0.0
    %1177 = vmatpush1.msra.mxu0 %v95
    %1178 = vmatprep.subr.mxu0 0.0
    %1179 = vmatpush1.msra.mxu0 %v96
    %1180 = vmatprep.subr.mxu0 0.0
    %1181 = vmatpush1.msra.mxu0 %v97
    %1182 = vmatprep.subr.mxu0 0.0
    %1183 = vmatpush1.msra.mxu0 %v98
    %1184 = vmatprep.subr.mxu0 0.0
    %1185 = vmatpush1.msra.mxu0 %v99
    %1186 = vmatprep.subr.mxu0 0.0
    %1187 = vmatpush1.msra.mxu0 %v100
    %1188 = vmatprep.subr.mxu0 0.0
    %1189 = vmatpush1.msra.mxu0 %v101
    %1190 = vmatprep.subr.mxu0 0.0
    %1191 = vmatpush1.msra.mxu0 %v102
    %1192 = vmatprep.subr.mxu0 0.0
    %1193 = vmatpush1.msra.mxu0 %v103
    %1194 = vmatprep.subr.mxu0 0.0
    %1195 = vmatpush1.msra.mxu0 %v104
    %1196 = vmatprep.subr.mxu0 0.0
    %1197 = vmatpush1.msra.mxu0 %v105
    %1198 = vmatprep.subr.mxu0 0.0
    %1199 = vmatpush1.msra.mxu0 0.0
    %1200 = vmatprep.subr.mxu0 0.0
    %1201 = vmatpush1.msra.mxu0 0.0
    %1202 = vmatprep.subr.mxu0 0.0
    %1203 = vmatpush1.msra.mxu0 0.0
    %1204 = vmatprep.subr.mxu0 0.0
    %1205 = vmatpush1.msra.mxu0 0.0
    %1206 = vmatprep.subr.mxu0 0.0
    %1207 = vmatpush1.msra.mxu0 0.0
    %1208 = vmatprep.subr.mxu0 0.0
    %1209 = vmatpush1.msra.mxu0 0.0
    %1210 = vmatprep.subr.mxu0 0.0
    %1211 = vmatpush1.msra.mxu0 0.0
    %1212 = vmatprep.subr.mxu0 0.0
    %1213 = vmatpush1.msra.mxu0 0.0
    %1214 = vmatprep.subr.mxu0 0.0
    %1215 = vmatpush1.msra.mxu0 0.0
    %1216 = vmatprep.subr.mxu0 0.0
    %1217 = vmatpush1.msra.mxu0 0.0
    %1218 = vmatprep.subr.mxu0 0.0
    %1219 = vmatpush1.msra.mxu0 0.0
    %1220 = vmatprep.subr.mxu0 0.0
    %1221 = vmatpush1.msra.mxu0 0.0
    %1222 = vmatprep.subr.mxu0 0.0
    %1223 = vmatpush1.msra.mxu0 0.0
    %1224 = vmatprep.subr.mxu0 0.0
    %1225 = vmatpush1.msra.mxu0 0.0
    %1226 = vmatprep.subr.mxu0 0.0
    %1227 = vmatpush1.msra.mxu0 0.0
    %1228 = vmatprep.subr.mxu0 0.0
    %1229 = vmatpush1.msra.mxu0 0.0
    %1230 = vmatprep.mubr.f32.mxu0 0.0
    %1231 = vmatmul.mubr.f32.gmra.mrb[0].mxu0 %v938
    %v1232 = vpop.f32.mrb[0].mxu0
    %v1233 = vadd.f32 0.0, %v1232
    %v1234 = vpop.f32.mrb[0].mxu0
    %1235 = vdwg.mxu0
    %v1236 = vadd.f32 %v1022, %v1163
    %v1237 = vxor.u32 %v1236, 2147483648
    %v1238 = vmul.f32 %v1237, 1.442695
    %v1239 = vpow.pop %v1238
    %v1240 = vadd.f32 %v1239, 1.0
    %v1241 = vrcp.pop %v1240
    %v1242 = vmul.f32 1.0, %v1241
    %v1243 = vadd.f32 %v1024, %v1233
    %v1244 = vxor.u32 %v1243, 2147483648
    %v1245 = vmul.f32 %v1244, 1.442695
    %v1246 = vpow.pop %v1245
    %v1247 = vadd.f32 %v1246, 1.0
    %v1248 = vrcp.pop %v1247
    %v1249 = vmul.f32 1.0, %v1248
    %1250 = vmatprep.subr.mxu0 0.0
    %1251 = vmatpush1.msra.mxu0 %v106
    %1252 = vmatprep.subr.mxu0 0.0
    %1253 = vmatpush1.msra.mxu0 %v107
    %1254 = vmatprep.subr.mxu0 0.0
    %1255 = vmatpush1.msra.mxu0 %v108
    %1256 = vmatprep.subr.mxu0 0.0
    %1257 = vmatpush1.msra.mxu0 %v109
    %1258 = vmatprep.subr.mxu0 0.0
    %1259 = vmatpush1.msra.mxu0 %v110
    %1260 = vmatprep.subr.mxu0 0.0
    %1261 = vmatpush1.msra.mxu0 %v111
    %1262 = vmatprep.subr.mxu0 0.0
    %1263 = vmatpush1.msra.mxu0 %v112
    %1264 = vmatprep.subr.mxu0 0.0
    %1265 = vmatpush1.msra.mxu0 %v113
    %1266 = vmatprep.subr.mxu0 0.0
    %1267 = vmatpush1.msra.mxu0 %v114
    %1268 = vmatprep.subr.mxu0 0.0
    %1269 = vmatpush1.msra.mxu0 %v115
    %1270 = vmatprep.subr.mxu0 0.0
    %1271 = vmatpush1.msra.mxu0 %v116
    %1272 = vmatprep.subr.mxu0 0.0
    %1273 = vmatpush1.msra.mxu0 %v117
    %1274 = vmatprep.subr.mxu0 0.0
    %1275 = vmatpush1.msra.mxu0 %v118
    %1276 = vmatprep.subr.mxu0 0.0
    %1277 = vmatpush1.msra.mxu0 %v119
    %1278 = vmatprep.subr.mxu0 0.0
    %1279 = vmatpush1.msra.mxu0 %v120
    %1280 = vmatprep.subr.mxu0 0.0
    %1281 = vmatpush1.msra.mxu0 %v121
    %1282 = vmatprep.subr.mxu0 0.0
    %1283 = vmatpush1.msra.mxu0 0.0
    %1284 = vmatprep.subr.mxu0 0.0
    %1285 = vmatpush1.msra.mxu0 0.0
    %1286 = vmatprep.subr.mxu0 0.0
    %1287 = vmatpush1.msra.mxu0 0.0
    %1288 = vmatprep.subr.mxu0 0.0
    %1289 = vmatpush1.msra.mxu0 0.0
    %1290 = vmatprep.subr.mxu0 0.0
    %1291 = vmatpush1.msra.mxu0 0.0
    %1292 = vmatprep.subr.mxu0 0.0
    %1293 = vmatpush1.msra.mxu0 0.0
    %1294 = vmatprep.subr.mxu0 0.0
    %1295 = vmatpush1.msra.mxu0 0.0
    %1296 = vmatprep.subr.mxu0 0.0
    %1297 = vmatpush1.msra.mxu0 0.0
    %1298 = vmatprep.subr.mxu0 0.0
    %1299 = vmatpush1.msra.mxu0 0.0
    %1300 = vmatprep.subr.mxu0 0.0
    %1301 = vmatpush1.msra.mxu0 0.0
    %1302 = vmatprep.subr.mxu0 0.0
    %1303 = vmatpush1.msra.mxu0 0.0
    %1304 = vmatprep.subr.mxu0 0.0
    %1305 = vmatpush1.msra.mxu0 0.0
    %1306 = vmatprep.subr.mxu0 0.0
    %1307 = vmatpush1.msra.mxu0 0.0
    %1308 = vmatprep.subr.mxu0 0.0
    %1309 = vmatpush1.msra.mxu0 0.0
    %1310 = vmatprep.subr.mxu0 0.0
    %1311 = vmatpush1.msra.mxu0 0.0
    %1312 = vmatprep.subr.mxu0 0.0
    %1313 = vmatpush1.msra.mxu0 0.0
    %1314 = vmatprep.mubr.f32.mxu0 0.0
    %1315 = vmatmul.mubr.f32.gmra.mrb[0].mxu0 %v938
    %v1316 = vpop.f32.mrb[0].mxu0
    %v1317 = vadd.f32 %v144, %v1316
    %v1318 = vpop.f32.mrb[0].mxu0
    %1319 = vdwg.mxu0
    %v1320 = vmul.f32 %v1242, %v1317
    %v1321 = vadd.f32 %v1093, %v1320
    %v1322 = vtanh.pop %v1321
    %v1323 = vsub.f32 1.0, %v1249
    %v1324 = vmul.f32 %v1323, %v1322
    %v1325 = vmul.f32 %v1249, %v938
    %v1326 = vadd.f32 %v1324, %v1325
    %v1327 = vrot.slane %v60, 3
    %v1328 = vrot.slane %v61, 2
    %v1329 = vsel %vm156, %v1328, %v1327
    %v1330 = vrot.slane %v62, 1
    %v1331 = vsel %vm159, %v1330, %v1329
    %v1332 = vsel %vm162, %v63, %v1331
    %v1333 = vrot.slane %v64, 7
    %v1334 = vsel %vm165, %v1333, %v1332
    %v1335 = vrot.slane %v65, 6
    %v1336 = vsel %vm168, %v1335, %v1334
    %v1337 = vrot.slane %v66, 5
    %v1338 = vsel %vm171, %v1337, %v1336
    %v1339 = vrot.slane %v67, 4
    %v1340 = vsel %vm174, %v1339, %v1338
    %v1341 = vsel %vm176, %v1340, 0
    %1343 = vmatprep.subr.mxu0 %v69
    %1344 = vmatpush1.msra.mxu0 %v68
    %1345 = vmatprep.subr.mxu0 %v72
    %1346 = vmatpush1.msra.mxu0 %v71
    %1347 = vmatprep.subr.mxu0 0.0
    %1348 = vmatpush1.msra.mxu0 0.0
    %1349 = vmatprep.subr.mxu0 0.0
    %1350 = vmatpush1.msra.mxu0 0.0
    %1351 = vmatprep.subr.mxu0 0.0
    %1352 = vmatpush1.msra.mxu0 0.0
    %1353 = vmatprep.subr.mxu0 0.0
    %1354 = vmatpush1.msra.mxu0 0.0
    %1355 = vmatprep.subr.mxu0 0.0
    %1356 = vmatpush1.msra.mxu0 0.0
    %1357 = vmatprep.subr.mxu0 0.0
    %1358 = vmatpush1.msra.mxu0 0.0
    %1359 = vmatprep.subr.mxu0 0.0
    %1360 = vmatpush1.msra.mxu0 0.0
    %1361 = vmatprep.subr.mxu0 0.0
    %1362 = vmatpush1.msra.mxu0 0.0
    %1363 = vmatprep.subr.mxu0 0.0
    %1364 = vmatpush1.msra.mxu0 0.0
    %1365 = vmatprep.subr.mxu0 0.0
    %1366 = vmatpush1.msra.mxu0 0.0
    %1367 = vmatprep.subr.mxu0 0.0
    %1368 = vmatpush1.msra.mxu0 0.0
    %1369 = vmatprep.subr.mxu0 0.0
    %1370 = vmatpush1.msra.mxu0 0.0
    %1371 = vmatprep.subr.mxu0 0.0
    %1372 = vmatpush1.msra.mxu0 0.0
    %1373 = vmatprep.subr.mxu0 0.0
    %1374 = vmatpush1.msra.mxu0 0.0
    %1375 = vmatprep.subr.mxu0 0.0
    %1376 = vmatpush1.msra.mxu0 0.0
    %1377 = vmatprep.subr.mxu0 0.0
    %1378 = vmatpush1.msra.mxu0 0.0
    %1379 = vmatprep.subr.mxu0 0.0
    %1380 = vmatpush1.msra.mxu0 0.0
    %1381 = vmatprep.subr.mxu0 0.0
    %1382 = vmatpush1.msra.mxu0 0.0
    %1383 = vmatprep.subr.mxu0 0.0
    %1384 = vmatpush1.msra.mxu0 0.0
    %1385 = vmatprep.subr.mxu0 0.0
    %1386 = vmatpush1.msra.mxu0 0.0
    %1387 = vmatprep.subr.mxu0 0.0
    %1388 = vmatpush1.msra.mxu0 0.0
    %1389 = vmatprep.subr.mxu0 0.0
    %1390 = vmatpush1.msra.mxu0 0.0
    %1391 = vmatprep.subr.mxu0 0.0
    %1392 = vmatpush1.msra.mxu0 0.0
    %1393 = vmatprep.subr.mxu0 0.0
    %1394 = vmatpush1.msra.mxu0 0.0
    %1395 = vmatprep.subr.mxu0 0.0
    %1396 = vmatpush1.msra.mxu0 0.0
    %1397 = vmatprep.subr.mxu0 0.0
    %1398 = vmatpush1.msra.mxu0 0.0
    %1399 = vmatprep.subr.mxu0 0.0
    %1400 = vmatpush1.msra.mxu0 0.0
    %1401 = vmatprep.subr.mxu0 0.0
    %1402 = vmatpush1.msra.mxu0 0.0
    %1403 = vmatprep.subr.mxu0 0.0
    %1404 = vmatpush1.msra.mxu0 0.0
    %1405 = vmatprep.subr.mxu0 0.0
    %1406 = vmatpush1.msra.mxu0 0.0
    %1407 = vmatprep.mubr.f32.mxu0 0.0
    %1408 = vmatmul.mubr.f32.gmra.mrb[0].mxu0 %v1341
    %v1409 = vpop.f32.mrb[0].mxu0
    %v1410 = vadd.f32 %v127, %v1409
    %v1411 = vpop.f32.mrb[0].mxu0
    %v1412 = vadd.f32 %v131, %v1411
    %1413 = vdwg.mxu0
    %1414 = vmatprep.subr.mxu0 0.0
    %1415 = vmatpush1.msra.mxu0 %v70
    %1416 = vmatprep.subr.mxu0 0.0
    %1417 = vmatpush1.msra.mxu0 %v73
    %1418 = vmatprep.subr.mxu0 0.0
    %1419 = vmatpush1.msra.mxu0 0.0
    %1420 = vmatprep.subr.mxu0 0.0
    %1421 = vmatpush1.msra.mxu0 0.0
    %1422 = vmatprep.subr.mxu0 0.0
    %1423 = vmatpush1.msra.mxu0 0.0
    %1424 = vmatprep.subr.mxu0 0.0
    %1425 = vmatpush1.msra.mxu0 0.0
    %1426 = vmatprep.subr.mxu0 0.0
    %1427 = vmatpush1.msra.mxu0 0.0
    %1428 = vmatprep.subr.mxu0 0.0
    %1429 = vmatpush1.msra.mxu0 0.0
    %1430 = vmatprep.subr.mxu0 0.0
    %1431 = vmatpush1.msra.mxu0 0.0
    %1432 = vmatprep.subr.mxu0 0.0
    %1433 = vmatpush1.msra.mxu0 0.0
    %1434 = vmatprep.subr.mxu0 0.0
    %1435 = vmatpush1.msra.mxu0 0.0
    %1436 = vmatprep.subr.mxu0 0.0
    %1437 = vmatpush1.msra.mxu0 0.0
    %1438 = vmatprep.subr.mxu0 0.0
    %1439 = vmatpush1.msra.mxu0 0.0
    %1440 = vmatprep.subr.mxu0 0.0
    %1441 = vmatpush1.msra.mxu0 0.0
    %1442 = vmatprep.subr.mxu0 0.0
    %1443 = vmatpush1.msra.mxu0 0.0
    %1444 = vmatprep.subr.mxu0 0.0
    %1445 = vmatpush1.msra.mxu0 0.0
    %1446 = vmatprep.subr.mxu0 0.0
    %1447 = vmatpush1.msra.mxu0 0.0
    %1448 = vmatprep.subr.mxu0 0.0
    %1449 = vmatpush1.msra.mxu0 0.0
    %1450 = vmatprep.subr.mxu0 0.0
    %1451 = vmatpush1.msra.mxu0 0.0
    %1452 = vmatprep.subr.mxu0 0.0
    %1453 = vmatpush1.msra.mxu0 0.0
    %1454 = vmatprep.subr.mxu0 0.0
    %1455 = vmatpush1.msra.mxu0 0.0
    %1456 = vmatprep.subr.mxu0 0.0
    %1457 = vmatpush1.msra.mxu0 0.0
    %1458 = vmatprep.subr.mxu0 0.0
    %1459 = vmatpush1.msra.mxu0 0.0
    %1460 = vmatprep.subr.mxu0 0.0
    %1461 = vmatpush1.msra.mxu0 0.0
    %1462 = vmatprep.subr.mxu0 0.0
    %1463 = vmatpush1.msra.mxu0 0.0
    %1464 = vmatprep.subr.mxu0 0.0
    %1465 = vmatpush1.msra.mxu0 0.0
    %1466 = vmatprep.subr.mxu0 0.0
    %1467 = vmatpush1.msra.mxu0 0.0
    %1468 = vmatprep.subr.mxu0 0.0
    %1469 = vmatpush1.msra.mxu0 0.0
    %1470 = vmatprep.subr.mxu0 0.0
    %1471 = vmatpush1.msra.mxu0 0.0
    %1472 = vmatprep.subr.mxu0 0.0
    %1473 = vmatpush1.msra.mxu0 0.0
    %1474 = vmatprep.subr.mxu0 0.0
    %1475 = vmatpush1.msra.mxu0 0.0
    %1476 = vmatprep.subr.mxu0 0.0
    %1477 = vmatpush1.msra.mxu0 0.0
    %1478 = vmatprep.mubr.f32.mxu0 0.0
    %1479 = vmatmul.mubr.f32.gmra.mrb[0].mxu0 %v1341
    %v1480 = vpop.f32.mrb[0].mxu0
    %v1481 = vadd.f32 %v135, %v1480
    %v1482 = vpop.f32.mrb[0].mxu0
    %1483 = vdwg.mxu0
    %1484 = vmatprep.subr.mxu0 0.0
    %1485 = vmatpush1.msra.mxu0 %v74
    %1486 = vmatprep.subr.mxu0 0.0
    %1487 = vmatpush1.msra.mxu0 %v75
    %1488 = vmatprep.subr.mxu0 0.0
    %1489 = vmatpush1.msra.mxu0 %v76
    %1490 = vmatprep.subr.mxu0 0.0
    %1491 = vmatpush1.msra.mxu0 %v77
    %1492 = vmatprep.subr.mxu0 0.0
    %1493 = vmatpush1.msra.mxu0 %v78
    %1494 = vmatprep.subr.mxu0 0.0
    %1495 = vmatpush1.msra.mxu0 %v79
    %1496 = vmatprep.subr.mxu0 0.0
    %1497 = vmatpush1.msra.mxu0 %v80
    %1498 = vmatprep.subr.mxu0 0.0
    %1499 = vmatpush1.msra.mxu0 %v81
    %1500 = vmatprep.subr.mxu0 0.0
    %1501 = vmatpush1.msra.mxu0 %v82
    %1502 = vmatprep.subr.mxu0 0.0
    %1503 = vmatpush1.msra.mxu0 %v83
    %1504 = vmatprep.subr.mxu0 0.0
    %1505 = vmatpush1.msra.mxu0 %v84
    %1506 = vmatprep.subr.mxu0 0.0
    %1507 = vmatpush1.msra.mxu0 %v85
    %1508 = vmatprep.subr.mxu0 0.0
    %1509 = vmatpush1.msra.mxu0 %v86
    %1510 = vmatprep.subr.mxu0 0.0
    %1511 = vmatpush1.msra.mxu0 %v87
    %1512 = vmatprep.subr.mxu0 0.0
    %1513 = vmatpush1.msra.mxu0 %v88
    %1514 = vmatprep.subr.mxu0 0.0
    %1515 = vmatpush1.msra.mxu0 %v89
    %1516 = vmatprep.subr.mxu0 0.0
    %1517 = vmatpush1.msra.mxu0 0.0
    %1518 = vmatprep.subr.mxu0 0.0
    %1519 = vmatpush1.msra.mxu0 0.0
    %1520 = vmatprep.subr.mxu0 0.0
    %1521 = vmatpush1.msra.mxu0 0.0
    %1522 = vmatprep.subr.mxu0 0.0
    %1523 = vmatpush1.msra.mxu0 0.0
    %1524 = vmatprep.subr.mxu0 0.0
    %1525 = vmatpush1.msra.mxu0 0.0
    %1526 = vmatprep.subr.mxu0 0.0
    %1527 = vmatpush1.msra.mxu0 0.0
    %1528 = vmatprep.subr.mxu0 0.0
    %1529 = vmatpush1.msra.mxu0 0.0
    %1530 = vmatprep.subr.mxu0 0.0
    %1531 = vmatpush1.msra.mxu0 0.0
    %1532 = vmatprep.subr.mxu0 0.0
    %1533 = vmatpush1.msra.mxu0 0.0
    %1534 = vmatprep.subr.mxu0 0.0
    %1535 = vmatpush1.msra.mxu0 0.0
    %1536 = vmatprep.subr.mxu0 0.0
    %1537 = vmatpush1.msra.mxu0 0.0
    %1538 = vmatprep.subr.mxu0 0.0
    %1539 = vmatpush1.msra.mxu0 0.0
    %1540 = vmatprep.subr.mxu0 0.0
    %1541 = vmatpush1.msra.mxu0 0.0
    %1542 = vmatprep.subr.mxu0 0.0
    %1543 = vmatpush1.msra.mxu0 0.0
    %1544 = vmatprep.subr.mxu0 0.0
    %1545 = vmatpush1.msra.mxu0 0.0
    %1546 = vmatprep.subr.mxu0 0.0
    %1547 = vmatpush1.msra.mxu0 0.0
    %1548 = vmatprep.mubr.f32.mxu0 0.0
    %1549 = vmatmul.mubr.f32.gmra.mrb[0].mxu0 %v1326
    %v1550 = vpop.f32.mrb[0].mxu0
    %v1551 = vadd.f32 0.0, %v1550
    %v1552 = vpop.f32.mrb[0].mxu0
    %1553 = vdwg.mxu0
    %1554 = vmatprep.subr.mxu0 0.0
    %1555 = vmatpush1.msra.mxu0 %v90
    %1556 = vmatprep.subr.mxu0 0.0
    %1557 = vmatpush1.msra.mxu0 %v91
    %1558 = vmatprep.subr.mxu0 0.0
    %1559 = vmatpush1.msra.mxu0 %v92
    %1560 = vmatprep.subr.mxu0 0.0
    %1561 = vmatpush1.msra.mxu0 %v93
    %1562 = vmatprep.subr.mxu0 0.0
    %1563 = vmatpush1.msra.mxu0 %v94
    %1564 = vmatprep.subr.mxu0 0.0
    %1565 = vmatpush1.msra.mxu0 %v95
    %1566 = vmatprep.subr.mxu0 0.0
    %1567 = vmatpush1.msra.mxu0 %v96
    %1568 = vmatprep.subr.mxu0 0.0
    %1569 = vmatpush1.msra.mxu0 %v97
    %1570 = vmatprep.subr.mxu0 0.0
    %1571 = vmatpush1.msra.mxu0 %v98
    %1572 = vmatprep.subr.mxu0 0.0
    %1573 = vmatpush1.msra.mxu0 %v99
    %1574 = vmatprep.subr.mxu0 0.0
    %1575 = vmatpush1.msra.mxu0 %v100
    %1576 = vmatprep.subr.mxu0 0.0
    %1577 = vmatpush1.msra.mxu0 %v101
    %1578 = vmatprep.subr.mxu0 0.0
    %1579 = vmatpush1.msra.mxu0 %v102
    %1580 = vmatprep.subr.mxu0 0.0
    %1581 = vmatpush1.msra.mxu0 %v103
    %1582 = vmatprep.subr.mxu0 0.0
    %1583 = vmatpush1.msra.mxu0 %v104
    %1584 = vmatprep.subr.mxu0 0.0
    %1585 = vmatpush1.msra.mxu0 %v105
    %1586 = vmatprep.subr.mxu0 0.0
    %1587 = vmatpush1.msra.mxu0 0.0
    %1588 = vmatprep.subr.mxu0 0.0
    %1589 = vmatpush1.msra.mxu0 0.0
    %1590 = vmatprep.subr.mxu0 0.0
    %1591 = vmatpush1.msra.mxu0 0.0
    %1592 = vmatprep.subr.mxu0 0.0
    %1593 = vmatpush1.msra.mxu0 0.0
    %1594 = vmatprep.subr.mxu0 0.0
    %1595 = vmatpush1.msra.mxu0 0.0
    %1596 = vmatprep.subr.mxu0 0.0
    %1597 = vmatpush1.msra.mxu0 0.0
    %1598 = vmatprep.subr.mxu0 0.0
    %1599 = vmatpush1.msra.mxu0 0.0
    %1600 = vmatprep.subr.mxu0 0.0
    %1601 = vmatpush1.msra.mxu0 0.0
    %1602 = vmatprep.subr.mxu0 0.0
    %1603 = vmatpush1.msra.mxu0 0.0
    %1604 = vmatprep.subr.mxu0 0.0
    %1605 = vmatpush1.msra.mxu0 0.0
    %1606 = vmatprep.subr.mxu0 0.0
    %1607 = vmatpush1.msra.mxu0 0.0
    %1608 = vmatprep.subr.mxu0 0.0
    %1609 = vmatpush1.msra.mxu0 0.0
    %1610 = vmatprep.subr.mxu0 0.0
    %1611 = vmatpush1.msra.mxu0 0.0
    %1612 = vmatprep.subr.mxu0 0.0
    %1613 = vmatpush1.msra.mxu0 0.0
    %1614 = vmatprep.subr.mxu0 0.0
    %1615 = vmatpush1.msra.mxu0 0.0
    %1616 = vmatprep.subr.mxu0 0.0
    %1617 = vmatpush1.msra.mxu0 0.0
    %1618 = vmatprep.mubr.f32.mxu0 0.0
    %1619 = vmatmul.mubr.f32.gmra.mrb[0].mxu0 %v1326
    %v1620 = vpop.f32.mrb[0].mxu0
    %v1621 = vadd.f32 0.0, %v1620
    %v1622 = vpop.f32.mrb[0].mxu0
    %1623 = vdwg.mxu0
    %v1624 = vadd.f32 %v1410, %v1551
    %v1625 = vxor.u32 %v1624, 2147483648
    %v1626 = vmul.f32 %v1625, 1.442695
    %v1627 = vpow.pop %v1626
    %v1628 = vadd.f32 %v1627, 1.0
    %v1629 = vrcp.pop %v1628
    %v1630 = vmul.f32 1.0, %v1629
    %v1631 = vadd.f32 %v1412, %v1621
    %v1632 = vxor.u32 %v1631, 2147483648
    %v1633 = vmul.f32 %v1632, 1.442695
    %v1634 = vpow.pop %v1633
    %v1635 = vadd.f32 %v1634, 1.0
    %v1636 = vrcp.pop %v1635
    %v1637 = vmul.f32 1.0, %v1636
    %1638 = vmatprep.subr.mxu0 0.0
    %1639 = vmatpush1.msra.mxu0 %v106
    %1640 = vmatprep.subr.mxu0 0.0
    %1641 = vmatpush1.msra.mxu0 %v107
    %1642 = vmatprep.subr.mxu0 0.0
    %1643 = vmatpush1.msra.mxu0 %v108
    %1644 = vmatprep.subr.mxu0 0.0
    %1645 = vmatpush1.msra.mxu0 %v109
    %1646 = vmatprep.subr.mxu0 0.0
    %1647 = vmatpush1.msra.mxu0 %v110
    %1648 = vmatprep.subr.mxu0 0.0
    %1649 = vmatpush1.msra.mxu0 %v111
    %1650 = vmatprep.subr.mxu0 0.0
    %1651 = vmatpush1.msra.mxu0 %v112
    %1652 = vmatprep.subr.mxu0 0.0
    %1653 = vmatpush1.msra.mxu0 %v113
    %1654 = vmatprep.subr.mxu0 0.0
    %1655 = vmatpush1.msra.mxu0 %v114
    %1656 = vmatprep.subr.mxu0 0.0
    %1657 = vmatpush1.msra.mxu0 %v115
    %1658 = vmatprep.subr.mxu0 0.0
    %1659 = vmatpush1.msra.mxu0 %v116
    %1660 = vmatprep.subr.mxu0 0.0
    %1661 = vmatpush1.msra.mxu0 %v117
    %1662 = vmatprep.subr.mxu0 0.0
    %1663 = vmatpush1.msra.mxu0 %v118
    %1664 = vmatprep.subr.mxu0 0.0
    %1665 = vmatpush1.msra.mxu0 %v119
    %1666 = vmatprep.subr.mxu0 0.0
    %1667 = vmatpush1.msra.mxu0 %v120
    %1668 = vmatprep.subr.mxu0 0.0
    %1669 = vmatpush1.msra.mxu0 %v121
    %1670 = vmatprep.subr.mxu0 0.0
    %1671 = vmatpush1.msra.mxu0 0.0
    %1672 = vmatprep.subr.mxu0 0.0
    %1673 = vmatpush1.msra.mxu0 0.0
    %1674 = vmatprep.subr.mxu0 0.0
    %1675 = vmatpush1.msra.mxu0 0.0
    %1676 = vmatprep.subr.mxu0 0.0
    %1677 = vmatpush1.msra.mxu0 0.0
    %1678 = vmatprep.subr.mxu0 0.0
    %1679 = vmatpush1.msra.mxu0 0.0
    %1680 = vmatprep.subr.mxu0 0.0
    %1681 = vmatpush1.msra.mxu0 0.0
    %1682 = vmatprep.subr.mxu0 0.0
    %1683 = vmatpush1.msra.mxu0 0.0
    %1684 = vmatprep.subr.mxu0 0.0
    %1685 = vmatpush1.msra.mxu0 0.0
    %1686 = vmatprep.subr.mxu0 0.0
    %1687 = vmatpush1.msra.mxu0 0.0
    %1688 = vmatprep.subr.mxu0 0.0
    %1689 = vmatpush1.msra.mxu0 0.0
    %1690 = vmatprep.subr.mxu0 0.0
    %1691 = vmatpush1.msra.mxu0 0.0
    %1692 = vmatprep.subr.mxu0 0.0
    %1693 = vmatpush1.msra.mxu0 0.0
    %1694 = vmatprep.subr.mxu0 0.0
    %1695 = vmatpush1.msra.mxu0 0.0
    %1696 = vmatprep.subr.mxu0 0.0
    %1697 = vmatpush1.msra.mxu0 0.0
    %1698 = vmatprep.subr.mxu0 0.0
    %1699 = vmatpush1.msra.mxu0 0.0
    %1700 = vmatprep.subr.mxu0 0.0
    %1701 = vmatpush1.msra.mxu0 0.0
    %1702 = vmatprep.mubr.f32.mxu0 0.0
    %1703 = vmatmul.mubr.f32.gmra.mrb[0].mxu0 %v1326
    %v1704 = vpop.f32.mrb[0].mxu0
    %v1705 = vadd.f32 %v144, %v1704
    %v1706 = vpop.f32.mrb[0].mxu0
    %1707 = vdwg.mxu0
    %v1708 = vmul.f32 %v1630, %v1705
    %v1709 = vadd.f32 %v1481, %v1708
    %v1710 = vtanh.pop %v1709
    %v1711 = vsub.f32 1.0, %v1637
    %v1712 = vmul.f32 %v1711, %v1710
    %v1713 = vmul.f32 %v1637, %v1326
    %v1714 = vadd.f32 %v1712, %v1713
    %v1715 = vrot.slane %v60, 4
    %v1716 = vrot.slane %v61, 3
    %v1717 = vsel %vm156, %v1716, %v1715
    %v1718 = vrot.slane %v62, 2
    %v1719 = vsel %vm159, %v1718, %v1717
    %v1720 = vrot.slane %v63, 1
    %v1721 = vsel %vm162, %v1720, %v1719
    %v1722 = vsel %vm165, %v64, %v1721
    %v1723 = vrot.slane %v65, 7
    %v1724 = vsel %vm168, %v1723, %v1722
    %v1725 = vrot.slane %v66, 6
    %v1726 = vsel %vm171, %v1725, %v1724
    %v1727 = vrot.slane %v67, 5
    %v1728 = vsel %vm174, %v1727, %v1726
    %v1729 = vsel %vm176, %v1728, 0
    %1731 = vmatprep.subr.mxu0 %v69
    %1732 = vmatpush1.msra.mxu0 %v68
    %1733 = vmatprep.subr.mxu0 %v72
    %1734 = vmatpush1.msra.mxu0 %v71
    %1735 = vmatprep.subr.mxu0 0.0
    %1736 = vmatpush1.msra.mxu0 0.0
    %1737 = vmatprep.subr.mxu0 0.0
    %1738 = vmatpush1.msra.mxu0 0.0
    %1739 = vmatprep.subr.mxu0 0.0
    %1740 = vmatpush1.msra.mxu0 0.0
    %1741 = vmatprep.subr.mxu0 0.0
    %1742 = vmatpush1.msra.mxu0 0.0
    %1743 = vmatprep.subr.mxu0 0.0
    %1744 = vmatpush1.msra.mxu0 0.0
    %1745 = vmatprep.subr.mxu0 0.0
    %1746 = vmatpush1.msra.mxu0 0.0
    %1747 = vmatprep.subr.mxu0 0.0
    %1748 = vmatpush1.msra.mxu0 0.0
    %1749 = vmatprep.subr.mxu0 0.0
    %1750 = vmatpush1.msra.mxu0 0.0
    %1751 = vmatprep.subr.mxu0 0.0
    %1752 = vmatpush1.msra.mxu0 0.0
    %1753 = vmatprep.subr.mxu0 0.0
    %1754 = vmatpush1.msra.mxu0 0.0
    %1755 = vmatprep.subr.mxu0 0.0
    %1756 = vmatpush1.msra.mxu0 0.0
    %1757 = vmatprep.subr.mxu0 0.0
    %1758 = vmatpush1.msra.mxu0 0.0
    %1759 = vmatprep.subr.mxu0 0.0
    %1760 = vmatpush1.msra.mxu0 0.0
    %1761 = vmatprep.subr.mxu0 0.0
    %1762 = vmatpush1.msra.mxu0 0.0
    %1763 = vmatprep.subr.mxu0 0.0
    %1764 = vmatpush1.msra.mxu0 0.0
    %1765 = vmatprep.subr.mxu0 0.0
    %1766 = vmatpush1.msra.mxu0 0.0
    %1767 = vmatprep.subr.mxu0 0.0
    %1768 = vmatpush1.msra.mxu0 0.0
    %1769 = vmatprep.subr.mxu0 0.0
    %1770 = vmatpush1.msra.mxu0 0.0
    %1771 = vmatprep.subr.mxu0 0.0
    %1772 = vmatpush1.msra.mxu0 0.0
    %1773 = vmatprep.subr.mxu0 0.0
    %1774 = vmatpush1.msra.mxu0 0.0
    %1775 = vmatprep.subr.mxu0 0.0
    %1776 = vmatpush1.msra.mxu0 0.0
    %1777 = vmatprep.subr.mxu0 0.0
    %1778 = vmatpush1.msra.mxu0 0.0
    %1779 = vmatprep.subr.mxu0 0.0
    %1780 = vmatpush1.msra.mxu0 0.0
    %1781 = vmatprep.subr.mxu0 0.0
    %1782 = vmatpush1.msra.mxu0 0.0
    %1783 = vmatprep.subr.mxu0 0.0
    %1784 = vmatpush1.msra.mxu0 0.0
    %1785 = vmatprep.subr.mxu0 0.0
    %1786 = vmatpush1.msra.mxu0 0.0
    %1787 = vmatprep.subr.mxu0 0.0
    %1788 = vmatpush1.msra.mxu0 0.0
    %1789 = vmatprep.subr.mxu0 0.0
    %1790 = vmatpush1.msra.mxu0 0.0
    %1791 = vmatprep.subr.mxu0 0.0
    %1792 = vmatpush1.msra.mxu0 0.0
    %1793 = vmatprep.subr.mxu0 0.0
    %1794 = vmatpush1.msra.mxu0 0.0
    %1795 = vmatprep.mubr.f32.mxu0 0.0
    %1796 = vmatmul.mubr.f32.gmra.mrb[0].mxu0 %v1729
    %v1797 = vpop.f32.mrb[0].mxu0
    %v1798 = vadd.f32 %v127, %v1797
    %v1799 = vpop.f32.mrb[0].mxu0
    %v1800 = vadd.f32 %v131, %v1799
    %1801 = vdwg.mxu0
    %1802 = vmatprep.subr.mxu0 0.0
    %1803 = vmatpush1.msra.mxu0 %v70
    %1804 = vmatprep.subr.mxu0 0.0
    %1805 = vmatpush1.msra.mxu0 %v73
    %1806 = vmatprep.subr.mxu0 0.0
    %1807 = vmatpush1.msra.mxu0 0.0
    %1808 = vmatprep.subr.mxu0 0.0
    %1809 = vmatpush1.msra.mxu0 0.0
    %1810 = vmatprep.subr.mxu0 0.0
    %1811 = vmatpush1.msra.mxu0 0.0
    %1812 = vmatprep.subr.mxu0 0.0
    %1813 = vmatpush1.msra.mxu0 0.0
    %1814 = vmatprep.subr.mxu0 0.0
    %1815 = vmatpush1.msra.mxu0 0.0
    %1816 = vmatprep.subr.mxu0 0.0
    %1817 = vmatpush1.msra.mxu0 0.0
    %1818 = vmatprep.subr.mxu0 0.0
    %1819 = vmatpush1.msra.mxu0 0.0
    %1820 = vmatprep.subr.mxu0 0.0
    %1821 = vmatpush1.msra.mxu0 0.0
    %1822 = vmatprep.subr.mxu0 0.0
    %1823 = vmatpush1.msra.mxu0 0.0
    %1824 = vmatprep.subr.mxu0 0.0
    %1825 = vmatpush1.msra.mxu0 0.0
    %1826 = vmatprep.subr.mxu0 0.0
    %1827 = vmatpush1.msra.mxu0 0.0
    %1828 = vmatprep.subr.mxu0 0.0
    %1829 = vmatpush1.msra.mxu0 0.0
    %1830 = vmatprep.subr.mxu0 0.0
    %1831 = vmatpush1.msra.mxu0 0.0
    %1832 = vmatprep.subr.mxu0 0.0
    %1833 = vmatpush1.msra.mxu0 0.0
    %1834 = vmatprep.subr.mxu0 0.0
    %1835 = vmatpush1.msra.mxu0 0.0
    %1836 = vmatprep.subr.mxu0 0.0
    %1837 = vmatpush1.msra.mxu0 0.0
    %1838 = vmatprep.subr.mxu0 0.0
    %1839 = vmatpush1.msra.mxu0 0.0
    %1840 = vmatprep.subr.mxu0 0.0
    %1841 = vmatpush1.msra.mxu0 0.0
    %1842 = vmatprep.subr.mxu0 0.0
    %1843 = vmatpush1.msra.mxu0 0.0
    %1844 = vmatprep.subr.mxu0 0.0
    %1845 = vmatpush1.msra.mxu0 0.0
    %1846 = vmatprep.subr.mxu0 0.0
    %1847 = vmatpush1.msra.mxu0 0.0
    %1848 = vmatprep.subr.mxu0 0.0
    %1849 = vmatpush1.msra.mxu0 0.0
    %1850 = vmatprep.subr.mxu0 0.0
    %1851 = vmatpush1.msra.mxu0 0.0
    %1852 = vmatprep.subr.mxu0 0.0
    %1853 = vmatpush1.msra.mxu0 0.0
    %1854 = vmatprep.subr.mxu0 0.0
    %1855 = vmatpush1.msra.mxu0 0.0
    %1856 = vmatprep.subr.mxu0 0.0
    %1857 = vmatpush1.msra.mxu0 0.0
    %1858 = vmatprep.subr.mxu0 0.0
    %1859 = vmatpush1.msra.mxu0 0.0
    %1860 = vmatprep.subr.mxu0 0.0
    %1861 = vmatpush1.msra.mxu0 0.0
    %1862 = vmatprep.subr.mxu0 0.0
    %1863 = vmatpush1.msra.mxu0 0.0
    %1864 = vmatprep.subr.mxu0 0.0
    %1865 = vmatpush1.msra.mxu0 0.0
    %1866 = vmatprep.mubr.f32.mxu0 0.0
    %1867 = vmatmul.mubr.f32.gmra.mrb[0].mxu0 %v1729
    %v1868 = vpop.f32.mrb[0].mxu0
    %v1869 = vadd.f32 %v135, %v1868
    %v1870 = vpop.f32.mrb[0].mxu0
    %1871 = vdwg.mxu0
    %1872 = vmatprep.subr.mxu0 0.0
    %1873 = vmatpush1.msra.mxu0 %v74
    %1874 = vmatprep.subr.mxu0 0.0
    %1875 = vmatpush1.msra.mxu0 %v75
    %1876 = vmatprep.subr.mxu0 0.0
    %1877 = vmatpush1.msra.mxu0 %v76
    %1878 = vmatprep.subr.mxu0 0.0
    %1879 = vmatpush1.msra.mxu0 %v77
    %1880 = vmatprep.subr.mxu0 0.0
    %1881 = vmatpush1.msra.mxu0 %v78
    %1882 = vmatprep.subr.mxu0 0.0
    %1883 = vmatpush1.msra.mxu0 %v79
    %1884 = vmatprep.subr.mxu0 0.0
    %1885 = vmatpush1.msra.mxu0 %v80
    %1886 = vmatprep.subr.mxu0 0.0
    %1887 = vmatpush1.msra.mxu0 %v81
    %1888 = vmatprep.subr.mxu0 0.0
    %1889 = vmatpush1.msra.mxu0 %v82
    %1890 = vmatprep.subr.mxu0 0.0
    %1891 = vmatpush1.msra.mxu0 %v83
    %1892 = vmatprep.subr.mxu0 0.0
    %1893 = vmatpush1.msra.mxu0 %v84
    %1894 = vmatprep.subr.mxu0 0.0
    %1895 = vmatpush1.msra.mxu0 %v85
    %1896 = vmatprep.subr.mxu0 0.0
    %1897 = vmatpush1.msra.mxu0 %v86
    %1898 = vmatprep.subr.mxu0 0.0
    %1899 = vmatpush1.msra.mxu0 %v87
    %1900 = vmatprep.subr.mxu0 0.0
    %1901 = vmatpush1.msra.mxu0 %v88
    %1902 = vmatprep.subr.mxu0 0.0
    %1903 = vmatpush1.msra.mxu0 %v89
    %1904 = vmatprep.subr.mxu0 0.0
    %1905 = vmatpush1.msra.mxu0 0.0
    %1906 = vmatprep.subr.mxu0 0.0
    %1907 = vmatpush1.msra.mxu0 0.0
    %1908 = vmatprep.subr.mxu0 0.0
    %1909 = vmatpush1.msra.mxu0 0.0
    %1910 = vmatprep.subr.mxu0 0.0
    %1911 = vmatpush1.msra.mxu0 0.0
    %1912 = vmatprep.subr.mxu0 0.0
    %1913 = vmatpush1.msra.mxu0 0.0
    %1914 = vmatprep.subr.mxu0 0.0
    %1915 = vmatpush1.msra.mxu0 0.0
    %1916 = vmatprep.subr.mxu0 0.0
    %1917 = vmatpush1.msra.mxu0 0.0
    %1918 = vmatprep.subr.mxu0 0.0
    %1919 = vmatpush1.msra.mxu0 0.0
    %1920 = vmatprep.subr.mxu0 0.0
    %1921 = vmatpush1.msra.mxu0 0.0
    %1922 = vmatprep.subr.mxu0 0.0
    %1923 = vmatpush1.msra.mxu0 0.0
    %1924 = vmatprep.subr.mxu0 0.0
    %1925 = vmatpush1.msra.mxu0 0.0
    %1926 = vmatprep.subr.mxu0 0.0
    %1927 = vmatpush1.msra.mxu0 0.0
    %1928 = vmatprep.subr.mxu0 0.0
    %1929 = vmatpush1.msra.mxu0 0.0
    %1930 = vmatprep.subr.mxu0 0.0
    %1931 = vmatpush1.msra.mxu0 0.0
    %1932 = vmatprep.subr.mxu0 0.0
    %1933 = vmatpush1.msra.mxu0 0.0
    %1934 = vmatprep.subr.mxu0 0.0
    %1935 = vmatpush1.msra.mxu0 0.0
    %1936 = vmatprep.mubr.f32.mxu0 0.0
    %1937 = vmatmul.mubr.f32.gmra.mrb[0].mxu0 %v1714
    %v1938 = vpop.f32.mrb[0].mxu0
    %v1939 = vadd.f32 0.0, %v1938
    %v1940 = vpop.f32.mrb[0].mxu0
    %1941 = vdwg.mxu0
    %1942 = vmatprep.subr.mxu0 0.0
    %1943 = vmatpush1.msra.mxu0 %v90
    %1944 = vmatprep.subr.mxu0 0.0
    %1945 = vmatpush1.msra.mxu0 %v91
    %1946 = vmatprep.subr.mxu0 0.0
    %1947 = vmatpush1.msra.mxu0 %v92
    %1948 = vmatprep.subr.mxu0 0.0
    %1949 = vmatpush1.msra.mxu0 %v93
    %1950 = vmatprep.subr.mxu0 0.0
    %1951 = vmatpush1.msra.mxu0 %v94
    %1952 = vmatprep.subr.mxu0 0.0
    %1953 = vmatpush1.msra.mxu0 %v95
    %1954 = vmatprep.subr.mxu0 0.0
    %1955 = vmatpush1.msra.mxu0 %v96
    %1956 = vmatprep.subr.mxu0 0.0
    %1957 = vmatpush1.msra.mxu0 %v97
    %1958 = vmatprep.subr.mxu0 0.0
    %1959 = vmatpush1.msra.mxu0 %v98
    %1960 = vmatprep.subr.mxu0 0.0
    %1961 = vmatpush1.msra.mxu0 %v99
    %1962 = vmatprep.subr.mxu0 0.0
    %1963 = vmatpush1.msra.mxu0 %v100
    %1964 = vmatprep.subr.mxu0 0.0
    %1965 = vmatpush1.msra.mxu0 %v101
    %1966 = vmatprep.subr.mxu0 0.0
    %1967 = vmatpush1.msra.mxu0 %v102
    %1968 = vmatprep.subr.mxu0 0.0
    %1969 = vmatpush1.msra.mxu0 %v103
    %1970 = vmatprep.subr.mxu0 0.0
    %1971 = vmatpush1.msra.mxu0 %v104
    %1972 = vmatprep.subr.mxu0 0.0
    %1973 = vmatpush1.msra.mxu0 %v105
    %1974 = vmatprep.subr.mxu0 0.0
    %1975 = vmatpush1.msra.mxu0 0.0
    %1976 = vmatprep.subr.mxu0 0.0
    %1977 = vmatpush1.msra.mxu0 0.0
    %1978 = vmatprep.subr.mxu0 0.0
    %1979 = vmatpush1.msra.mxu0 0.0
    %1980 = vmatprep.subr.mxu0 0.0
    %1981 = vmatpush1.msra.mxu0 0.0
    %1982 = vmatprep.subr.mxu0 0.0
    %1983 = vmatpush1.msra.mxu0 0.0
    %1984 = vmatprep.subr.mxu0 0.0
    %1985 = vmatpush1.msra.mxu0 0.0
    %1986 = vmatprep.subr.mxu0 0.0
    %1987 = vmatpush1.msra.mxu0 0.0
    %1988 = vmatprep.subr.mxu0 0.0
    %1989 = vmatpush1.msra.mxu0 0.0
    %1990 = vmatprep.subr.mxu0 0.0
    %1991 = vmatpush1.msra.mxu0 0.0
    %1992 = vmatprep.subr.mxu0 0.0
    %1993 = vmatpush1.msra.mxu0 0.0
    %1994 = vmatprep.subr.mxu0 0.0
    %1995 = vmatpush1.msra.mxu0 0.0
    %1996 = vmatprep.subr.mxu0 0.0
    %1997 = vmatpush1.msra.mxu0 0.0
    %1998 = vmatprep.subr.mxu0 0.0
    %1999 = vmatpush1.msra.mxu0 0.0
    %2000 = vmatprep.subr.mxu0 0.0
    %2001 = vmatpush1.msra.mxu0 0.0
    %2002 = vmatprep.subr.mxu0 0.0
    %2003 = vmatpush1.msra.mxu0 0.0
    %2004 = vmatprep.subr.mxu0 0.0
    %2005 = vmatpush1.msra.mxu0 0.0
    %2006 = vmatprep.mubr.f32.mxu0 0.0
    %2007 = vmatmul.mubr.f32.gmra.mrb[0].mxu0 %v1714
    %v2008 = vpop.f32.mrb[0].mxu0
    %v2009 = vadd.f32 0.0, %v2008
    %v2010 = vpop.f32.mrb[0].mxu0
    %2011 = vdwg.mxu0
    %v2012 = vadd.f32 %v1798, %v1939
    %v2013 = vxor.u32 %v2012, 2147483648
    %v2014 = vmul.f32 %v2013, 1.442695
    %v2015 = vpow.pop %v2014
    %v2016 = vadd.f32 %v2015, 1.0
    %v2017 = vrcp.pop %v2016
    %v2018 = vmul.f32 1.0, %v2017
    %v2019 = vadd.f32 %v1800, %v2009
    %v2020 = vxor.u32 %v2019, 2147483648
    %v2021 = vmul.f32 %v2020, 1.442695
    %v2022 = vpow.pop %v2021
    %v2023 = vadd.f32 %v2022, 1.0
    %v2024 = vrcp.pop %v2023
    %v2025 = vmul.f32 1.0, %v2024
    %2026 = vmatprep.subr.mxu0 0.0
    %2027 = vmatpush1.msra.mxu0 %v106
    %2028 = vmatprep.subr.mxu0 0.0
    %2029 = vmatpush1.msra.mxu0 %v107
    %2030 = vmatprep.subr.mxu0 0.0
    %2031 = vmatpush1.msra.mxu0 %v108
    %2032 = vmatprep.subr.mxu0 0.0
    %2033 = vmatpush1.msra.mxu0 %v109
    %2034 = vmatprep.subr.mxu0 0.0
    %2035 = vmatpush1.msra.mxu0 %v110
    %2036 = vmatprep.subr.mxu0 0.0
    %2037 = vmatpush1.msra.mxu0 %v111
    %2038 = vmatprep.subr.mxu0 0.0
    %2039 = vmatpush1.msra.mxu0 %v112
    %2040 = vmatprep.subr.mxu0 0.0
    %2041 = vmatpush1.msra.mxu0 %v113
    %2042 = vmatprep.subr.mxu0 0.0
    %2043 = vmatpush1.msra.mxu0 %v114
    %2044 = vmatprep.subr.mxu0 0.0
    %2045 = vmatpush1.msra.mxu0 %v115
    %2046 = vmatprep.subr.mxu0 0.0
    %2047 = vmatpush1.msra.mxu0 %v116
    %2048 = vmatprep.subr.mxu0 0.0
    %2049 = vmatpush1.msra.mxu0 %v117
    %2050 = vmatprep.subr.mxu0 0.0
    %2051 = vmatpush1.msra.mxu0 %v118
    %2052 = vmatprep.subr.mxu0 0.0
    %2053 = vmatpush1.msra.mxu0 %v119
    %2054 = vmatprep.subr.mxu0 0.0
    %2055 = vmatpush1.msra.mxu0 %v120
    %2056 = vmatprep.subr.mxu0 0.0
    %2057 = vmatpush1.msra.mxu0 %v121
    %2058 = vmatprep.subr.mxu0 0.0
    %2059 = vmatpush1.msra.mxu0 0.0
    %2060 = vmatprep.subr.mxu0 0.0
    %2061 = vmatpush1.msra.mxu0 0.0
    %2062 = vmatprep.subr.mxu0 0.0
    %2063 = vmatpush1.msra.mxu0 0.0
    %2064 = vmatprep.subr.mxu0 0.0
    %2065 = vmatpush1.msra.mxu0 0.0
    %2066 = vmatprep.subr.mxu0 0.0
    %2067 = vmatpush1.msra.mxu0 0.0
    %2068 = vmatprep.subr.mxu0 0.0
    %2069 = vmatpush1.msra.mxu0 0.0
    %2070 = vmatprep.subr.mxu0 0.0
    %2071 = vmatpush1.msra.mxu0 0.0
    %2072 = vmatprep.subr.mxu0 0.0
    %2073 = vmatpush1.msra.mxu0 0.0
    %2074 = vmatprep.subr.mxu0 0.0
    %2075 = vmatpush1.msra.mxu0 0.0
    %2076 = vmatprep.subr.mxu0 0.0
    %2077 = vmatpush1.msra.mxu0 0.0
    %2078 = vmatprep.subr.mxu0 0.0
    %2079 = vmatpush1.msra.mxu0 0.0
    %2080 = vmatprep.subr.mxu0 0.0
    %2081 = vmatpush1.msra.mxu0 0.0
    %2082 = vmatprep.subr.mxu0 0.0
    %2083 = vmatpush1.msra.mxu0 0.0
    %2084 = vmatprep.subr.mxu0 0.0
    %2085 = vmatpush1.msra.mxu0 0.0
    %2086 = vmatprep.subr.mxu0 0.0
    %2087 = vmatpush1.msra.mxu0 0.0
    %2088 = vmatprep.subr.mxu0 0.0
    %2089 = vmatpush1.msra.mxu0 0.0
    %2090 = vmatprep.mubr.f32.mxu0 0.0
    %2091 = vmatmul.mubr.f32.gmra.mrb[0].mxu0 %v1714
    %v2092 = vpop.f32.mrb[0].mxu0
    %v2093 = vadd.f32 %v144, %v2092
    %v2094 = vpop.f32.mrb[0].mxu0
    %2095 = vdwg.mxu0
    %v2096 = vmul.f32 %v2018, %v2093
    %v2097 = vadd.f32 %v1869, %v2096
    %v2098 = vtanh.pop %v2097
    %v2099 = vsub.f32 1.0, %v2025
    %v2100 = vmul.f32 %v2099, %v2098
    %v2101 = vmul.f32 %v2025, %v1714
    %v2102 = vadd.f32 %v2100, %v2101
    %v2103 = vrot.slane %v60, 5
    %v2104 = vrot.slane %v61, 4
    %v2105 = vsel %vm156, %v2104, %v2103
    %v2106 = vrot.slane %v62, 3
    %v2107 = vsel %vm159, %v2106, %v2105
    %v2108 = vrot.slane %v63, 2
    %v2109 = vsel %vm162, %v2108, %v2107
    %v2110 = vrot.slane %v64, 1
    %v2111 = vsel %vm165, %v2110, %v2109
    %v2112 = vsel %vm168, %v65, %v2111
    %v2113 = vrot.slane %v66, 7
    %v2114 = vsel %vm171, %v2113, %v2112
    %v2115 = vrot.slane %v67, 6
    %v2116 = vsel %vm174, %v2115, %v2114
    %v2117 = vsel %vm176, %v2116, 0
    %2119 = vmatprep.subr.mxu0 %v69
    %2120 = vmatpush1.msra.mxu0 %v68
    %2121 = vmatprep.subr.mxu0 %v72
    %2122 = vmatpush1.msra.mxu0 %v71
    %2123 = vmatprep.subr.mxu0 0.0
    %2124 = vmatpush1.msra.mxu0 0.0
    %2125 = vmatprep.subr.mxu0 0.0
    %2126 = vmatpush1.msra.mxu0 0.0
    %2127 = vmatprep.subr.mxu0 0.0
    %2128 = vmatpush1.msra.mxu0 0.0
    %2129 = vmatprep.subr.mxu0 0.0
    %2130 = vmatpush1.msra.mxu0 0.0
    %2131 = vmatprep.subr.mxu0 0.0
    %2132 = vmatpush1.msra.mxu0 0.0
    %2133 = vmatprep.subr.mxu0 0.0
    %2134 = vmatpush1.msra.mxu0 0.0
    %2135 = vmatprep.subr.mxu0 0.0
    %2136 = vmatpush1.msra.mxu0 0.0
    %2137 = vmatprep.subr.mxu0 0.0
    %2138 = vmatpush1.msra.mxu0 0.0
    %2139 = vmatprep.subr.mxu0 0.0
    %2140 = vmatpush1.msra.mxu0 0.0
    %2141 = vmatprep.subr.mxu0 0.0
    %2142 = vmatpush1.msra.mxu0 0.0
    %2143 = vmatprep.subr.mxu0 0.0
    %2144 = vmatpush1.msra.mxu0 0.0
    %2145 = vmatprep.subr.mxu0 0.0
    %2146 = vmatpush1.msra.mxu0 0.0
    %2147 = vmatprep.subr.mxu0 0.0
    %2148 = vmatpush1.msra.mxu0 0.0
    %2149 = vmatprep.subr.mxu0 0.0
    %2150 = vmatpush1.msra.mxu0 0.0
    %2151 = vmatprep.subr.mxu0 0.0
    %2152 = vmatpush1.msra.mxu0 0.0
    %2153 = vmatprep.subr.mxu0 0.0
    %2154 = vmatpush1.msra.mxu0 0.0
    %2155 = vmatprep.subr.mxu0 0.0
    %2156 = vmatpush1.msra.mxu0 0.0
    %2157 = vmatprep.subr.mxu0 0.0
    %2158 = vmatpush1.msra.mxu0 0.0
    %2159 = vmatprep.subr.mxu0 0.0
    %2160 = vmatpush1.msra.mxu0 0.0
    %2161 = vmatprep.subr.mxu0 0.0
    %2162 = vmatpush1.msra.mxu0 0.0
    %2163 = vmatprep.subr.mxu0 0.0
    %2164 = vmatpush1.msra.mxu0 0.0
    %2165 = vmatprep.subr.mxu0 0.0
    %2166 = vmatpush1.msra.mxu0 0.0
    %2167 = vmatprep.subr.mxu0 0.0
    %2168 = vmatpush1.msra.mxu0 0.0
    %2169 = vmatprep.subr.mxu0 0.0
    %2170 = vmatpush1.msra.mxu0 0.0
    %2171 = vmatprep.subr.mxu0 0.0
    %2172 = vmatpush1.msra.mxu0 0.0
    %2173 = vmatprep.subr.mxu0 0.0
    %2174 = vmatpush1.msra.mxu0 0.0
    %2175 = vmatprep.subr.mxu0 0.0
    %2176 = vmatpush1.msra.mxu0 0.0
    %2177 = vmatprep.subr.mxu0 0.0
    %2178 = vmatpush1.msra.mxu0 0.0
    %2179 = vmatprep.subr.mxu0 0.0
    %2180 = vmatpush1.msra.mxu0 0.0
    %2181 = vmatprep.subr.mxu0 0.0
    %2182 = vmatpush1.msra.mxu0 0.0
    %2183 = vmatprep.mubr.f32.mxu0 0.0
    %2184 = vmatmul.mubr.f32.gmra.mrb[0].mxu0 %v2117
    %v2185 = vpop.f32.mrb[0].mxu0
    %v2186 = vadd.f32 %v127, %v2185
    %v2187 = vpop.f32.mrb[0].mxu0
    %v2188 = vadd.f32 %v131, %v2187
    %2189 = vdwg.mxu0
    %2190 = vmatprep.subr.mxu0 0.0
    %2191 = vmatpush1.msra.mxu0 %v70
    %2192 = vmatprep.subr.mxu0 0.0
    %2193 = vmatpush1.msra.mxu0 %v73
    %2194 = vmatprep.subr.mxu0 0.0
    %2195 = vmatpush1.msra.mxu0 0.0
    %2196 = vmatprep.subr.mxu0 0.0
    %2197 = vmatpush1.msra.mxu0 0.0
    %2198 = vmatprep.subr.mxu0 0.0
    %2199 = vmatpush1.msra.mxu0 0.0
    %2200 = vmatprep.subr.mxu0 0.0
    %2201 = vmatpush1.msra.mxu0 0.0
    %2202 = vmatprep.subr.mxu0 0.0
    %2203 = vmatpush1.msra.mxu0 0.0
    %2204 = vmatprep.subr.mxu0 0.0
    %2205 = vmatpush1.msra.mxu0 0.0
    %2206 = vmatprep.subr.mxu0 0.0
    %2207 = vmatpush1.msra.mxu0 0.0
    %2208 = vmatprep.subr.mxu0 0.0
    %2209 = vmatpush1.msra.mxu0 0.0
    %2210 = vmatprep.subr.mxu0 0.0
    %2211 = vmatpush1.msra.mxu0 0.0
    %2212 = vmatprep.subr.mxu0 0.0
    %2213 = vmatpush1.msra.mxu0 0.0
    %2214 = vmatprep.subr.mxu0 0.0
    %2215 = vmatpush1.msra.mxu0 0.0
    %2216 = vmatprep.subr.mxu0 0.0
    %2217 = vmatpush1.msra.mxu0 0.0
    %2218 = vmatprep.subr.mxu0 0.0
    %2219 = vmatpush1.msra.mxu0 0.0
    %2220 = vmatprep.subr.mxu0 0.0
    %2221 = vmatpush1.msra.mxu0 0.0
    %2222 = vmatprep.subr.mxu0 0.0
    %2223 = vmatpush1.msra.mxu0 0.0
    %2224 = vmatprep.subr.mxu0 0.0
    %2225 = vmatpush1.msra.mxu0 0.0
    %2226 = vmatprep.subr.mxu0 0.0
    %2227 = vmatpush1.msra.mxu0 0.0
    %2228 = vmatprep.subr.mxu0 0.0
    %2229 = vmatpush1.msra.mxu0 0.0
    %2230 = vmatprep.subr.mxu0 0.0
    %2231 = vmatpush1.msra.mxu0 0.0
    %2232 = vmatprep.subr.mxu0 0.0
    %2233 = vmatpush1.msra.mxu0 0.0
    %2234 = vmatprep.subr.mxu0 0.0
    %2235 = vmatpush1.msra.mxu0 0.0
    %2236 = vmatprep.subr.mxu0 0.0
    %2237 = vmatpush1.msra.mxu0 0.0
    %2238 = vmatprep.subr.mxu0 0.0
    %2239 = vmatpush1.msra.mxu0 0.0
    %2240 = vmatprep.subr.mxu0 0.0
    %2241 = vmatpush1.msra.mxu0 0.0
    %2242 = vmatprep.subr.mxu0 0.0
    %2243 = vmatpush1.msra.mxu0 0.0
    %2244 = vmatprep.subr.mxu0 0.0
    %2245 = vmatpush1.msra.mxu0 0.0
    %2246 = vmatprep.subr.mxu0 0.0
    %2247 = vmatpush1.msra.mxu0 0.0
    %2248 = vmatprep.subr.mxu0 0.0
    %2249 = vmatpush1.msra.mxu0 0.0
    %2250 = vmatprep.subr.mxu0 0.0
    %2251 = vmatpush1.msra.mxu0 0.0
    %2252 = vmatprep.subr.mxu0 0.0
    %2253 = vmatpush1.msra.mxu0 0.0
    %2254 = vmatprep.mubr.f32.mxu0 0.0
    %2255 = vmatmul.mubr.f32.gmra.mrb[0].mxu0 %v2117
    %v2256 = vpop.f32.mrb[0].mxu0
    %v2257 = vadd.f32 %v135, %v2256
    %v2258 = vpop.f32.mrb[0].mxu0
    %2259 = vdwg.mxu0
    %2260 = vmatprep.subr.mxu0 0.0
    %2261 = vmatpush1.msra.mxu0 %v74
    %2262 = vmatprep.subr.mxu0 0.0
    %2263 = vmatpush1.msra.mxu0 %v75
    %2264 = vmatprep.subr.mxu0 0.0
    %2265 = vmatpush1.msra.mxu0 %v76
    %2266 = vmatprep.subr.mxu0 0.0
    %2267 = vmatpush1.msra.mxu0 %v77
    %2268 = vmatprep.subr.mxu0 0.0
    %2269 = vmatpush1.msra.mxu0 %v78
    %2270 = vmatprep.subr.mxu0 0.0
    %2271 = vmatpush1.msra.mxu0 %v79
    %2272 = vmatprep.subr.mxu0 0.0
    %2273 = vmatpush1.msra.mxu0 %v80
    %2274 = vmatprep.subr.mxu0 0.0
    %2275 = vmatpush1.msra.mxu0 %v81
    %2276 = vmatprep.subr.mxu0 0.0
    %2277 = vmatpush1.msra.mxu0 %v82
    %2278 = vmatprep.subr.mxu0 0.0
    %2279 = vmatpush1.msra.mxu0 %v83
    %2280 = vmatprep.subr.mxu0 0.0
    %2281 = vmatpush1.msra.mxu0 %v84
    %2282 = vmatprep.subr.mxu0 0.0
    %2283 = vmatpush1.msra.mxu0 %v85
    %2284 = vmatprep.subr.mxu0 0.0
    %2285 = vmatpush1.msra.mxu0 %v86
    %2286 = vmatprep.subr.mxu0 0.0
    %2287 = vmatpush1.msra.mxu0 %v87
    %2288 = vmatprep.subr.mxu0 0.0
    %2289 = vmatpush1.msra.mxu0 %v88
    %2290 = vmatprep.subr.mxu0 0.0
    %2291 = vmatpush1.msra.mxu0 %v89
    %2292 = vmatprep.subr.mxu0 0.0
    %2293 = vmatpush1.msra.mxu0 0.0
    %2294 = vmatprep.subr.mxu0 0.0
    %2295 = vmatpush1.msra.mxu0 0.0
    %2296 = vmatprep.subr.mxu0 0.0
    %2297 = vmatpush1.msra.mxu0 0.0
    %2298 = vmatprep.subr.mxu0 0.0
    %2299 = vmatpush1.msra.mxu0 0.0
    %2300 = vmatprep.subr.mxu0 0.0
    %2301 = vmatpush1.msra.mxu0 0.0
    %2302 = vmatprep.subr.mxu0 0.0
    %2303 = vmatpush1.msra.mxu0 0.0
    %2304 = vmatprep.subr.mxu0 0.0
    %2305 = vmatpush1.msra.mxu0 0.0
    %2306 = vmatprep.subr.mxu0 0.0
    %2307 = vmatpush1.msra.mxu0 0.0
    %2308 = vmatprep.subr.mxu0 0.0
    %2309 = vmatpush1.msra.mxu0 0.0
    %2310 = vmatprep.subr.mxu0 0.0
    %2311 = vmatpush1.msra.mxu0 0.0
    %2312 = vmatprep.subr.mxu0 0.0
    %2313 = vmatpush1.msra.mxu0 0.0
    %2314 = vmatprep.subr.mxu0 0.0
    %2315 = vmatpush1.msra.mxu0 0.0
    %2316 = vmatprep.subr.mxu0 0.0
    %2317 = vmatpush1.msra.mxu0 0.0
    %2318 = vmatprep.subr.mxu0 0.0
    %2319 = vmatpush1.msra.mxu0 0.0
    %2320 = vmatprep.subr.mxu0 0.0
    %2321 = vmatpush1.msra.mxu0 0.0
    %2322 = vmatprep.subr.mxu0 0.0
    %2323 = vmatpush1.msra.mxu0 0.0
    %2324 = vmatprep.mubr.f32.mxu0 0.0
    %2325 = vmatmul.mubr.f32.gmra.mrb[0].mxu0 %v2102
    %v2326 = vpop.f32.mrb[0].mxu0
    %v2327 = vadd.f32 0.0, %v2326
    %v2328 = vpop.f32.mrb[0].mxu0
    %2329 = vdwg.mxu0
    %2330 = vmatprep.subr.mxu0 0.0
    %2331 = vmatpush1.msra.mxu0 %v90
    %2332 = vmatprep.subr.mxu0 0.0
    %2333 = vmatpush1.msra.mxu0 %v91
    %2334 = vmatprep.subr.mxu0 0.0
    %2335 = vmatpush1.msra.mxu0 %v92
    %2336 = vmatprep.subr.mxu0 0.0
    %2337 = vmatpush1.msra.mxu0 %v93
    %2338 = vmatprep.subr.mxu0 0.0
    %2339 = vmatpush1.msra.mxu0 %v94
    %2340 = vmatprep.subr.mxu0 0.0
    %2341 = vmatpush1.msra.mxu0 %v95
    %2342 = vmatprep.subr.mxu0 0.0
    %2343 = vmatpush1.msra.mxu0 %v96
    %2344 = vmatprep.subr.mxu0 0.0
    %2345 = vmatpush1.msra.mxu0 %v97
    %2346 = vmatprep.subr.mxu0 0.0
    %2347 = vmatpush1.msra.mxu0 %v98
    %2348 = vmatprep.subr.mxu0 0.0
    %2349 = vmatpush1.msra.mxu0 %v99
    %2350 = vmatprep.subr.mxu0 0.0
    %2351 = vmatpush1.msra.mxu0 %v100
    %2352 = vmatprep.subr.mxu0 0.0
    %2353 = vmatpush1.msra.mxu0 %v101
    %2354 = vmatprep.subr.mxu0 0.0
    %2355 = vmatpush1.msra.mxu0 %v102
    %2356 = vmatprep.subr.mxu0 0.0
    %2357 = vmatpush1.msra.mxu0 %v103
    %2358 = vmatprep.subr.mxu0 0.0
    %2359 = vmatpush1.msra.mxu0 %v104
    %2360 = vmatprep.subr.mxu0 0.0
    %2361 = vmatpush1.msra.mxu0 %v105
    %2362 = vmatprep.subr.mxu0 0.0
    %2363 = vmatpush1.msra.mxu0 0.0
    %2364 = vmatprep.subr.mxu0 0.0
    %2365 = vmatpush1.msra.mxu0 0.0
    %2366 = vmatprep.subr.mxu0 0.0
    %2367 = vmatpush1.msra.mxu0 0.0
    %2368 = vmatprep.subr.mxu0 0.0
    %2369 = vmatpush1.msra.mxu0 0.0
    %2370 = vmatprep.subr.mxu0 0.0
    %2371 = vmatpush1.msra.mxu0 0.0
    %2372 = vmatprep.subr.mxu0 0.0
    %2373 = vmatpush1.msra.mxu0 0.0
    %2374 = vmatprep.subr.mxu0 0.0
    %2375 = vmatpush1.msra.mxu0 0.0
    %2376 = vmatprep.subr.mxu0 0.0
    %2377 = vmatpush1.msra.mxu0 0.0
    %2378 = vmatprep.subr.mxu0 0.0
    %2379 = vmatpush1.msra.mxu0 0.0
    %2380 = vmatprep.subr.mxu0 0.0
    %2381 = vmatpush1.msra.mxu0 0.0
    %2382 = vmatprep.subr.mxu0 0.0
    %2383 = vmatpush1.msra.mxu0 0.0
    %2384 = vmatprep.subr.mxu0 0.0
    %2385 = vmatpush1.msra.mxu0 0.0
    %2386 = vmatprep.subr.mxu0 0.0
    %2387 = vmatpush1.msra.mxu0 0.0
    %2388 = vmatprep.subr.mxu0 0.0
    %2389 = vmatpush1.msra.mxu0 0.0
    %2390 = vmatprep.subr.mxu0 0.0
    %2391 = vmatpush1.msra.mxu0 0.0
    %2392 = vmatprep.subr.mxu0 0.0
    %2393 = vmatpush1.msra.mxu0 0.0
    %2394 = vmatprep.mubr.f32.mxu0 0.0
    %2395 = vmatmul.mubr.f32.gmra.mrb[0].mxu0 %v2102
    %v2396 = vpop.f32.mrb[0].mxu0
    %v2397 = vadd.f32 0.0, %v2396
    %v2398 = vpop.f32.mrb[0].mxu0
    %2399 = vdwg.mxu0
    %v2400 = vadd.f32 %v2186, %v2327
    %v2401 = vxor.u32 %v2400, 2147483648
    %v2402 = vmul.f32 %v2401, 1.442695
    %v2403 = vpow.pop %v2402
    %v2404 = vadd.f32 %v2403, 1.0
    %v2405 = vrcp.pop %v2404
    %v2406 = vmul.f32 1.0, %v2405
    %v2407 = vadd.f32 %v2188, %v2397
    %v2408 = vxor.u32 %v2407, 2147483648
    %v2409 = vmul.f32 %v2408, 1.442695
    %v2410 = vpow.pop %v2409
    %v2411 = vadd.f32 %v2410, 1.0
    %v2412 = vrcp.pop %v2411
    %v2413 = vmul.f32 1.0, %v2412
    %2414 = vmatprep.subr.mxu0 0.0
    %2415 = vmatpush1.msra.mxu0 %v106
    %2416 = vmatprep.subr.mxu0 0.0
    %2417 = vmatpush1.msra.mxu0 %v107
    %2418 = vmatprep.subr.mxu0 0.0
    %2419 = vmatpush1.msra.mxu0 %v108
    %2420 = vmatprep.subr.mxu0 0.0
    %2421 = vmatpush1.msra.mxu0 %v109
    %2422 = vmatprep.subr.mxu0 0.0
    %2423 = vmatpush1.msra.mxu0 %v110
    %2424 = vmatprep.subr.mxu0 0.0
    %2425 = vmatpush1.msra.mxu0 %v111
    %2426 = vmatprep.subr.mxu0 0.0
    %2427 = vmatpush1.msra.mxu0 %v112
    %2428 = vmatprep.subr.mxu0 0.0
    %2429 = vmatpush1.msra.mxu0 %v113
    %2430 = vmatprep.subr.mxu0 0.0
    %2431 = vmatpush1.msra.mxu0 %v114
    %2432 = vmatprep.subr.mxu0 0.0
    %2433 = vmatpush1.msra.mxu0 %v115
    %2434 = vmatprep.subr.mxu0 0.0
    %2435 = vmatpush1.msra.mxu0 %v116
    %2436 = vmatprep.subr.mxu0 0.0
    %2437 = vmatpush1.msra.mxu0 %v117
    %2438 = vmatprep.subr.mxu0 0.0
    %2439 = vmatpush1.msra.mxu0 %v118
    %2440 = vmatprep.subr.mxu0 0.0
    %2441 = vmatpush1.msra.mxu0 %v119
    %2442 = vmatprep.subr.mxu0 0.0
    %2443 = vmatpush1.msra.mxu0 %v120
    %2444 = vmatprep.subr.mxu0 0.0
    %2445 = vmatpush1.msra.mxu0 %v121
    %2446 = vmatprep.subr.mxu0 0.0
    %2447 = vmatpush1.msra.mxu0 0.0
    %2448 = vmatprep.subr.mxu0 0.0
    %2449 = vmatpush1.msra.mxu0 0.0
    %2450 = vmatprep.subr.mxu0 0.0
    %2451 = vmatpush1.msra.mxu0 0.0
    %2452 = vmatprep.subr.mxu0 0.0
    %2453 = vmatpush1.msra.mxu0 0.0
    %2454 = vmatprep.subr.mxu0 0.0
    %2455 = vmatpush1.msra.mxu0 0.0
    %2456 = vmatprep.subr.mxu0 0.0
    %2457 = vmatpush1.msra.mxu0 0.0
    %2458 = vmatprep.subr.mxu0 0.0
    %2459 = vmatpush1.msra.mxu0 0.0
    %2460 = vmatprep.subr.mxu0 0.0
    %2461 = vmatpush1.msra.mxu0 0.0
    %2462 = vmatprep.subr.mxu0 0.0
    %2463 = vmatpush1.msra.mxu0 0.0
    %2464 = vmatprep.subr.mxu0 0.0
    %2465 = vmatpush1.msra.mxu0 0.0
    %2466 = vmatprep.subr.mxu0 0.0
    %2467 = vmatpush1.msra.mxu0 0.0
    %2468 = vmatprep.subr.mxu0 0.0
    %2469 = vmatpush1.msra.mxu0 0.0
    %2470 = vmatprep.subr.mxu0 0.0
    %2471 = vmatpush1.msra.mxu0 0.0
    %2472 = vmatprep.subr.mxu0 0.0
    %2473 = vmatpush1.msra.mxu0 0.0
    %2474 = vmatprep.subr.mxu0 0.0
    %2475 = vmatpush1.msra.mxu0 0.0
    %2476 = vmatprep.subr.mxu0 0.0
    %2477 = vmatpush1.msra.mxu0 0.0
    %2478 = vmatprep.mubr.f32.mxu0 0.0
    %2479 = vmatmul.mubr.f32.gmra.mrb[0].mxu0 %v2102
    %v2480 = vpop.f32.mrb[0].mxu0
    %v2481 = vadd.f32 %v144, %v2480
    %v2482 = vpop.f32.mrb[0].mxu0
    %2483 = vdwg.mxu0
    %v2484 = vmul.f32 %v2406, %v2481
    %v2485 = vadd.f32 %v2257, %v2484
    %v2486 = vtanh.pop %v2485
    %v2487 = vsub.f32 1.0, %v2413
    %v2488 = vmul.f32 %v2487, %v2486
    %v2489 = vmul.f32 %v2413, %v2102
    %v2490 = vadd.f32 %v2488, %v2489
    %v2491 = vrot.slane %v60, 6
    %v2492 = vrot.slane %v61, 5
    %v2493 = vsel %vm156, %v2492, %v2491
    %v2494 = vrot.slane %v62, 4
    %v2495 = vsel %vm159, %v2494, %v2493
    %v2496 = vrot.slane %v63, 3
    %v2497 = vsel %vm162, %v2496, %v2495
    %v2498 = vrot.slane %v64, 2
    %v2499 = vsel %vm165, %v2498, %v2497
    %v2500 = vrot.slane %v65, 1
    %v2501 = vsel %vm168, %v2500, %v2499
    %v2502 = vsel %vm171, %v66, %v2501
    %v2503 = vrot.slane %v67, 7
    %v2504 = vsel %vm174, %v2503, %v2502
    %v2505 = vsel %vm176, %v2504, 0
    %2507 = vmatprep.subr.mxu0 %v69
    %2508 = vmatpush1.msra.mxu0 %v68
    %2509 = vmatprep.subr.mxu0 %v72
    %2510 = vmatpush1.msra.mxu0 %v71
    %2511 = vmatprep.subr.mxu0 0.0
    %2512 = vmatpush1.msra.mxu0 0.0
    %2513 = vmatprep.subr.mxu0 0.0
    %2514 = vmatpush1.msra.mxu0 0.0
    %2515 = vmatprep.subr.mxu0 0.0
    %2516 = vmatpush1.msra.mxu0 0.0
    %2517 = vmatprep.subr.mxu0 0.0
    %2518 = vmatpush1.msra.mxu0 0.0
    %2519 = vmatprep.subr.mxu0 0.0
    %2520 = vmatpush1.msra.mxu0 0.0
    %2521 = vmatprep.subr.mxu0 0.0
    %2522 = vmatpush1.msra.mxu0 0.0
    %2523 = vmatprep.subr.mxu0 0.0
    %2524 = vmatpush1.msra.mxu0 0.0
    %2525 = vmatprep.subr.mxu0 0.0
    %2526 = vmatpush1.msra.mxu0 0.0
    %2527 = vmatprep.subr.mxu0 0.0
    %2528 = vmatpush1.msra.mxu0 0.0
    %2529 = vmatprep.subr.mxu0 0.0
    %2530 = vmatpush1.msra.mxu0 0.0
    %2531 = vmatprep.subr.mxu0 0.0
    %2532 = vmatpush1.msra.mxu0 0.0
    %2533 = vmatprep.subr.mxu0 0.0
    %2534 = vmatpush1.msra.mxu0 0.0
    %2535 = vmatprep.subr.mxu0 0.0
    %2536 = vmatpush1.msra.mxu0 0.0
    %2537 = vmatprep.subr.mxu0 0.0
    %2538 = vmatpush1.msra.mxu0 0.0
    %2539 = vmatprep.subr.mxu0 0.0
    %2540 = vmatpush1.msra.mxu0 0.0
    %2541 = vmatprep.subr.mxu0 0.0
    %2542 = vmatpush1.msra.mxu0 0.0
    %2543 = vmatprep.subr.mxu0 0.0
    %2544 = vmatpush1.msra.mxu0 0.0
    %2545 = vmatprep.subr.mxu0 0.0
    %2546 = vmatpush1.msra.mxu0 0.0
    %2547 = vmatprep.subr.mxu0 0.0
    %2548 = vmatpush1.msra.mxu0 0.0
    %2549 = vmatprep.subr.mxu0 0.0
    %2550 = vmatpush1.msra.mxu0 0.0
    %2551 = vmatprep.subr.mxu0 0.0
    %2552 = vmatpush1.msra.mxu0 0.0
    %2553 = vmatprep.subr.mxu0 0.0
    %2554 = vmatpush1.msra.mxu0 0.0
    %2555 = vmatprep.subr.mxu0 0.0
    %2556 = vmatpush1.msra.mxu0 0.0
    %2557 = vmatprep.subr.mxu0 0.0
    %2558 = vmatpush1.msra.mxu0 0.0
    %2559 = vmatprep.subr.mxu0 0.0
    %2560 = vmatpush1.msra.mxu0 0.0
    %2561 = vmatprep.subr.mxu0 0.0
    %2562 = vmatpush1.msra.mxu0 0.0
    %2563 = vmatprep.subr.mxu0 0.0
    %2564 = vmatpush1.msra.mxu0 0.0
    %2565 = vmatprep.subr.mxu0 0.0
    %2566 = vmatpush1.msra.mxu0 0.0
    %2567 = vmatprep.subr.mxu0 0.0
    %2568 = vmatpush1.msra.mxu0 0.0
    %2569 = vmatprep.subr.mxu0 0.0
    %2570 = vmatpush1.msra.mxu0 0.0
    %2571 = vmatprep.mubr.f32.mxu0 0.0
    %2572 = vmatmul.mubr.f32.gmra.mrb[0].mxu0 %v2505
    %v2573 = vpop.f32.mrb[0].mxu0
    %v2574 = vadd.f32 %v127, %v2573
    %v2575 = vpop.f32.mrb[0].mxu0
    %v2576 = vadd.f32 %v131, %v2575
    %2577 = vdwg.mxu0
    %2578 = vmatprep.subr.mxu0 0.0
    %2579 = vmatpush1.msra.mxu0 %v70
    %2580 = vmatprep.subr.mxu0 0.0
    %2581 = vmatpush1.msra.mxu0 %v73
    %2582 = vmatprep.subr.mxu0 0.0
    %2583 = vmatpush1.msra.mxu0 0.0
    %2584 = vmatprep.subr.mxu0 0.0
    %2585 = vmatpush1.msra.mxu0 0.0
    %2586 = vmatprep.subr.mxu0 0.0
    %2587 = vmatpush1.msra.mxu0 0.0
    %2588 = vmatprep.subr.mxu0 0.0
    %2589 = vmatpush1.msra.mxu0 0.0
    %2590 = vmatprep.subr.mxu0 0.0
    %2591 = vmatpush1.msra.mxu0 0.0
    %2592 = vmatprep.subr.mxu0 0.0
    %2593 = vmatpush1.msra.mxu0 0.0
    %2594 = vmatprep.subr.mxu0 0.0
    %2595 = vmatpush1.msra.mxu0 0.0
    %2596 = vmatprep.subr.mxu0 0.0
    %2597 = vmatpush1.msra.mxu0 0.0
    %2598 = vmatprep.subr.mxu0 0.0
    %2599 = vmatpush1.msra.mxu0 0.0
    %2600 = vmatprep.subr.mxu0 0.0
    %2601 = vmatpush1.msra.mxu0 0.0
    %2602 = vmatprep.subr.mxu0 0.0
    %2603 = vmatpush1.msra.mxu0 0.0
    %2604 = vmatprep.subr.mxu0 0.0
    %2605 = vmatpush1.msra.mxu0 0.0
    %2606 = vmatprep.subr.mxu0 0.0
    %2607 = vmatpush1.msra.mxu0 0.0
    %2608 = vmatprep.subr.mxu0 0.0
    %2609 = vmatpush1.msra.mxu0 0.0
    %2610 = vmatprep.subr.mxu0 0.0
    %2611 = vmatpush1.msra.mxu0 0.0
    %2612 = vmatprep.subr.mxu0 0.0
    %2613 = vmatpush1.msra.mxu0 0.0
    %2614 = vmatprep.subr.mxu0 0.0
    %2615 = vmatpush1.msra.mxu0 0.0
    %2616 = vmatprep.subr.mxu0 0.0
    %2617 = vmatpush1.msra.mxu0 0.0
    %2618 = vmatprep.subr.mxu0 0.0
    %2619 = vmatpush1.msra.mxu0 0.0
    %2620 = vmatprep.subr.mxu0 0.0
    %2621 = vmatpush1.msra.mxu0 0.0
    %2622 = vmatprep.subr.mxu0 0.0
    %2623 = vmatpush1.msra.mxu0 0.0
    %2624 = vmatprep.subr.mxu0 0.0
    %2625 = vmatpush1.msra.mxu0 0.0
    %2626 = vmatprep.subr.mxu0 0.0
    %2627 = vmatpush1.msra.mxu0 0.0
    %2628 = vmatprep.subr.mxu0 0.0
    %2629 = vmatpush1.msra.mxu0 0.0
    %2630 = vmatprep.subr.mxu0 0.0
    %2631 = vmatpush1.msra.mxu0 0.0
    %2632 = vmatprep.subr.mxu0 0.0
    %2633 = vmatpush1.msra.mxu0 0.0
    %2634 = vmatprep.subr.mxu0 0.0
    %2635 = vmatpush1.msra.mxu0 0.0
    %2636 = vmatprep.subr.mxu0 0.0
    %2637 = vmatpush1.msra.mxu0 0.0
    %2638 = vmatprep.subr.mxu0 0.0
    %2639 = vmatpush1.msra.mxu0 0.0
    %2640 = vmatprep.subr.mxu0 0.0
    %2641 = vmatpush1.msra.mxu0 0.0
    %2642 = vmatprep.mubr.f32.mxu0 0.0
    %2643 = vmatmul.mubr.f32.gmra.mrb[0].mxu0 %v2505
    %v2644 = vpop.f32.mrb[0].mxu0
    %v2645 = vadd.f32 %v135, %v2644
    %v2646 = vpop.f32.mrb[0].mxu0
    %2647 = vdwg.mxu0
    %2648 = vmatprep.subr.mxu0 0.0
    %2649 = vmatpush1.msra.mxu0 %v74
    %2650 = vmatprep.subr.mxu0 0.0
    %2651 = vmatpush1.msra.mxu0 %v75
    %2652 = vmatprep.subr.mxu0 0.0
    %2653 = vmatpush1.msra.mxu0 %v76
    %2654 = vmatprep.subr.mxu0 0.0
    %2655 = vmatpush1.msra.mxu0 %v77
    %2656 = vmatprep.subr.mxu0 0.0
    %2657 = vmatpush1.msra.mxu0 %v78
    %2658 = vmatprep.subr.mxu0 0.0
    %2659 = vmatpush1.msra.mxu0 %v79
    %2660 = vmatprep.subr.mxu0 0.0
    %2661 = vmatpush1.msra.mxu0 %v80
    %2662 = vmatprep.subr.mxu0 0.0
    %2663 = vmatpush1.msra.mxu0 %v81
    %2664 = vmatprep.subr.mxu0 0.0
    %2665 = vmatpush1.msra.mxu0 %v82
    %2666 = vmatprep.subr.mxu0 0.0
    %2667 = vmatpush1.msra.mxu0 %v83
    %2668 = vmatprep.subr.mxu0 0.0
    %2669 = vmatpush1.msra.mxu0 %v84
    %2670 = vmatprep.subr.mxu0 0.0
    %2671 = vmatpush1.msra.mxu0 %v85
    %2672 = vmatprep.subr.mxu0 0.0
    %2673 = vmatpush1.msra.mxu0 %v86
    %2674 = vmatprep.subr.mxu0 0.0
    %2675 = vmatpush1.msra.mxu0 %v87
    %2676 = vmatprep.subr.mxu0 0.0
    %2677 = vmatpush1.msra.mxu0 %v88
    %2678 = vmatprep.subr.mxu0 0.0
    %2679 = vmatpush1.msra.mxu0 %v89
    %2680 = vmatprep.subr.mxu0 0.0
    %2681 = vmatpush1.msra.mxu0 0.0
    %2682 = vmatprep.subr.mxu0 0.0
    %2683 = vmatpush1.msra.mxu0 0.0
    %2684 = vmatprep.subr.mxu0 0.0
    %2685 = vmatpush1.msra.mxu0 0.0
    %2686 = vmatprep.subr.mxu0 0.0
    %2687 = vmatpush1.msra.mxu0 0.0
    %2688 = vmatprep.subr.mxu0 0.0
    %2689 = vmatpush1.msra.mxu0 0.0
    %2690 = vmatprep.subr.mxu0 0.0
    %2691 = vmatpush1.msra.mxu0 0.0
    %2692 = vmatprep.subr.mxu0 0.0
    %2693 = vmatpush1.msra.mxu0 0.0
    %2694 = vmatprep.subr.mxu0 0.0
    %2695 = vmatpush1.msra.mxu0 0.0
    %2696 = vmatprep.subr.mxu0 0.0
    %2697 = vmatpush1.msra.mxu0 0.0
    %2698 = vmatprep.subr.mxu0 0.0
    %2699 = vmatpush1.msra.mxu0 0.0
    %2700 = vmatprep.subr.mxu0 0.0
    %2701 = vmatpush1.msra.mxu0 0.0
    %2702 = vmatprep.subr.mxu0 0.0
    %2703 = vmatpush1.msra.mxu0 0.0
    %2704 = vmatprep.subr.mxu0 0.0
    %2705 = vmatpush1.msra.mxu0 0.0
    %2706 = vmatprep.subr.mxu0 0.0
    %2707 = vmatpush1.msra.mxu0 0.0
    %2708 = vmatprep.subr.mxu0 0.0
    %2709 = vmatpush1.msra.mxu0 0.0
    %2710 = vmatprep.subr.mxu0 0.0
    %2711 = vmatpush1.msra.mxu0 0.0
    %2712 = vmatprep.mubr.f32.mxu0 0.0
    %2713 = vmatmul.mubr.f32.gmra.mrb[0].mxu0 %v2490
    %v2714 = vpop.f32.mrb[0].mxu0
    %v2715 = vadd.f32 0.0, %v2714
    %v2716 = vpop.f32.mrb[0].mxu0
    %2717 = vdwg.mxu0
    %2718 = vmatprep.subr.mxu0 0.0
    %2719 = vmatpush1.msra.mxu0 %v90
    %2720 = vmatprep.subr.mxu0 0.0
    %2721 = vmatpush1.msra.mxu0 %v91
    %2722 = vmatprep.subr.mxu0 0.0
    %2723 = vmatpush1.msra.mxu0 %v92
    %2724 = vmatprep.subr.mxu0 0.0
    %2725 = vmatpush1.msra.mxu0 %v93
    %2726 = vmatprep.subr.mxu0 0.0
    %2727 = vmatpush1.msra.mxu0 %v94
    %2728 = vmatprep.subr.mxu0 0.0
    %2729 = vmatpush1.msra.mxu0 %v95
    %2730 = vmatprep.subr.mxu0 0.0
    %2731 = vmatpush1.msra.mxu0 %v96
    %2732 = vmatprep.subr.mxu0 0.0
    %2733 = vmatpush1.msra.mxu0 %v97
    %2734 = vmatprep.subr.mxu0 0.0
    %2735 = vmatpush1.msra.mxu0 %v98
    %2736 = vmatprep.subr.mxu0 0.0
    %2737 = vmatpush1.msra.mxu0 %v99
    %2738 = vmatprep.subr.mxu0 0.0
    %2739 = vmatpush1.msra.mxu0 %v100
    %2740 = vmatprep.subr.mxu0 0.0
    %2741 = vmatpush1.msra.mxu0 %v101
    %2742 = vmatprep.subr.mxu0 0.0
    %2743 = vmatpush1.msra.mxu0 %v102
    %2744 = vmatprep.subr.mxu0 0.0
    %2745 = vmatpush1.msra.mxu0 %v103
    %2746 = vmatprep.subr.mxu0 0.0
    %2747 = vmatpush1.msra.mxu0 %v104
    %2748 = vmatprep.subr.mxu0 0.0
    %2749 = vmatpush1.msra.mxu0 %v105
    %2750 = vmatprep.subr.mxu0 0.0
    %2751 = vmatpush1.msra.mxu0 0.0
    %2752 = vmatprep.subr.mxu0 0.0
    %2753 = vmatpush1.msra.mxu0 0.0
    %2754 = vmatprep.subr.mxu0 0.0
    %2755 = vmatpush1.msra.mxu0 0.0
    %2756 = vmatprep.subr.mxu0 0.0
    %2757 = vmatpush1.msra.mxu0 0.0
    %2758 = vmatprep.subr.mxu0 0.0
    %2759 = vmatpush1.msra.mxu0 0.0
    %2760 = vmatprep.subr.mxu0 0.0
    %2761 = vmatpush1.msra.mxu0 0.0
    %2762 = vmatprep.subr.mxu0 0.0
    %2763 = vmatpush1.msra.mxu0 0.0
    %2764 = vmatprep.subr.mxu0 0.0
    %2765 = vmatpush1.msra.mxu0 0.0
    %2766 = vmatprep.subr.mxu0 0.0
    %2767 = vmatpush1.msra.mxu0 0.0
    %2768 = vmatprep.subr.mxu0 0.0
    %2769 = vmatpush1.msra.mxu0 0.0
    %2770 = vmatprep.subr.mxu0 0.0
    %2771 = vmatpush1.msra.mxu0 0.0
    %2772 = vmatprep.subr.mxu0 0.0
    %2773 = vmatpush1.msra.mxu0 0.0
    %2774 = vmatprep.subr.mxu0 0.0
    %2775 = vmatpush1.msra.mxu0 0.0
    %2776 = vmatprep.subr.mxu0 0.0
    %2777 = vmatpush1.msra.mxu0 0.0
    %2778 = vmatprep.subr.mxu0 0.0
    %2779 = vmatpush1.msra.mxu0 0.0
    %2780 = vmatprep.subr.mxu0 0.0
    %2781 = vmatpush1.msra.mxu0 0.0
    %2782 = vmatprep.mubr.f32.mxu0 0.0
    %2783 = vmatmul.mubr.f32.gmra.mrb[0].mxu0 %v2490
    %v2784 = vpop.f32.mrb[0].mxu0
    %v2785 = vadd.f32 0.0, %v2784
    %v2786 = vpop.f32.mrb[0].mxu0
    %2787 = vdwg.mxu0
    %v2788 = vadd.f32 %v2574, %v2715
    %v2789 = vxor.u32 %v2788, 2147483648
    %v2790 = vmul.f32 %v2789, 1.442695
    %v2791 = vpow.pop %v2790
    %v2792 = vadd.f32 %v2791, 1.0
    %v2793 = vrcp.pop %v2792
    %v2794 = vmul.f32 1.0, %v2793
    %v2795 = vadd.f32 %v2576, %v2785
    %v2796 = vxor.u32 %v2795, 2147483648
    %v2797 = vmul.f32 %v2796, 1.442695
    %v2798 = vpow.pop %v2797
    %v2799 = vadd.f32 %v2798, 1.0
    %v2800 = vrcp.pop %v2799
    %v2801 = vmul.f32 1.0, %v2800
    %2802 = vmatprep.subr.mxu0 0.0
    %2803 = vmatpush1.msra.mxu0 %v106
    %2804 = vmatprep.subr.mxu0 0.0
    %2805 = vmatpush1.msra.mxu0 %v107
    %2806 = vmatprep.subr.mxu0 0.0
    %2807 = vmatpush1.msra.mxu0 %v108
    %2808 = vmatprep.subr.mxu0 0.0
    %2809 = vmatpush1.msra.mxu0 %v109
    %2810 = vmatprep.subr.mxu0 0.0
    %2811 = vmatpush1.msra.mxu0 %v110
    %2812 = vmatprep.subr.mxu0 0.0
    %2813 = vmatpush1.msra.mxu0 %v111
    %2814 = vmatprep.subr.mxu0 0.0
    %2815 = vmatpush1.msra.mxu0 %v112
    %2816 = vmatprep.subr.mxu0 0.0
    %2817 = vmatpush1.msra.mxu0 %v113
    %2818 = vmatprep.subr.mxu0 0.0
    %2819 = vmatpush1.msra.mxu0 %v114
    %2820 = vmatprep.subr.mxu0 0.0
    %2821 = vmatpush1.msra.mxu0 %v115
    %2822 = vmatprep.subr.mxu0 0.0
    %2823 = vmatpush1.msra.mxu0 %v116
    %2824 = vmatprep.subr.mxu0 0.0
    %2825 = vmatpush1.msra.mxu0 %v117
    %2826 = vmatprep.subr.mxu0 0.0
    %2827 = vmatpush1.msra.mxu0 %v118
    %2828 = vmatprep.subr.mxu0 0.0
    %2829 = vmatpush1.msra.mxu0 %v119
    %2830 = vmatprep.subr.mxu0 0.0
    %2831 = vmatpush1.msra.mxu0 %v120
    %2832 = vmatprep.subr.mxu0 0.0
    %2833 = vmatpush1.msra.mxu0 %v121
    %2834 = vmatprep.subr.mxu0 0.0
    %2835 = vmatpush1.msra.mxu0 0.0
    %2836 = vmatprep.subr.mxu0 0.0
    %2837 = vmatpush1.msra.mxu0 0.0
    %2838 = vmatprep.subr.mxu0 0.0
    %2839 = vmatpush1.msra.mxu0 0.0
    %2840 = vmatprep.subr.mxu0 0.0
    %2841 = vmatpush1.msra.mxu0 0.0
    %2842 = vmatprep.subr.mxu0 0.0
    %2843 = vmatpush1.msra.mxu0 0.0
    %2844 = vmatprep.subr.mxu0 0.0
    %2845 = vmatpush1.msra.mxu0 0.0
    %2846 = vmatprep.subr.mxu0 0.0
    %2847 = vmatpush1.msra.mxu0 0.0
    %2848 = vmatprep.subr.mxu0 0.0
    %2849 = vmatpush1.msra.mxu0 0.0
    %2850 = vmatprep.subr.mxu0 0.0
    %2851 = vmatpush1.msra.mxu0 0.0
    %2852 = vmatprep.subr.mxu0 0.0
    %2853 = vmatpush1.msra.mxu0 0.0
    %2854 = vmatprep.subr.mxu0 0.0
    %2855 = vmatpush1.msra.mxu0 0.0
    %2856 = vmatprep.subr.mxu0 0.0
    %2857 = vmatpush1.msra.mxu0 0.0
    %2858 = vmatprep.subr.mxu0 0.0
    %2859 = vmatpush1.msra.mxu0 0.0
    %2860 = vmatprep.subr.mxu0 0.0
    %2861 = vmatpush1.msra.mxu0 0.0
    %2862 = vmatprep.subr.mxu0 0.0
    %2863 = vmatpush1.msra.mxu0 0.0
    %2864 = vmatprep.subr.mxu0 0.0
    %2865 = vmatpush1.msra.mxu0 0.0
    %2866 = vmatprep.mubr.f32.mxu0 0.0
    %2867 = vmatmul.mubr.f32.gmra.mrb[0].mxu0 %v2490
    %v2868 = vpop.f32.mrb[0].mxu0
    %v2869 = vadd.f32 %v144, %v2868
    %v2870 = vpop.f32.mrb[0].mxu0
    %2871 = vdwg.mxu0
    %v2872 = vmul.f32 %v2794, %v2869
    %v2873 = vadd.f32 %v2645, %v2872
    %v2874 = vtanh.pop %v2873
    %v2875 = vsub.f32 1.0, %v2801
    %v2876 = vmul.f32 %v2875, %v2874
    %v2877 = vmul.f32 %v2801, %v2490
    %v2878 = vadd.f32 %v2876, %v2877
    %v2879 = vrot.slane %v60, 7
    %v2880 = vrot.slane %v61, 6
    %v2881 = vsel %vm156, %v2880, %v2879
    %v2882 = vrot.slane %v62, 5
    %v2883 = vsel %vm159, %v2882, %v2881
    %v2884 = vrot.slane %v63, 4
    %v2885 = vsel %vm162, %v2884, %v2883
    %v2886 = vrot.slane %v64, 3
    %v2887 = vsel %vm165, %v2886, %v2885
    %v2888 = vrot.slane %v65, 2
    %v2889 = vsel %vm168, %v2888, %v2887
    %v2890 = vrot.slane %v66, 1
    %v2891 = vsel %vm171, %v2890, %v2889
    %v2892 = vsel %vm174, %v67, %v2891
    %v2893 = vsel %vm176, %v2892, 0
    %2895 = vmatprep.subr.mxu0 %v69
    %2896 = vmatpush1.msra.mxu0 %v68
    %2897 = vmatprep.subr.mxu0 %v72
    %2898 = vmatpush1.msra.mxu0 %v71
    %2899 = vmatprep.subr.mxu0 0.0
    %2900 = vmatpush1.msra.mxu0 0.0
    %2901 = vmatprep.subr.mxu0 0.0
    %2902 = vmatpush1.msra.mxu0 0.0
    %2903 = vmatprep.subr.mxu0 0.0
    %2904 = vmatpush1.msra.mxu0 0.0
    %2905 = vmatprep.subr.mxu0 0.0
    %2906 = vmatpush1.msra.mxu0 0.0
    %2907 = vmatprep.subr.mxu0 0.0
    %2908 = vmatpush1.msra.mxu0 0.0
    %2909 = vmatprep.subr.mxu0 0.0
    %2910 = vmatpush1.msra.mxu0 0.0
    %2911 = vmatprep.subr.mxu0 0.0
    %2912 = vmatpush1.msra.mxu0 0.0
    %2913 = vmatprep.subr.mxu0 0.0
    %2914 = vmatpush1.msra.mxu0 0.0
    %2915 = vmatprep.subr.mxu0 0.0
    %2916 = vmatpush1.msra.mxu0 0.0
    %2917 = vmatprep.subr.mxu0 0.0
    %2918 = vmatpush1.msra.mxu0 0.0
    %2919 = vmatprep.subr.mxu0 0.0
    %2920 = vmatpush1.msra.mxu0 0.0
    %2921 = vmatprep.subr.mxu0 0.0
    %2922 = vmatpush1.msra.mxu0 0.0
    %2923 = vmatprep.subr.mxu0 0.0
    %2924 = vmatpush1.msra.mxu0 0.0
    %2925 = vmatprep.subr.mxu0 0.0
    %2926 = vmatpush1.msra.mxu0 0.0
    %2927 = vmatprep.subr.mxu0 0.0
    %2928 = vmatpush1.msra.mxu0 0.0
    %2929 = vmatprep.subr.mxu0 0.0
    %2930 = vmatpush1.msra.mxu0 0.0
    %2931 = vmatprep.subr.mxu0 0.0
    %2932 = vmatpush1.msra.mxu0 0.0
    %2933 = vmatprep.subr.mxu0 0.0
    %2934 = vmatpush1.msra.mxu0 0.0
    %2935 = vmatprep.subr.mxu0 0.0
    %2936 = vmatpush1.msra.mxu0 0.0
    %2937 = vmatprep.subr.mxu0 0.0
    %2938 = vmatpush1.msra.mxu0 0.0
    %2939 = vmatprep.subr.mxu0 0.0
    %2940 = vmatpush1.msra.mxu0 0.0
    %2941 = vmatprep.subr.mxu0 0.0
    %2942 = vmatpush1.msra.mxu0 0.0
    %2943 = vmatprep.subr.mxu0 0.0
    %2944 = vmatpush1.msra.mxu0 0.0
    %2945 = vmatprep.subr.mxu0 0.0
    %2946 = vmatpush1.msra.mxu0 0.0
    %2947 = vmatprep.subr.mxu0 0.0
    %2948 = vmatpush1.msra.mxu0 0.0
    %2949 = vmatprep.subr.mxu0 0.0
    %2950 = vmatpush1.msra.mxu0 0.0
    %2951 = vmatprep.subr.mxu0 0.0
    %2952 = vmatpush1.msra.mxu0 0.0
    %2953 = vmatprep.subr.mxu0 0.0
    %2954 = vmatpush1.msra.mxu0 0.0
    %2955 = vmatprep.subr.mxu0 0.0
    %2956 = vmatpush1.msra.mxu0 0.0
    %2957 = vmatprep.subr.mxu0 0.0
    %2958 = vmatpush1.msra.mxu0 0.0
    %2959 = vmatprep.mubr.f32.mxu0 0.0
    %2960 = vmatmul.mubr.f32.gmra.mrb[0].mxu0 %v2893
    %v2961 = vpop.f32.mrb[0].mxu0
    %v2962 = vadd.f32 %v127, %v2961
    %v2963 = vpop.f32.mrb[0].mxu0
    %v2964 = vadd.f32 %v131, %v2963
    %2965 = vdwg.mxu0
    %2966 = vmatprep.subr.mxu0 0.0
    %2967 = vmatpush1.msra.mxu0 %v70
    %2968 = vmatprep.subr.mxu0 0.0
    %2969 = vmatpush1.msra.mxu0 %v73
    %2970 = vmatprep.subr.mxu0 0.0
    %2971 = vmatpush1.msra.mxu0 0.0
    %2972 = vmatprep.subr.mxu0 0.0
    %2973 = vmatpush1.msra.mxu0 0.0
    %2974 = vmatprep.subr.mxu0 0.0
    %2975 = vmatpush1.msra.mxu0 0.0
    %2976 = vmatprep.subr.mxu0 0.0
    %2977 = vmatpush1.msra.mxu0 0.0
    %2978 = vmatprep.subr.mxu0 0.0
    %2979 = vmatpush1.msra.mxu0 0.0
    %2980 = vmatprep.subr.mxu0 0.0
    %2981 = vmatpush1.msra.mxu0 0.0
    %2982 = vmatprep.subr.mxu0 0.0
    %2983 = vmatpush1.msra.mxu0 0.0
    %2984 = vmatprep.subr.mxu0 0.0
    %2985 = vmatpush1.msra.mxu0 0.0
    %2986 = vmatprep.subr.mxu0 0.0
    %2987 = vmatpush1.msra.mxu0 0.0
    %2988 = vmatprep.subr.mxu0 0.0
    %2989 = vmatpush1.msra.mxu0 0.0
    %2990 = vmatprep.subr.mxu0 0.0
    %2991 = vmatpush1.msra.mxu0 0.0
    %2992 = vmatprep.subr.mxu0 0.0
    %2993 = vmatpush1.msra.mxu0 0.0
    %2994 = vmatprep.subr.mxu0 0.0
    %2995 = vmatpush1.msra.mxu0 0.0
    %2996 = vmatprep.subr.mxu0 0.0
    %2997 = vmatpush1.msra.mxu0 0.0
    %2998 = vmatprep.subr.mxu0 0.0
    %2999 = vmatpush1.msra.mxu0 0.0
    %3000 = vmatprep.subr.mxu0 0.0
    %3001 = vmatpush1.msra.mxu0 0.0
    %3002 = vmatprep.subr.mxu0 0.0
    %3003 = vmatpush1.msra.mxu0 0.0
    %3004 = vmatprep.subr.mxu0 0.0
    %3005 = vmatpush1.msra.mxu0 0.0
    %3006 = vmatprep.subr.mxu0 0.0
    %3007 = vmatpush1.msra.mxu0 0.0
    %3008 = vmatprep.subr.mxu0 0.0
    %3009 = vmatpush1.msra.mxu0 0.0
    %3010 = vmatprep.subr.mxu0 0.0
    %3011 = vmatpush1.msra.mxu0 0.0
    %3012 = vmatprep.subr.mxu0 0.0
    %3013 = vmatpush1.msra.mxu0 0.0
    %3014 = vmatprep.subr.mxu0 0.0
    %3015 = vmatpush1.msra.mxu0 0.0
    %3016 = vmatprep.subr.mxu0 0.0
    %3017 = vmatpush1.msra.mxu0 0.0
    %3018 = vmatprep.subr.mxu0 0.0
    %3019 = vmatpush1.msra.mxu0 0.0
    %3020 = vmatprep.subr.mxu0 0.0
    %3021 = vmatpush1.msra.mxu0 0.0
    %3022 = vmatprep.subr.mxu0 0.0
    %3023 = vmatpush1.msra.mxu0 0.0
    %3024 = vmatprep.subr.mxu0 0.0
    %3025 = vmatpush1.msra.mxu0 0.0
    %3026 = vmatprep.subr.mxu0 0.0
    %3027 = vmatpush1.msra.mxu0 0.0
    %3028 = vmatprep.subr.mxu0 0.0
    %3029 = vmatpush1.msra.mxu0 0.0
    %3030 = vmatprep.mubr.f32.mxu0 0.0
    %3031 = vmatmul.mubr.f32.gmra.mrb[0].mxu0 %v2893
    %v3032 = vpop.f32.mrb[0].mxu0
    %v3033 = vadd.f32 %v135, %v3032
    %v3034 = vpop.f32.mrb[0].mxu0
    %3035 = vdwg.mxu0
    %3036 = vmatprep.subr.mxu0 0.0
    %3037 = vmatpush1.msra.mxu0 %v74
    %3038 = vmatprep.subr.mxu0 0.0
    %3039 = vmatpush1.msra.mxu0 %v75
    %3040 = vmatprep.subr.mxu0 0.0
    %3041 = vmatpush1.msra.mxu0 %v76
    %3042 = vmatprep.subr.mxu0 0.0
    %3043 = vmatpush1.msra.mxu0 %v77
    %3044 = vmatprep.subr.mxu0 0.0
    %3045 = vmatpush1.msra.mxu0 %v78
    %3046 = vmatprep.subr.mxu0 0.0
    %3047 = vmatpush1.msra.mxu0 %v79
    %3048 = vmatprep.subr.mxu0 0.0
    %3049 = vmatpush1.msra.mxu0 %v80
    %3050 = vmatprep.subr.mxu0 0.0
    %3051 = vmatpush1.msra.mxu0 %v81
    %3052 = vmatprep.subr.mxu0 0.0
    %3053 = vmatpush1.msra.mxu0 %v82
    %3054 = vmatprep.subr.mxu0 0.0
    %3055 = vmatpush1.msra.mxu0 %v83
    %3056 = vmatprep.subr.mxu0 0.0
    %3057 = vmatpush1.msra.mxu0 %v84
    %3058 = vmatprep.subr.mxu0 0.0
    %3059 = vmatpush1.msra.mxu0 %v85
    %3060 = vmatprep.subr.mxu0 0.0
    %3061 = vmatpush1.msra.mxu0 %v86
    %3062 = vmatprep.subr.mxu0 0.0
    %3063 = vmatpush1.msra.mxu0 %v87
    %3064 = vmatprep.subr.mxu0 0.0
    %3065 = vmatpush1.msra.mxu0 %v88
    %3066 = vmatprep.subr.mxu0 0.0
    %3067 = vmatpush1.msra.mxu0 %v89
    %3068 = vmatprep.subr.mxu0 0.0
    %3069 = vmatpush1.msra.mxu0 0.0
    %3070 = vmatprep.subr.mxu0 0.0
    %3071 = vmatpush1.msra.mxu0 0.0
    %3072 = vmatprep.subr.mxu0 0.0
    %3073 = vmatpush1.msra.mxu0 0.0
    %3074 = vmatprep.subr.mxu0 0.0
    %3075 = vmatpush1.msra.mxu0 0.0
    %3076 = vmatprep.subr.mxu0 0.0
    %3077 = vmatpush1.msra.mxu0 0.0
    %3078 = vmatprep.subr.mxu0 0.0
    %3079 = vmatpush1.msra.mxu0 0.0
    %3080 = vmatprep.subr.mxu0 0.0
    %3081 = vmatpush1.msra.mxu0 0.0
    %3082 = vmatprep.subr.mxu0 0.0
    %3083 = vmatpush1.msra.mxu0 0.0
    %3084 = vmatprep.subr.mxu0 0.0
    %3085 = vmatpush1.msra.mxu0 0.0
    %3086 = vmatprep.subr.mxu0 0.0
    %3087 = vmatpush1.msra.mxu0 0.0
    %3088 = vmatprep.subr.mxu0 0.0
    %3089 = vmatpush1.msra.mxu0 0.0
    %3090 = vmatprep.subr.mxu0 0.0
    %3091 = vmatpush1.msra.mxu0 0.0
    %3092 = vmatprep.subr.mxu0 0.0
    %3093 = vmatpush1.msra.mxu0 0.0
    %3094 = vmatprep.subr.mxu0 0.0
    %3095 = vmatpush1.msra.mxu0 0.0
    %3096 = vmatprep.subr.mxu0 0.0
    %3097 = vmatpush1.msra.mxu0 0.0
    %3098 = vmatprep.subr.mxu0 0.0
    %3099 = vmatpush1.msra.mxu0 0.0
    %3100 = vmatprep.mubr.f32.mxu0 0.0
    %3101 = vmatmul.mubr.f32.gmra.mrb[0].mxu0 %v2878
    %v3102 = vpop.f32.mrb[0].mxu0
    %v3103 = vadd.f32 0.0, %v3102
    %v3104 = vpop.f32.mrb[0].mxu0
    %3105 = vdwg.mxu0
    %3106 = vmatprep.subr.mxu0 0.0
    %3107 = vmatpush1.msra.mxu0 %v90
    %3108 = vmatprep.subr.mxu0 0.0
    %3109 = vmatpush1.msra.mxu0 %v91
    %3110 = vmatprep.subr.mxu0 0.0
    %3111 = vmatpush1.msra.mxu0 %v92
    %3112 = vmatprep.subr.mxu0 0.0
    %3113 = vmatpush1.msra.mxu0 %v93
    %3114 = vmatprep.subr.mxu0 0.0
    %3115 = vmatpush1.msra.mxu0 %v94
    %3116 = vmatprep.subr.mxu0 0.0
    %3117 = vmatpush1.msra.mxu0 %v95
    %3118 = vmatprep.subr.mxu0 0.0
    %3119 = vmatpush1.msra.mxu0 %v96
    %3120 = vmatprep.subr.mxu0 0.0
    %3121 = vmatpush1.msra.mxu0 %v97
    %3122 = vmatprep.subr.mxu0 0.0
    %3123 = vmatpush1.msra.mxu0 %v98
    %3124 = vmatprep.subr.mxu0 0.0
    %3125 = vmatpush1.msra.mxu0 %v99
    %3126 = vmatprep.subr.mxu0 0.0
    %3127 = vmatpush1.msra.mxu0 %v100
    %3128 = vmatprep.subr.mxu0 0.0
    %3129 = vmatpush1.msra.mxu0 %v101
    %3130 = vmatprep.subr.mxu0 0.0
    %3131 = vmatpush1.msra.mxu0 %v102
    %3132 = vmatprep.subr.mxu0 0.0
    %3133 = vmatpush1.msra.mxu0 %v103
    %3134 = vmatprep.subr.mxu0 0.0
    %3135 = vmatpush1.msra.mxu0 %v104
    %3136 = vmatprep.subr.mxu0 0.0
    %3137 = vmatpush1.msra.mxu0 %v105
    %3138 = vmatprep.subr.mxu0 0.0
    %3139 = vmatpush1.msra.mxu0 0.0
    %3140 = vmatprep.subr.mxu0 0.0
    %3141 = vmatpush1.msra.mxu0 0.0
    %3142 = vmatprep.subr.mxu0 0.0
    %3143 = vmatpush1.msra.mxu0 0.0
    %3144 = vmatprep.subr.mxu0 0.0
    %3145 = vmatpush1.msra.mxu0 0.0
    %3146 = vmatprep.subr.mxu0 0.0
    %3147 = vmatpush1.msra.mxu0 0.0
    %3148 = vmatprep.subr.mxu0 0.0
    %3149 = vmatpush1.msra.mxu0 0.0
    %3150 = vmatprep.subr.mxu0 0.0
    %3151 = vmatpush1.msra.mxu0 0.0
    %3152 = vmatprep.subr.mxu0 0.0
    %3153 = vmatpush1.msra.mxu0 0.0
    %3154 = vmatprep.subr.mxu0 0.0
    %3155 = vmatpush1.msra.mxu0 0.0
    %3156 = vmatprep.subr.mxu0 0.0
    %3157 = vmatpush1.msra.mxu0 0.0
    %3158 = vmatprep.subr.mxu0 0.0
    %3159 = vmatpush1.msra.mxu0 0.0
    %3160 = vmatprep.subr.mxu0 0.0
    %3161 = vmatpush1.msra.mxu0 0.0
    %3162 = vmatprep.subr.mxu0 0.0
    %3163 = vmatpush1.msra.mxu0 0.0
    %3164 = vmatprep.subr.mxu0 0.0
    %3165 = vmatpush1.msra.mxu0 0.0
    %3166 = vmatprep.subr.mxu0 0.0
    %3167 = vmatpush1.msra.mxu0 0.0
    %3168 = vmatprep.subr.mxu0 0.0
    %3169 = vmatpush1.msra.mxu0 0.0
    %3170 = vmatprep.mubr.f32.mxu0 0.0
    %3171 = vmatmul.mubr.f32.gmra.mrb[0].mxu0 %v2878
    %v3172 = vpop.f32.mrb[0].mxu0
    %v3173 = vadd.f32 0.0, %v3172
    %v3174 = vpop.f32.mrb[0].mxu0
    %3175 = vdwg.mxu0
    %v3176 = vadd.f32 %v2962, %v3103
    %v3177 = vxor.u32 %v3176, 2147483648
    %v3178 = vmul.f32 %v3177, 1.442695
    %v3179 = vpow.pop %v3178
    %v3180 = vadd.f32 %v3179, 1.0
    %v3181 = vrcp.pop %v3180
    %v3182 = vmul.f32 1.0, %v3181
    %v3183 = vadd.f32 %v2964, %v3173
    %v3184 = vxor.u32 %v3183, 2147483648
    %v3185 = vmul.f32 %v3184, 1.442695
    %v3186 = vpow.pop %v3185
    %v3187 = vadd.f32 %v3186, 1.0
    %v3188 = vrcp.pop %v3187
    %v3189 = vmul.f32 1.0, %v3188
    %3190 = vmatprep.subr.mxu0 0.0
    %3191 = vmatpush1.msra.mxu0 %v106
    %3192 = vmatprep.subr.mxu0 0.0
    %3193 = vmatpush1.msra.mxu0 %v107
    %3194 = vmatprep.subr.mxu0 0.0
    %3195 = vmatpush1.msra.mxu0 %v108
    %3196 = vmatprep.subr.mxu0 0.0
    %3197 = vmatpush1.msra.mxu0 %v109
    %3198 = vmatprep.subr.mxu0 0.0
    %3199 = vmatpush1.msra.mxu0 %v110
    %3200 = vmatprep.subr.mxu0 0.0
    %3201 = vmatpush1.msra.mxu0 %v111
    %3202 = vmatprep.subr.mxu0 0.0
    %3203 = vmatpush1.msra.mxu0 %v112
    %3204 = vmatprep.subr.mxu0 0.0
    %3205 = vmatpush1.msra.mxu0 %v113
    %3206 = vmatprep.subr.mxu0 0.0
    %3207 = vmatpush1.msra.mxu0 %v114
    %3208 = vmatprep.subr.mxu0 0.0
    %3209 = vmatpush1.msra.mxu0 %v115
    %3210 = vmatprep.subr.mxu0 0.0
    %3211 = vmatpush1.msra.mxu0 %v116
    %3212 = vmatprep.subr.mxu0 0.0
    %3213 = vmatpush1.msra.mxu0 %v117
    %3214 = vmatprep.subr.mxu0 0.0
    %3215 = vmatpush1.msra.mxu0 %v118
    %3216 = vmatprep.subr.mxu0 0.0
    %3217 = vmatpush1.msra.mxu0 %v119
    %3218 = vmatprep.subr.mxu0 0.0
    %3219 = vmatpush1.msra.mxu0 %v120
    %3220 = vmatprep.subr.mxu0 0.0
    %3221 = vmatpush1.msra.mxu0 %v121
    %3222 = vmatprep.subr.mxu0 0.0
    %3223 = vmatpush1.msra.mxu0 0.0
    %3224 = vmatprep.subr.mxu0 0.0
    %3225 = vmatpush1.msra.mxu0 0.0
    %3226 = vmatprep.subr.mxu0 0.0
    %3227 = vmatpush1.msra.mxu0 0.0
    %3228 = vmatprep.subr.mxu0 0.0
    %3229 = vmatpush1.msra.mxu0 0.0
    %3230 = vmatprep.subr.mxu0 0.0
    %3231 = vmatpush1.msra.mxu0 0.0
    %3232 = vmatprep.subr.mxu0 0.0
    %3233 = vmatpush1.msra.mxu0 0.0
    %3234 = vmatprep.subr.mxu0 0.0
    %3235 = vmatpush1.msra.mxu0 0.0
    %3236 = vmatprep.subr.mxu0 0.0
    %3237 = vmatpush1.msra.mxu0 0.0
    %3238 = vmatprep.subr.mxu0 0.0
    %3239 = vmatpush1.msra.mxu0 0.0
    %3240 = vmatprep.subr.mxu0 0.0
    %3241 = vmatpush1.msra.mxu0 0.0
    %3242 = vmatprep.subr.mxu0 0.0
    %3243 = vmatpush1.msra.mxu0 0.0
    %3244 = vmatprep.subr.mxu0 0.0
    %3245 = vmatpush1.msra.mxu0 0.0
    %3246 = vmatprep.subr.mxu0 0.0
    %3247 = vmatpush1.msra.mxu0 0.0
    %3248 = vmatprep.subr.mxu0 0.0
    %3249 = vmatpush1.msra.mxu0 0.0
    %3250 = vmatprep.subr.mxu0 0.0
    %3251 = vmatpush1.msra.mxu0 0.0
    %3252 = vmatprep.subr.mxu0 0.0
    %3253 = vmatpush1.msra.mxu0 0.0
    %3254 = vmatprep.mubr.f32.mxu0 0.0
    %3255 = vmatmul.mubr.f32.gmra.mrb[0].mxu0 %v2878
    %v3256 = vpop.f32.mrb[0].mxu0
    %v3257 = vadd.f32 %v144, %v3256
    %v3258 = vpop.f32.mrb[0].mxu0
    %3259 = vdwg.mxu0
    %v3260 = vmul.f32 %v3182, %v3257
    %v3261 = vadd.f32 %v3033, %v3260
    %v3262 = vtanh.pop %v3261
    %v3263 = vsub.f32 1.0, %v3189
    %v3264 = vmul.f32 %v3263, %v3262
    %v3265 = vmul.f32 %v3189, %v2878
    %v3266 = vadd.f32 %v3264, %v3265
    %3267 = vst [vmem:[#allocation2] sm:$0xff] %v3266
    // Predicated region
    $region42: #{gru_forward_packed.1} parent=1 // pred_check
      %p3268 = pneg %p55
    $region43: #{gru_forward_packed.1} parent=1 // pred_check_branch
      %3270 = sbr.rel (%p3268) target = $region45
    $region44: #{gru_forward_packed.1} parent=1 // pred_region
      %v3271 = vld [vmem:[#allocation6] sm:$0xff]
      %v3272 = vld [vmem:[#allocation6 + $0x8] sm:$0xff]
      %v3273 = vld [vmem:[#allocation6 + $0x10] sm:$0xff]
      %v3274 = vld [vmem:[#allocation6 + $0x18] sm:$0xff]
      %v3275 = vld [vmem:[#allocation6 + $0x20] sm:$0xff]
      %v3276 = vld [vmem:[#allocation6 + $0x28] sm:$0xff]
      %v3277 = vld [vmem:[#allocation6 + $0x30] sm:$0xff]
      %v3278 = vld [vmem:[#allocation6 + $0x38] sm:$0xff]
      %v3279 = vld [vmem:[#allocation6 + $0x40] sm:$0xff]
      %v3280 = vld [vmem:[#allocation6 + $0x48] sm:$0xff]
      %v3281 = vld [vmem:[#allocation6 + $0x50] sm:$0xff]
      %v3282 = vld [vmem:[#allocation6 + $0x58] sm:$0xff]
      %v3283 = vld [vmem:[#allocation6 + $0x60] sm:$0xff]
      %v3284 = vld [vmem:[#allocation6 + $0x68] sm:$0xff]
      %v3285 = vld [vmem:[#allocation6 + $0x70] sm:$0xff]
      %v3286 = vld [vmem:[#allocation6 + $0x78] sm:$0xff]
      %v3287 = vld [vmem:[%s6] sm:$0x1]
      %v3289 = vlaneseq
      %v3290 = vshrl.u32 %v3289, 7
      %v3291 = vsub.s32 0, %v3290
      %v3292 = vrot.slane %v3287, %v3291
      %3294 = vmatprep.subr.mxu0 0.0
      %3295 = vmatpush1.msra.mxu0 %v3271
      %3296 = vmatprep.subr.mxu0 0.0
      %3297 = vmatpush1.msra.mxu0 %v3272
      %3298 = vmatprep.subr.mxu0 0.0
      %3299 = vmatpush1.msra.mxu0 %v3273
      %3300 = vmatprep.subr.mxu0 0.0
      %3301 = vmatpush1.msra.mxu0 %v3274
      %3302 = vmatprep.subr.mxu0 0.0
      %3303 = vmatpush1.msra.mxu0 %v3275
      %3304 = vmatprep.subr.mxu0 0.0
      %3305 = vmatpush1.msra.mxu0 %v3276
      %3306 = vmatprep.subr.mxu0 0.0
      %3307 = vmatpush1.msra.mxu0 %v3277
      %3308 = vmatprep.subr.mxu0 0.0
      %3309 = vmatpush1.msra.mxu0 %v3278
      %3310 = vmatprep.subr.mxu0 0.0
      %3311 = vmatpush1.msra.mxu0 %v3279
      %3312 = vmatprep.subr.mxu0 0.0
      %3313 = vmatpush1.msra.mxu0 %v3280
      %3314 = vmatprep.subr.mxu0 0.0
      %3315 = vmatpush1.msra.mxu0 %v3281
      %3316 = vmatprep.subr.mxu0 0.0
      %3317 = vmatpush1.msra.mxu0 %v3282
      %3318 = vmatprep.subr.mxu0 0.0
      %3319 = vmatpush1.msra.mxu0 %v3283
      %3320 = vmatprep.subr.mxu0 0.0
      %3321 = vmatpush1.msra.mxu0 %v3284
      %3322 = vmatprep.subr.mxu0 0.0
      %3323 = vmatpush1.msra.mxu0 %v3285
      %3324 = vmatprep.subr.mxu0 0.0
      %3325 = vmatpush1.msra.mxu0 %v3286
      %3326 = vmatprep.subr.mxu0 0.0
      %3327 = vmatpush1.msra.mxu0 0.0
      %3328 = vmatprep.subr.mxu0 0.0
      %3329 = vmatpush1.msra.mxu0 0.0
      %3330 = vmatprep.subr.mxu0 0.0
      %3331 = vmatpush1.msra.mxu0 0.0
      %3332 = vmatprep.subr.mxu0 0.0
      %3333 = vmatpush1.msra.mxu0 0.0
      %3334 = vmatprep.subr.mxu0 0.0
      %3335 = vmatpush1.msra.mxu0 0.0
      %3336 = vmatprep.subr.mxu0 0.0
      %3337 = vmatpush1.msra.mxu0 0.0
      %3338 = vmatprep.subr.mxu0 0.0
      %3339 = vmatpush1.msra.mxu0 0.0
      %3340 = vmatprep.subr.mxu0 0.0
      %3341 = vmatpush1.msra.mxu0 0.0
      %3342 = vmatprep.subr.mxu0 0.0
      %3343 = vmatpush1.msra.mxu0 0.0
      %3344 = vmatprep.subr.mxu0 0.0
      %3345 = vmatpush1.msra.mxu0 0.0
      %3346 = vmatprep.subr.mxu0 0.0
      %3347 = vmatpush1.msra.mxu0 0.0
      %3348 = vmatprep.subr.mxu0 0.0
      %3349 = vmatpush1.msra.mxu0 0.0
      %3350 = vmatprep.subr.mxu0 0.0
      %3351 = vmatpush1.msra.mxu0 0.0
      %3352 = vmatprep.subr.mxu0 0.0
      %3353 = vmatpush1.msra.mxu0 0.0
      %3354 = vmatprep.subr.mxu0 0.0
      %3355 = vmatpush1.msra.mxu0 0.0
      %3356 = vmatprep.subr.mxu0 0.0
      %3357 = vmatpush1.msra.mxu0 0.0
      %3358 = vmatprep.mubr.f32.mxu0 0.0
      %3359 = vmatmul.mubr.f32.gmra.mrb[0].mxu0 %v3266
      %v3360 = vpop.f32.mrb[0].mxu0
      %v3361 = vadd.f32 %v3292, %v3360
      %v3362 = vpop.f32.mrb[0].mxu0
      %3363 = vdwg.mxu0
      %3364 = vst [vmem:[#allocation8] sm:$0xff] %v3361
    $region45: #{gru_forward_packed.1} parent=1 // pred_fallthru
      _
    // Predicated region
    $region46: #{gru_forward_packed.1} parent=1 // pred_check
      _
    $region47: #{gru_forward_packed.1} parent=1 // pred_check_branch
      %3366 = sbr.rel (0) target = $region49
    $region48: #{gru_forward_packed.1} parent=1 // pred_region
      %s3368 = ssub.s32 128, 128
      %3369 = vsyncadd [#allocation5], %s3368
      %s3371 = sshll.u32 [#allocation8], 4
      %s3372 = int_to_ptr.vmem [resolvable:$true] %s3371
      %3374 = dma.vmem_to_hbm [thread:$0]  %s3372, 128, %s7, [#allocation5]
    $region49: #{gru_forward_packed.1} parent=1 // pred_fallthru
      _
    // Predicated region
    $region50: #{gru_forward_packed.1} parent=1 // pred_check
      _
    $region51: #{gru_forward_packed.1} parent=1 // pred_check_branch
      %3376 = sbr.rel (0) target = $region53
    $region52: #{gru_forward_packed.1} parent=1 // pred_region
      %3377 = dma.done [#allocation5], 128
    $region53: #{gru_forward_packed.1} parent=1 // pred_fallthru
      _
    %3378 = vsyncpa [#allocation4], 1
    %3379 = vsyncpa [#allocation7], 1
    %3380 = vsyncpa [#allocation5], 1

</llo_original>
